<compile_context>
chip_gen: v7x
topology: tpu7x:2x2x1
jax: 0.10.0
libtpu: 0.0.40
codegen_flags: <defaults>
</compile_context>

<pallas_src>
import functools
import jax
import jax.numpy as jnp
from jax.experimental import pallas as pl
from jax.experimental.pallas import tpu as pltpu

EPS = 1e-5


def _mlp_kernel(x_ref,
                w1_ref, g1_ref, be1_ref,
                w2_ref, g2_ref, be2_ref,
                w3_ref, b3_ref,
                out_ref):
    x = x_ref[...]                                               # (B, F) f32

    # ---- layer 1: Linear(F, 1024) -> BatchNorm1d -> ReLU ----
    # Linear bias omitted: it is exactly cancelled by the BN mean subtraction.
    h1 = jnp.dot(x.astype(jnp.bfloat16), w1_ref[...],
                 preferred_element_type=jnp.float32)             # bf16 MXU, f32 acc
    m1 = jnp.mean(h1, axis=0, keepdims=True)
    v1 = jnp.mean((h1 - m1) * (h1 - m1), axis=0, keepdims=True)  # biased var
    s1 = jax.lax.rsqrt(v1 + EPS) * g1_ref[...]                   # gamma folded in
    h1 = jnp.maximum((h1 - m1) * s1 + be1_ref[...], 0.0)

    # ---- layer 2: Linear(1024, 512) -> BatchNorm1d -> ReLU ----
    h2 = jnp.dot(h1.astype(jnp.bfloat16), w2_ref[...],
                 preferred_element_type=jnp.float32)
    m2 = jnp.mean(h2, axis=0, keepdims=True)
    v2 = jnp.mean((h2 - m2) * (h2 - m2), axis=0, keepdims=True)
    s2 = jax.lax.rsqrt(v2 + EPS) * g2_ref[...]
    h2 = jnp.maximum((h2 - m2) * s2 + be2_ref[...], 0.0)

    # ---- layer 3: Linear(512, num_classes) ----
    out_ref[...] = (jnp.dot(h2.astype(jnp.bfloat16), w3_ref[...],
                            preferred_element_type=jnp.float32)
                    + b3_ref[...])


@jax.jit
def linear_model_forward(x_nchw, params):
    B = x_nchw.shape[0]
    x = x_nchw.reshape(B, -1).astype(jnp.float32)                # == torch .view(B, -1)

    (w1, b1, g1, be1, w2, b2, g2, be2, w3, b3) = params
    del b1, b2  # mathematically cancelled by training-mode BN; not DMA'd
    num_classes = w3.shape[1]

    # Weights travel over HBM->VMEM as bf16 (half the bytes of f32).
    w1 = w1.astype(jnp.bfloat16)
    w2 = w2.astype(jnp.bfloat16)
    w3 = w3.astype(jnp.bfloat16)

    vmem = lambda: pl.BlockSpec(memory_space=pltpu.VMEM)

    return pl.pallas_call(
        _mlp_kernel,
        out_shape=jax.ShapeDtypeStruct((B, num_classes), jnp.float32),
        grid_spec=pltpu.PrefetchScalarGridSpec(
            num_scalar_prefetch=0,
            grid=(1,),
            in_specs=[vmem() for _ in range(9)],
            out_specs=vmem(),
        ),
        compiler_params=pltpu.CompilerParams(
            dimension_semantics=("arbitrary",),
            vmem_limit_bytes=32 * 1024 * 1024,   # fits v5e/v6e/v7x; footprint ~3 MiB
        ),
    )(x, w1, g1, be1, w2, g2, be2, w3, b3)


def init_params(key, in_features, num_classes):
    """Deterministic synthetic parameters (shapes match the torch module)."""
    ks = jax.random.split(key, 10)

    def linear(kw, kb, fan_in, fan_out):
        bound = 1.0 / jnp.sqrt(fan_in)
        w = jax.random.uniform(kw, (fan_in, fan_out), jnp.float32, -bound, bound)
        b = jax.random.uniform(kb, (1, fan_out), jnp.float32, -bound, bound)
        return w, b

    w1, b1 = linear(ks[0], ks[1], in_features, 1024)
    w2, b2 = linear(ks[2], ks[3], 1024, 512)
    w3, b3 = linear(ks[4], ks[5], 512, num_classes)

    # BatchNorm1d affine params (torch default: gamma=1, beta=0)
    g1 = jnp.ones((1, 1024), jnp.float32)
    be1 = jnp.zeros((1, 1024), jnp.float32)
    g2 = jnp.ones((1, 512), jnp.float32)
    be2 = jnp.zeros((1, 512), jnp.float32)

    return (w1, b1, g1, be1, w2, b2, g2, be2, w3, b3)


def _reference(x_nchw, params):
    """Pure-JAX reference using the same bf16 weights / bf16 matmul inputs,
    f32 accumulation and f32 BN math (training-mode, biased variance)."""
    (w1, b1, g1, be1, w2, b2, g2, be2, w3, b3) = params
    x = x_nchw.reshape(x_nchw.shape[0], -1).astype(jnp.float32)

    def mm(a, w):
        return jnp.dot(a.astype(jnp.bfloat16), w.astype(jnp.bfloat16),
                       preferred_element_type=jnp.float32)

    def bn(h, g, be):
        m = jnp.mean(h, axis=0, keepdims=True)
        v = jnp.mean((h - m) ** 2, axis=0, keepdims=True)
        return (h - m) / jnp.sqrt(v + EPS) * g + be

    # biases b1/b2 included here (as in torch) — they cancel under training BN.
    h1 = jax.nn.relu(bn(mm(x, w1) + b1, g1, be1))
    h2 = jax.nn.relu(bn(mm(h1, w2) + b2, g2, be2))
    return mm(h2, w3) + b3


if __name__ == "__main__":
    # configs: image_height = image_width = 16, 3 channels, num_classes = 10
    B, C, H, W = 2, 3, 16, 16
    NUM_CLASSES = 10
    IN_FEATURES = C * H * W  # 768

    key = jax.random.PRNGKey(0)
    k_x, k_p = jax.random.split(key)
    x = jax.random.normal(k_x, (B, C, H, W), jnp.float32)
    params = init_params(k_p, IN_FEATURES, NUM_CLASSES)

    out = linear_model_forward(x, params)
    out = jax.block_until_ready(out)

    ref = _reference(x, params)
    assert out.shape == (B, NUM_CLASSES), out.shape
    # bf16 matmul inputs -> loosened tolerance vs the previous all-f32 check.
    assert jnp.allclose(out, ref, atol=2e-2, rtol=2e-2), "mismatch vs reference"

    print("KERNEL_OK")
</pallas_src>

<mosaic_0001>
module attributes {stable_mosaic.version = 11 : i64} {
  func.func @_mlp_kernel(%arg0: i32, %arg1: memref<2x768xf32, #tpu.memory_space<vmem>>, %arg2: memref<768x1024xbf16, #tpu.memory_space<vmem>>, %arg3: memref<1x1024xf32, #tpu.memory_space<vmem>>, %arg4: memref<1x1024xf32, #tpu.memory_space<vmem>>, %arg5: memref<1024x512xbf16, #tpu.memory_space<vmem>>, %arg6: memref<1x512xf32, #tpu.memory_space<vmem>>, %arg7: memref<1x512xf32, #tpu.memory_space<vmem>>, %arg8: memref<512x10xbf16, #tpu.memory_space<vmem>>, %arg9: memref<1x10xf32, #tpu.memory_space<vmem>>, %arg10: memref<2x10xf32, #tpu.memory_space<vmem>>) attributes {dimension_semantics = [#tpu.dimension_semantics<arbitrary>], iteration_bounds = array<i64: 1>, scalar_prefetch = 0 : i64, scratch_operands = 0 : i64, tpu.core_type = #tpu.core_type<tc>, window_params = [{pipeline_mode = #tpu.pipeline_mode<synchronous>, transform_indices = @transform_0, window_bounds = array<i64: 2, 768>}, {pipeline_mode = #tpu.pipeline_mode<synchronous>, transform_indices = @transform_1, window_bounds = array<i64: 768, 1024>}, {pipeline_mode = #tpu.pipeline_mode<synchronous>, transform_indices = @transform_2, window_bounds = array<i64: 1, 1024>}, {pipeline_mode = #tpu.pipeline_mode<synchronous>, transform_indices = @transform_3, window_bounds = array<i64: 1, 1024>}, {pipeline_mode = #tpu.pipeline_mode<synchronous>, transform_indices = @transform_4, window_bounds = array<i64: 1024, 512>}, {pipeline_mode = #tpu.pipeline_mode<synchronous>, transform_indices = @transform_5, window_bounds = array<i64: 1, 512>}, {pipeline_mode = #tpu.pipeline_mode<synchronous>, transform_indices = @transform_6, window_bounds = array<i64: 1, 512>}, {pipeline_mode = #tpu.pipeline_mode<synchronous>, transform_indices = @transform_7, window_bounds = array<i64: 512, 10>}, {pipeline_mode = #tpu.pipeline_mode<synchronous>, transform_indices = @transform_8, window_bounds = array<i64: 1, 10>}, {pipeline_mode = #tpu.pipeline_mode<synchronous>, transform_indices = @transform_9, window_bounds = array<i64: 2, 10>}]} {
    %c0 = arith.constant 0 : index
    %c0_0 = arith.constant 0 : index
    %0 = vector.load %arg1[%c0, %c0_0] : memref<2x768xf32, #tpu.memory_space<vmem>>, vector<2x768xf32>
    %1 = arith.truncf %0 : vector<2x768xf32> to vector<2x768xbf16>
    %c0_1 = arith.constant 0 : index
    %c0_2 = arith.constant 0 : index
    %2 = vector.load %arg2[%c0_1, %c0_2] : memref<768x1024xbf16, #tpu.memory_space<vmem>>, vector<768x1024xbf16>
    %cst = arith.constant dense<0.000000e+00> : vector<2x1024xf32>
    %3 = tpu.matmul %1, %2, %cst {dimension_numbers = #tpu.dot_dimension_numbers<[1], [0], [0], [1], [0, 0, 1, 1], [], []>} : vector<2x768xbf16>, vector<768x1024xbf16>, vector<2x1024xf32> -> vector<2x1024xf32>
    %cst_3 = arith.constant dense<0.000000e+00> : vector<1024xf32>
    %4 = vector.multi_reduction <add>, %3, %cst_3 [0] : vector<2x1024xf32> to vector<1024xf32>
    %5 = vector.shape_cast %4 : vector<1024xf32> to vector<1x1024xf32>
    %cst_4 = arith.constant 2.000000e+00 : f32
    %6 = vector.broadcast %cst_4 : f32 to vector<1x1024xf32>
    %7 = arith.divf %5, %6 : vector<1x1024xf32>
    %8 = vector.broadcast %7 : vector<1x1024xf32> to vector<2x1024xf32>
    %9 = arith.subf %3, %8 : vector<2x1024xf32>
    %10 = vector.broadcast %7 : vector<1x1024xf32> to vector<2x1024xf32>
    %11 = arith.subf %3, %10 : vector<2x1024xf32>
    %12 = arith.mulf %9, %11 : vector<2x1024xf32>
    %cst_5 = arith.constant dense<0.000000e+00> : vector<1024xf32>
    %13 = vector.multi_reduction <add>, %12, %cst_5 [0] : vector<2x1024xf32> to vector<1024xf32>
    %14 = vector.shape_cast %13 : vector<1024xf32> to vector<1x1024xf32>
    %cst_6 = arith.constant 2.000000e+00 : f32
    %15 = vector.broadcast %cst_6 : f32 to vector<1x1024xf32>
    %16 = arith.divf %14, %15 : vector<1x1024xf32>
    %cst_7 = arith.constant 9.99999974E-6 : f32
    %17 = vector.broadcast %cst_7 : f32 to vector<1x1024xf32>
    %18 = arith.addf %16, %17 : vector<1x1024xf32>
    %19 = math.rsqrt %18 : vector<1x1024xf32>
    %c0_8 = arith.constant 0 : index
    %c0_9 = arith.constant 0 : index
    %20 = vector.load %arg3[%c0_8, %c0_9] : memref<1x1024xf32, #tpu.memory_space<vmem>>, vector<1x1024xf32>
    %21 = arith.mulf %19, %20 : vector<1x1024xf32>
    %22 = vector.broadcast %7 : vector<1x1024xf32> to vector<2x1024xf32>
    %23 = arith.subf %3, %22 : vector<2x1024xf32>
    %24 = vector.broadcast %21 : vector<1x1024xf32> to vector<2x1024xf32>
    %25 = arith.mulf %23, %24 : vector<2x1024xf32>
    %c0_10 = arith.constant 0 : index
    %c0_11 = arith.constant 0 : index
    %26 = vector.load %arg4[%c0_10, %c0_11] : memref<1x1024xf32, #tpu.memory_space<vmem>>, vector<1x1024xf32>
    %27 = vector.broadcast %26 : vector<1x1024xf32> to vector<2x1024xf32>
    %28 = arith.addf %25, %27 : vector<2x1024xf32>
    %cst_12 = arith.constant 0.000000e+00 : f32
    %29 = vector.broadcast %cst_12 : f32 to vector<2x1024xf32>
    %30 = arith.maximumf %28, %29 : vector<2x1024xf32>
    %31 = arith.truncf %30 : vector<2x1024xf32> to vector<2x1024xbf16>
    %c0_13 = arith.constant 0 : index
    %c0_14 = arith.constant 0 : index
    %32 = vector.load %arg5[%c0_13, %c0_14] : memref<1024x512xbf16, #tpu.memory_space<vmem>>, vector<1024x512xbf16>
    %cst_15 = arith.constant dense<0.000000e+00> : vector<2x512xf32>
    %33 = tpu.matmul %31, %32, %cst_15 {dimension_numbers = #tpu.dot_dimension_numbers<[1], [0], [0], [1], [0, 0, 1, 1], [], []>} : vector<2x1024xbf16>, vector<1024x512xbf16>, vector<2x512xf32> -> vector<2x512xf32>
    %cst_16 = arith.constant dense<0.000000e+00> : vector<512xf32>
    %34 = vector.multi_reduction <add>, %33, %cst_16 [0] : vector<2x512xf32> to vector<512xf32>
    %35 = vector.shape_cast %34 : vector<512xf32> to vector<1x512xf32>
    %cst_17 = arith.constant 2.000000e+00 : f32
    %36 = vector.broadcast %cst_17 : f32 to vector<1x512xf32>
    %37 = arith.divf %35, %36 : vector<1x512xf32>
    %38 = vector.broadcast %37 : vector<1x512xf32> to vector<2x512xf32>
    %39 = arith.subf %33, %38 : vector<2x512xf32>
    %40 = vector.broadcast %37 : vector<1x512xf32> to vector<2x512xf32>
    %41 = arith.subf %33, %40 : vector<2x512xf32>
    %42 = arith.mulf %39, %41 : vector<2x512xf32>
    %cst_18 = arith.constant dense<0.000000e+00> : vector<512xf32>
    %43 = vector.multi_reduction <add>, %42, %cst_18 [0] : vector<2x512xf32> to vector<512xf32>
    %44 = vector.shape_cast %43 : vector<512xf32> to vector<1x512xf32>
    %cst_19 = arith.constant 2.000000e+00 : f32
    %45 = vector.broadcast %cst_19 : f32 to vector<1x512xf32>
    %46 = arith.divf %44, %45 : vector<1x512xf32>
    %cst_20 = arith.constant 9.99999974E-6 : f32
    %47 = vector.broadcast %cst_20 : f32 to vector<1x512xf32>
    %48 = arith.addf %46, %47 : vector<1x512xf32>
    %49 = math.rsqrt %48 : vector<1x512xf32>
    %c0_21 = arith.constant 0 : index
    %c0_22 = arith.constant 0 : index
    %50 = vector.load %arg6[%c0_21, %c0_22] : memref<1x512xf32, #tpu.memory_space<vmem>>, vector<1x512xf32>
    %51 = arith.mulf %49, %50 : vector<1x512xf32>
    %52 = vector.broadcast %37 : vector<1x512xf32> to vector<2x512xf32>
    %53 = arith.subf %33, %52 : vector<2x512xf32>
    %54 = vector.broadcast %51 : vector<1x512xf32> to vector<2x512xf32>
    %55 = arith.mulf %53, %54 : vector<2x512xf32>
    %c0_23 = arith.constant 0 : index
    %c0_24 = arith.constant 0 : index
    %56 = vector.load %arg7[%c0_23, %c0_24] : memref<1x512xf32, #tpu.memory_space<vmem>>, vector<1x512xf32>
    %57 = vector.broadcast %56 : vector<1x512xf32> to vector<2x512xf32>
    %58 = arith.addf %55, %57 : vector<2x512xf32>
    %cst_25 = arith.constant 0.000000e+00 : f32
    %59 = vector.broadcast %cst_25 : f32 to vector<2x512xf32>
    %60 = arith.maximumf %58, %59 : vector<2x512xf32>
    %61 = arith.truncf %60 : vector<2x512xf32> to vector<2x512xbf16>
    %c0_26 = arith.constant 0 : index
    %c0_27 = arith.constant 0 : index
    %62 = vector.load %arg8[%c0_26, %c0_27] : memref<512x10xbf16, #tpu.memory_space<vmem>>, vector<512x10xbf16>
    %cst_28 = arith.constant dense<0.000000e+00> : vector<2x10xf32>
    %63 = tpu.matmul %61, %62, %cst_28 {dimension_numbers = #tpu.dot_dimension_numbers<[1], [0], [0], [1], [0, 0, 1, 1], [], []>} : vector<2x512xbf16>, vector<512x10xbf16>, vector<2x10xf32> -> vector<2x10xf32>
    %c0_29 = arith.constant 0 : index
    %c0_30 = arith.constant 0 : index
    %64 = vector.load %arg9[%c0_29, %c0_30] : memref<1x10xf32, #tpu.memory_space<vmem>>, vector<1x10xf32>
    %65 = vector.broadcast %64 : vector<1x10xf32> to vector<2x10xf32>
    %66 = arith.addf %63, %65 : vector<2x10xf32>
    %c0_31 = arith.constant 0 : index
    %c0_32 = arith.constant 0 : index
    %67 = vector.load %arg10[%c0_31, %c0_32] : memref<2x10xf32, #tpu.memory_space<vmem>>, vector<2x10xf32>
    tpu.vector_store %arg10[%c0_31, %c0_32], %66 {strides = array<i32>} : memref<2x10xf32, #tpu.memory_space<vmem>>, vector<2x10xf32>,
    return
  }
  func.func @transform_0(%arg0: i32) -> (i32, i32) {
    %c0_i32 = arith.constant 0 : i32
    %c0_i32_0 = arith.constant 0 : i32
    %c0_i32_1 = arith.constant 0 : i32
    return %c0_i32, %c0_i32_0 : i32, i32
  }
  func.func @transform_1(%arg0: i32) -> (i32, i32) {
    %c0_i32 = arith.constant 0 : i32
    %c0_i32_0 = arith.constant 0 : i32
    %c0_i32_1 = arith.constant 0 : i32
    return %c0_i32, %c0_i32_0 : i32, i32
  }
  func.func @transform_2(%arg0: i32) -> (i32, i32) {
    %c0_i32 = arith.constant 0 : i32
    %c0_i32_0 = arith.constant 0 : i32
    %c0_i32_1 = arith.constant 0 : i32
    return %c0_i32, %c0_i32_0 : i32, i32
  }
  func.func @transform_3(%arg0: i32) -> (i32, i32) {
    %c0_i32 = arith.constant 0 : i32
    %c0_i32_0 = arith.constant 0 : i32
    %c0_i32_1 = arith.constant 0 : i32
    return %c0_i32, %c0_i32_0 : i32, i32
  }
  func.func @transform_4(%arg0: i32) -> (i32, i32) {
    %c0_i32 = arith.constant 0 : i32
    %c0_i32_0 = arith.constant 0 : i32
    %c0_i32_1 = arith.constant 0 : i32
    return %c0_i32, %c0_i32_0 : i32, i32
  }
  func.func @transform_5(%arg0: i32) -> (i32, i32) {
    %c0_i32 = arith.constant 0 : i32
    %c0_i32_0 = arith.constant 0 : i32
    %c0_i32_1 = arith.constant 0 : i32
    return %c0_i32, %c0_i32_0 : i32, i32
  }
  func.func @transform_6(%arg0: i32) -> (i32, i32) {
    %c0_i32 = arith.constant 0 : i32
    %c0_i32_0 = arith.constant 0 : i32
    %c0_i32_1 = arith.constant 0 : i32
    return %c0_i32, %c0_i32_0 : i32, i32
  }
  func.func @transform_7(%arg0: i32) -> (i32, i32) {
    %c0_i32 = arith.constant 0 : i32
    %c0_i32_0 = arith.constant 0 : i32
    %c0_i32_1 = arith.constant 0 : i32
    return %c0_i32, %c0_i32_0 : i32, i32
  }
  func.func @transform_8(%arg0: i32) -> (i32, i32) {
    %c0_i32 = arith.constant 0 : i32
    %c0_i32_0 = arith.constant 0 : i32
    %c0_i32_1 = arith.constant 0 : i32
    return %c0_i32, %c0_i32_0 : i32, i32
  }
  func.func @transform_9(%arg0: i32) -> (i32, i32) {
    %c0_i32 = arith.constant 0 : i32
    %c0_i32_0 = arith.constant 0 : i32
    %c0_i32_1 = arith.constant 0 : i32
    return %c0_i32, %c0_i32_0 : i32, i32
  }
}

</mosaic_0001>

<llo_original>
// kernel: linear_model_forward.1
$region0: #{linear_model_forward.1}
  #allocation0 [shape = 'u32[]', space=smem, size = 0x4, offset = 0x4, fixed_abs, tag = 'smem constant byte address 0x4 - core index']
  #allocation1 [shape = 'u32[144,128]{1,0:T(1,128)}', space=vmem, size = 0x12000, scoped, tag = 'internal scratch']
  %s0 = inlined_call_operand.vmem [shape: f32[2,768], index: 0, kind: input, shape index: {}]
  %s1 = inlined_call_operand.vmem [shape: bf16[768,1024], index: 1, kind: input, shape index: {}]
  %s2 = inlined_call_operand.vmem [shape: f32[1,1024], index: 2, kind: input, shape index: {}]
  %s3 = inlined_call_operand.vmem [shape: f32[1,1024], index: 3, kind: input, shape index: {}]
  %s4 = inlined_call_operand.vmem [shape: bf16[1024,512], index: 4, kind: input, shape index: {}]
  %s5 = inlined_call_operand.vmem [shape: f32[1,512], index: 5, kind: input, shape index: {}]
  %s6 = inlined_call_operand.vmem [shape: f32[1,512], index: 6, kind: input, shape index: {}]
  %s7 = inlined_call_operand.vmem [shape: bf16[512,10], index: 7, kind: input, shape index: {}]
  %s8 = inlined_call_operand.vmem [shape: f32[1,10], index: 8, kind: input, shape index: {}]
  %s9 = inlined_call_operand.hbm [shape: f32[2,10], index: 9, kind: output, shape index: {}]
  %s10 = sld [smem:[#allocation0]]
  $region46: #{linear_model_forward.1} parent=0
    _
  %s12 = ssub.s32 1, %s10
  %s13 = scalar_select 0, %s12, %s10
  $region1: #{linear_model_forward.1} parent=0
    #allocation2 [shape = 'u8[1024]{0}', space=vmem, size = 0x400, scoped, tag = 'output window, operand 0, single buffered']
    #allocation3 [shape = 's32[1]{0}', space=sflag, size = 0x4, scoped, tag = 'scoped memory for linear_model_forward.1']
    %14 = vsyncpa [#allocation3], 0
    // Predicated region
    $region2: #{linear_model_forward.1} parent=1 // pred_check
      _
    $region3: #{linear_model_forward.1} parent=1 // pred_check_branch
      %16 = sbr.rel (0) target = $region5
    $region4: #{linear_model_forward.1} parent=1 // pred_region
      _
    $region5: #{linear_model_forward.1} parent=1 // pred_fallthru
      _
    // Predicated region
    $region6: #{linear_model_forward.1} parent=1 // pred_check
      _
    $region7: #{linear_model_forward.1} parent=1 // pred_check_branch
      %18 = sbr.rel (0) target = $region9
    $region8: #{linear_model_forward.1} parent=1 // pred_region
      _
    $region9: #{linear_model_forward.1} parent=1 // pred_fallthru
      _
    // Predicated region
    $region10: #{linear_model_forward.1} parent=1 // pred_check
      _
    $region11: #{linear_model_forward.1} parent=1 // pred_check_branch
      %20 = sbr.rel (0) target = $region13
    $region12: #{linear_model_forward.1} parent=1 // pred_region
      _
    $region13: #{linear_model_forward.1} parent=1 // pred_fallthru
      _
    // Predicated region
    $region14: #{linear_model_forward.1} parent=1 // pred_check
      _
    $region15: #{linear_model_forward.1} parent=1 // pred_check_branch
      %22 = sbr.rel (0) target = $region17
    $region16: #{linear_model_forward.1} parent=1 // pred_region
      _
    $region17: #{linear_model_forward.1} parent=1 // pred_fallthru
      _
    // Predicated region
    $region18: #{linear_model_forward.1} parent=1 // pred_check
      _
    $region19: #{linear_model_forward.1} parent=1 // pred_check_branch
      %24 = sbr.rel (0) target = $region21
    $region20: #{linear_model_forward.1} parent=1 // pred_region
      _
    $region21: #{linear_model_forward.1} parent=1 // pred_fallthru
      _
    // Predicated region
    $region22: #{linear_model_forward.1} parent=1 // pred_check
      _
    $region23: #{linear_model_forward.1} parent=1 // pred_check_branch
      %26 = sbr.rel (0) target = $region25
    $region24: #{linear_model_forward.1} parent=1 // pred_region
      _
    $region25: #{linear_model_forward.1} parent=1 // pred_fallthru
      _
    // Predicated region
    $region26: #{linear_model_forward.1} parent=1 // pred_check
      _
    $region27: #{linear_model_forward.1} parent=1 // pred_check_branch
      %28 = sbr.rel (0) target = $region29
    $region28: #{linear_model_forward.1} parent=1 // pred_region
      _
    $region29: #{linear_model_forward.1} parent=1 // pred_fallthru
      _
    // Predicated region
    $region30: #{linear_model_forward.1} parent=1 // pred_check
      _
    $region31: #{linear_model_forward.1} parent=1 // pred_check_branch
      %30 = sbr.rel (0) target = $region33
    $region32: #{linear_model_forward.1} parent=1 // pred_region
      _
    $region33: #{linear_model_forward.1} parent=1 // pred_fallthru
      _
    // Predicated region
    $region34: #{linear_model_forward.1} parent=1 // pred_check
      _
    $region35: #{linear_model_forward.1} parent=1 // pred_check_branch
      %32 = sbr.rel (0) target = $region37
    $region36: #{linear_model_forward.1} parent=1 // pred_region
      _
    $region37: #{linear_model_forward.1} parent=1 // pred_fallthru
      _
    %v34 = vld [vmem:[%s0] sm:$0xff]
    %v35 = vld [vmem:[%s0 + $0x8] sm:$0xf]
    %v38 = vcombine.high %v34, %v34
    %v40 = vunpack.c.l.s4 1983009808
    %v41 = vunpack.c.0.s8 %v40
    %v42 = vlaneseq
    %v43 = vshrl.u32 %v42, 7
    %v44 = vsub.s32 %v41, %v43
    %v45 = vrot.slane %v34, %v44
    %v47 = vunpack.c.l.s4 1983009808
    %v48 = vunpack.c.0.s8 %v47
    %v49 = vlaneseq
    %v50 = vshrl.u32 %v49, 7
    %v51 = vsub.s32 %v48, %v50
    %v52 = vrot.slane %v38, %v51
    %v53 = vcombine.high %v45, %v45
    %v54 = vcombine.high %v52, %v52
    %v56 = vunpack.c.l.s4 1983009808
    %v57 = vunpack.c.0.s8 %v56
    %v58 = vlaneseq
    %v59 = vshrl.u32 %v58, 7
    %v60 = vsub.s32 %v57, %v59
    %v61 = vrot.slane %v35, %v60
    %v62 = vcombine.high %v61, %v61
    %v69 = vpack.c.bf16 %v45, %v45
    %v70 = vpack.c.bf16 %v53, %v53
    %v71 = vpack.c.bf16 %v52, %v52
    %v72 = vpack.c.bf16 %v54, %v54
    %v73 = vpack.c.bf16 %v61, %v61
    %v74 = vpack.c.bf16 %v62, %v62
    %v75 = vld [vmem:[%s1] sm:$0xff]
    %v76 = vld [vmem:[%s1 + $0x8] sm:$0xff]
    %v77 = vld [vmem:[%s1 + $0x10] sm:$0xff]
    %v78 = vld [vmem:[%s1 + $0x18] sm:$0xff]
    %v79 = vld [vmem:[%s1 + $0x20] sm:$0xff]
    %v80 = vld [vmem:[%s1 + $0x28] sm:$0xff]
    %v81 = vld [vmem:[%s1 + $0x30] sm:$0xff]
    %v82 = vld [vmem:[%s1 + $0x38] sm:$0xff]
    %v83 = vld [vmem:[%s1 + $0x40] sm:$0xff]
    %v84 = vld [vmem:[%s1 + $0x48] sm:$0xff]
    %v85 = vld [vmem:[%s1 + $0x50] sm:$0xff]
    %v86 = vld [vmem:[%s1 + $0x58] sm:$0xff]
    %v87 = vld [vmem:[%s1 + $0x60] sm:$0xff]
    %v88 = vld [vmem:[%s1 + $0x68] sm:$0xff]
    %v89 = vld [vmem:[%s1 + $0x70] sm:$0xff]
    %v90 = vld [vmem:[%s1 + $0x78] sm:$0xff]
    %v91 = vld [vmem:[%s1 + $0x80] sm:$0xff]
    %v92 = vld [vmem:[%s1 + $0x88] sm:$0xff]
    %v93 = vld [vmem:[%s1 + $0x90] sm:$0xff]
    %v94 = vld [vmem:[%s1 + $0x98] sm:$0xff]
    %v95 = vld [vmem:[%s1 + $0xa0] sm:$0xff]
    %v96 = vld [vmem:[%s1 + $0xa8] sm:$0xff]
    %v97 = vld [vmem:[%s1 + $0xb0] sm:$0xff]
    %v98 = vld [vmem:[%s1 + $0xb8] sm:$0xff]
    %v99 = vld [vmem:[%s1 + $0xc0] sm:$0xff]
    %v100 = vld [vmem:[%s1 + $0xc8] sm:$0xff]
    %v101 = vld [vmem:[%s1 + $0xd0] sm:$0xff]
    %v102 = vld [vmem:[%s1 + $0xd8] sm:$0xff]
    %v103 = vld [vmem:[%s1 + $0xe0] sm:$0xff]
    %v104 = vld [vmem:[%s1 + $0xe8] sm:$0xff]
    %v105 = vld [vmem:[%s1 + $0xf0] sm:$0xff]
    %v106 = vld [vmem:[%s1 + $0xf8] sm:$0xff]
    %v107 = vld [vmem:[%s1 + $0x100] sm:$0xff]
    %v108 = vld [vmem:[%s1 + $0x108] sm:$0xff]
    %v109 = vld [vmem:[%s1 + $0x110] sm:$0xff]
    %v110 = vld [vmem:[%s1 + $0x118] sm:$0xff]
    %v111 = vld [vmem:[%s1 + $0x120] sm:$0xff]
    %v112 = vld [vmem:[%s1 + $0x128] sm:$0xff]
    %v113 = vld [vmem:[%s1 + $0x130] sm:$0xff]
    %v114 = vld [vmem:[%s1 + $0x138] sm:$0xff]
    %v115 = vld [vmem:[%s1 + $0x140] sm:$0xff]
    %v116 = vld [vmem:[%s1 + $0x148] sm:$0xff]
    %v117 = vld [vmem:[%s1 + $0x150] sm:$0xff]
    %v118 = vld [vmem:[%s1 + $0x158] sm:$0xff]
    %v119 = vld [vmem:[%s1 + $0x160] sm:$0xff]
    %v120 = vld [vmem:[%s1 + $0x168] sm:$0xff]
    %v121 = vld [vmem:[%s1 + $0x170] sm:$0xff]
    %v122 = vld [vmem:[%s1 + $0x178] sm:$0xff]
    %v123 = vld [vmem:[%s1 + $0x180] sm:$0xff]
    %v124 = vld [vmem:[%s1 + $0x188] sm:$0xff]
    %v125 = vld [vmem:[%s1 + $0x190] sm:$0xff]
    %v126 = vld [vmem:[%s1 + $0x198] sm:$0xff]
    %v127 = vld [vmem:[%s1 + $0x1a0] sm:$0xff]
    %v128 = vld [vmem:[%s1 + $0x1a8] sm:$0xff]
    %v129 = vld [vmem:[%s1 + $0x1b0] sm:$0xff]
    %v130 = vld [vmem:[%s1 + $0x1b8] sm:$0xff]
    %v131 = vld [vmem:[%s1 + $0x1c0] sm:$0xff]
    %v132 = vld [vmem:[%s1 + $0x1c8] sm:$0xff]
    %v133 = vld [vmem:[%s1 + $0x1d0] sm:$0xff]
    %v134 = vld [vmem:[%s1 + $0x1d8] sm:$0xff]
    %v135 = vld [vmem:[%s1 + $0x1e0] sm:$0xff]
    %v136 = vld [vmem:[%s1 + $0x1e8] sm:$0xff]
    %v137 = vld [vmem:[%s1 + $0x1f0] sm:$0xff]
    %v138 = vld [vmem:[%s1 + $0x1f8] sm:$0xff]
    %v139 = vld [vmem:[%s1 + $0x200] sm:$0xff]
    %v140 = vld [vmem:[%s1 + $0x208] sm:$0xff]
    %v141 = vld [vmem:[%s1 + $0x210] sm:$0xff]
    %v142 = vld [vmem:[%s1 + $0x218] sm:$0xff]
    %v143 = vld [vmem:[%s1 + $0x220] sm:$0xff]
    %v144 = vld [vmem:[%s1 + $0x228] sm:$0xff]
    %v145 = vld [vmem:[%s1 + $0x230] sm:$0xff]
    %v146 = vld [vmem:[%s1 + $0x238] sm:$0xff]
    %v147 = vld [vmem:[%s1 + $0x240] sm:$0xff]
    %v148 = vld [vmem:[%s1 + $0x248] sm:$0xff]
    %v149 = vld [vmem:[%s1 + $0x250] sm:$0xff]
    %v150 = vld [vmem:[%s1 + $0x258] sm:$0xff]
    %v151 = vld [vmem:[%s1 + $0x260] sm:$0xff]
    %v152 = vld [vmem:[%s1 + $0x268] sm:$0xff]
    %v153 = vld [vmem:[%s1 + $0x270] sm:$0xff]
    %v154 = vld [vmem:[%s1 + $0x278] sm:$0xff]
    %v155 = vld [vmem:[%s1 + $0x280] sm:$0xff]
    %v156 = vld [vmem:[%s1 + $0x288] sm:$0xff]
    %v157 = vld [vmem:[%s1 + $0x290] sm:$0xff]
    %v158 = vld [vmem:[%s1 + $0x298] sm:$0xff]
    %v159 = vld [vmem:[%s1 + $0x2a0] sm:$0xff]
    %v160 = vld [vmem:[%s1 + $0x2a8] sm:$0xff]
    %v161 = vld [vmem:[%s1 + $0x2b0] sm:$0xff]
    %v162 = vld [vmem:[%s1 + $0x2b8] sm:$0xff]
    %v163 = vld [vmem:[%s1 + $0x2c0] sm:$0xff]
    %v164 = vld [vmem:[%s1 + $0x2c8] sm:$0xff]
    %v165 = vld [vmem:[%s1 + $0x2d0] sm:$0xff]
    %v166 = vld [vmem:[%s1 + $0x2d8] sm:$0xff]
    %v167 = vld [vmem:[%s1 + $0x2e0] sm:$0xff]
    %v168 = vld [vmem:[%s1 + $0x2e8] sm:$0xff]
    %v169 = vld [vmem:[%s1 + $0x2f0] sm:$0xff]
    %v170 = vld [vmem:[%s1 + $0x2f8] sm:$0xff]
    %v171 = vld [vmem:[%s1 + $0x300] sm:$0xff]
    %v172 = vld [vmem:[%s1 + $0x308] sm:$0xff]
    %v173 = vld [vmem:[%s1 + $0x310] sm:$0xff]
    %v174 = vld [vmem:[%s1 + $0x318] sm:$0xff]
    %v175 = vld [vmem:[%s1 + $0x320] sm:$0xff]
    %v176 = vld [vmem:[%s1 + $0x328] sm:$0xff]
    %v177 = vld [vmem:[%s1 + $0x330] sm:$0xff]
    %v178 = vld [vmem:[%s1 + $0x338] sm:$0xff]
    %v179 = vld [vmem:[%s1 + $0x340] sm:$0xff]
    %v180 = vld [vmem:[%s1 + $0x348] sm:$0xff]
    %v181 = vld [vmem:[%s1 + $0x350] sm:$0xff]
    %v182 = vld [vmem:[%s1 + $0x358] sm:$0xff]
    %v183 = vld [vmem:[%s1 + $0x360] sm:$0xff]
    %v184 = vld [vmem:[%s1 + $0x368] sm:$0xff]
    %v185 = vld [vmem:[%s1 + $0x370] sm:$0xff]
    %v186 = vld [vmem:[%s1 + $0x378] sm:$0xff]
    %v187 = vld [vmem:[%s1 + $0x380] sm:$0xff]
    %v188 = vld [vmem:[%s1 + $0x388] sm:$0xff]
    %v189 = vld [vmem:[%s1 + $0x390] sm:$0xff]
    %v190 = vld [vmem:[%s1 + $0x398] sm:$0xff]
    %v191 = vld [vmem:[%s1 + $0x3a0] sm:$0xff]
    %v192 = vld [vmem:[%s1 + $0x3a8] sm:$0xff]
    %v193 = vld [vmem:[%s1 + $0x3b0] sm:$0xff]
    %v194 = vld [vmem:[%s1 + $0x3b8] sm:$0xff]
    %v195 = vld [vmem:[%s1 + $0x3c0] sm:$0xff]
    %v196 = vld [vmem:[%s1 + $0x3c8] sm:$0xff]
    %v197 = vld [vmem:[%s1 + $0x3d0] sm:$0xff]
    %v198 = vld [vmem:[%s1 + $0x3d8] sm:$0xff]
    %v199 = vld [vmem:[%s1 + $0x3e0] sm:$0xff]
    %v200 = vld [vmem:[%s1 + $0x3e8] sm:$0xff]
    %v201 = vld [vmem:[%s1 + $0x3f0] sm:$0xff]
    %v202 = vld [vmem:[%s1 + $0x3f8] sm:$0xff]
    %v203 = vld [vmem:[%s1 + $0x400] sm:$0xff]
    %v204 = vld [vmem:[%s1 + $0x408] sm:$0xff]
    %v205 = vld [vmem:[%s1 + $0x410] sm:$0xff]
    %v206 = vld [vmem:[%s1 + $0x418] sm:$0xff]
    %v207 = vld [vmem:[%s1 + $0x420] sm:$0xff]
    %v208 = vld [vmem:[%s1 + $0x428] sm:$0xff]
    %v209 = vld [vmem:[%s1 + $0x430] sm:$0xff]
    %v210 = vld [vmem:[%s1 + $0x438] sm:$0xff]
    %v211 = vld [vmem:[%s1 + $0x440] sm:$0xff]
    %v212 = vld [vmem:[%s1 + $0x448] sm:$0xff]
    %v213 = vld [vmem:[%s1 + $0x450] sm:$0xff]
    %v214 = vld [vmem:[%s1 + $0x458] sm:$0xff]
    %v215 = vld [vmem:[%s1 + $0x460] sm:$0xff]
    %v216 = vld [vmem:[%s1 + $0x468] sm:$0xff]
    %v217 = vld [vmem:[%s1 + $0x470] sm:$0xff]
    %v218 = vld [vmem:[%s1 + $0x478] sm:$0xff]
    %v219 = vld [vmem:[%s1 + $0x480] sm:$0xff]
    %v220 = vld [vmem:[%s1 + $0x488] sm:$0xff]
    %v221 = vld [vmem:[%s1 + $0x490] sm:$0xff]
    %v222 = vld [vmem:[%s1 + $0x498] sm:$0xff]
    %v223 = vld [vmem:[%s1 + $0x4a0] sm:$0xff]
    %v224 = vld [vmem:[%s1 + $0x4a8] sm:$0xff]
    %v225 = vld [vmem:[%s1 + $0x4b0] sm:$0xff]
    %v226 = vld [vmem:[%s1 + $0x4b8] sm:$0xff]
    %v227 = vld [vmem:[%s1 + $0x4c0] sm:$0xff]
    %v228 = vld [vmem:[%s1 + $0x4c8] sm:$0xff]
    %v229 = vld [vmem:[%s1 + $0x4d0] sm:$0xff]
    %v230 = vld [vmem:[%s1 + $0x4d8] sm:$0xff]
    %v231 = vld [vmem:[%s1 + $0x4e0] sm:$0xff]
    %v232 = vld [vmem:[%s1 + $0x4e8] sm:$0xff]
    %v233 = vld [vmem:[%s1 + $0x4f0] sm:$0xff]
    %v234 = vld [vmem:[%s1 + $0x4f8] sm:$0xff]
    %v235 = vld [vmem:[%s1 + $0x500] sm:$0xff]
    %v236 = vld [vmem:[%s1 + $0x508] sm:$0xff]
    %v237 = vld [vmem:[%s1 + $0x510] sm:$0xff]
    %v238 = vld [vmem:[%s1 + $0x518] sm:$0xff]
    %v239 = vld [vmem:[%s1 + $0x520] sm:$0xff]
    %v240 = vld [vmem:[%s1 + $0x528] sm:$0xff]
    %v241 = vld [vmem:[%s1 + $0x530] sm:$0xff]
    %v242 = vld [vmem:[%s1 + $0x538] sm:$0xff]
    %v243 = vld [vmem:[%s1 + $0x540] sm:$0xff]
    %v244 = vld [vmem:[%s1 + $0x548] sm:$0xff]
    %v245 = vld [vmem:[%s1 + $0x550] sm:$0xff]
    %v246 = vld [vmem:[%s1 + $0x558] sm:$0xff]
    %v247 = vld [vmem:[%s1 + $0x560] sm:$0xff]
    %v248 = vld [vmem:[%s1 + $0x568] sm:$0xff]
    %v249 = vld [vmem:[%s1 + $0x570] sm:$0xff]
    %v250 = vld [vmem:[%s1 + $0x578] sm:$0xff]
    %v251 = vld [vmem:[%s1 + $0x580] sm:$0xff]
    %v252 = vld [vmem:[%s1 + $0x588] sm:$0xff]
    %v253 = vld [vmem:[%s1 + $0x590] sm:$0xff]
    %v254 = vld [vmem:[%s1 + $0x598] sm:$0xff]
    %v255 = vld [vmem:[%s1 + $0x5a0] sm:$0xff]
    %v256 = vld [vmem:[%s1 + $0x5a8] sm:$0xff]
    %v257 = vld [vmem:[%s1 + $0x5b0] sm:$0xff]
    %v258 = vld [vmem:[%s1 + $0x5b8] sm:$0xff]
    %v259 = vld [vmem:[%s1 + $0x5c0] sm:$0xff]
    %v260 = vld [vmem:[%s1 + $0x5c8] sm:$0xff]
    %v261 = vld [vmem:[%s1 + $0x5d0] sm:$0xff]
    %v262 = vld [vmem:[%s1 + $0x5d8] sm:$0xff]
    %v263 = vld [vmem:[%s1 + $0x5e0] sm:$0xff]
    %v264 = vld [vmem:[%s1 + $0x5e8] sm:$0xff]
    %v265 = vld [vmem:[%s1 + $0x5f0] sm:$0xff]
    %v266 = vld [vmem:[%s1 + $0x5f8] sm:$0xff]
    %v267 = vld [vmem:[%s1 + $0x600] sm:$0xff]
    %v268 = vld [vmem:[%s1 + $0x608] sm:$0xff]
    %v269 = vld [vmem:[%s1 + $0x610] sm:$0xff]
    %v270 = vld [vmem:[%s1 + $0x618] sm:$0xff]
    %v271 = vld [vmem:[%s1 + $0x620] sm:$0xff]
    %v272 = vld [vmem:[%s1 + $0x628] sm:$0xff]
    %v273 = vld [vmem:[%s1 + $0x630] sm:$0xff]
    %v274 = vld [vmem:[%s1 + $0x638] sm:$0xff]
    %v275 = vld [vmem:[%s1 + $0x640] sm:$0xff]
    %v276 = vld [vmem:[%s1 + $0x648] sm:$0xff]
    %v277 = vld [vmem:[%s1 + $0x650] sm:$0xff]
    %v278 = vld [vmem:[%s1 + $0x658] sm:$0xff]
    %v279 = vld [vmem:[%s1 + $0x660] sm:$0xff]
    %v280 = vld [vmem:[%s1 + $0x668] sm:$0xff]
    %v281 = vld [vmem:[%s1 + $0x670] sm:$0xff]
    %v282 = vld [vmem:[%s1 + $0x678] sm:$0xff]
    %v283 = vld [vmem:[%s1 + $0x680] sm:$0xff]
    %v284 = vld [vmem:[%s1 + $0x688] sm:$0xff]
    %v285 = vld [vmem:[%s1 + $0x690] sm:$0xff]
    %v286 = vld [vmem:[%s1 + $0x698] sm:$0xff]
    %v287 = vld [vmem:[%s1 + $0x6a0] sm:$0xff]
    %v288 = vld [vmem:[%s1 + $0x6a8] sm:$0xff]
    %v289 = vld [vmem:[%s1 + $0x6b0] sm:$0xff]
    %v290 = vld [vmem:[%s1 + $0x6b8] sm:$0xff]
    %v291 = vld [vmem:[%s1 + $0x6c0] sm:$0xff]
    %v292 = vld [vmem:[%s1 + $0x6c8] sm:$0xff]
    %v293 = vld [vmem:[%s1 + $0x6d0] sm:$0xff]
    %v294 = vld [vmem:[%s1 + $0x6d8] sm:$0xff]
    %v295 = vld [vmem:[%s1 + $0x6e0] sm:$0xff]
    %v296 = vld [vmem:[%s1 + $0x6e8] sm:$0xff]
    %v297 = vld [vmem:[%s1 + $0x6f0] sm:$0xff]
    %v298 = vld [vmem:[%s1 + $0x6f8] sm:$0xff]
    %v299 = vld [vmem:[%s1 + $0x700] sm:$0xff]
    %v300 = vld [vmem:[%s1 + $0x708] sm:$0xff]
    %v301 = vld [vmem:[%s1 + $0x710] sm:$0xff]
    %v302 = vld [vmem:[%s1 + $0x718] sm:$0xff]
    %v303 = vld [vmem:[%s1 + $0x720] sm:$0xff]
    %v304 = vld [vmem:[%s1 + $0x728] sm:$0xff]
    %v305 = vld [vmem:[%s1 + $0x730] sm:$0xff]
    %v306 = vld [vmem:[%s1 + $0x738] sm:$0xff]
    %v307 = vld [vmem:[%s1 + $0x740] sm:$0xff]
    %v308 = vld [vmem:[%s1 + $0x748] sm:$0xff]
    %v309 = vld [vmem:[%s1 + $0x750] sm:$0xff]
    %v310 = vld [vmem:[%s1 + $0x758] sm:$0xff]
    %v311 = vld [vmem:[%s1 + $0x760] sm:$0xff]
    %v312 = vld [vmem:[%s1 + $0x768] sm:$0xff]
    %v313 = vld [vmem:[%s1 + $0x770] sm:$0xff]
    %v314 = vld [vmem:[%s1 + $0x778] sm:$0xff]
    %v315 = vld [vmem:[%s1 + $0x780] sm:$0xff]
    %v316 = vld [vmem:[%s1 + $0x788] sm:$0xff]
    %v317 = vld [vmem:[%s1 + $0x790] sm:$0xff]
    %v318 = vld [vmem:[%s1 + $0x798] sm:$0xff]
    %v319 = vld [vmem:[%s1 + $0x7a0] sm:$0xff]
    %v320 = vld [vmem:[%s1 + $0x7a8] sm:$0xff]
    %v321 = vld [vmem:[%s1 + $0x7b0] sm:$0xff]
    %v322 = vld [vmem:[%s1 + $0x7b8] sm:$0xff]
    %v323 = vld [vmem:[%s1 + $0x7c0] sm:$0xff]
    %v324 = vld [vmem:[%s1 + $0x7c8] sm:$0xff]
    %v325 = vld [vmem:[%s1 + $0x7d0] sm:$0xff]
    %v326 = vld [vmem:[%s1 + $0x7d8] sm:$0xff]
    %v327 = vld [vmem:[%s1 + $0x7e0] sm:$0xff]
    %v328 = vld [vmem:[%s1 + $0x7e8] sm:$0xff]
    %v329 = vld [vmem:[%s1 + $0x7f0] sm:$0xff]
    %v330 = vld [vmem:[%s1 + $0x7f8] sm:$0xff]
    %v331 = vld [vmem:[%s1 + $0x800] sm:$0xff]
    %v332 = vld [vmem:[%s1 + $0x808] sm:$0xff]
    %v333 = vld [vmem:[%s1 + $0x810] sm:$0xff]
    %v334 = vld [vmem:[%s1 + $0x818] sm:$0xff]
    %v335 = vld [vmem:[%s1 + $0x820] sm:$0xff]
    %v336 = vld [vmem:[%s1 + $0x828] sm:$0xff]
    %v337 = vld [vmem:[%s1 + $0x830] sm:$0xff]
    %v338 = vld [vmem:[%s1 + $0x838] sm:$0xff]
    %v339 = vld [vmem:[%s1 + $0x840] sm:$0xff]
    %v340 = vld [vmem:[%s1 + $0x848] sm:$0xff]
    %v341 = vld [vmem:[%s1 + $0x850] sm:$0xff]
    %v342 = vld [vmem:[%s1 + $0x858] sm:$0xff]
    %v343 = vld [vmem:[%s1 + $0x860] sm:$0xff]
    %v344 = vld [vmem:[%s1 + $0x868] sm:$0xff]
    %v345 = vld [vmem:[%s1 + $0x870] sm:$0xff]
    %v346 = vld [vmem:[%s1 + $0x878] sm:$0xff]
    %v347 = vld [vmem:[%s1 + $0x880] sm:$0xff]
    %v348 = vld [vmem:[%s1 + $0x888] sm:$0xff]
    %v349 = vld [vmem:[%s1 + $0x890] sm:$0xff]
    %v350 = vld [vmem:[%s1 + $0x898] sm:$0xff]
    %v351 = vld [vmem:[%s1 + $0x8a0] sm:$0xff]
    %v352 = vld [vmem:[%s1 + $0x8a8] sm:$0xff]
    %v353 = vld [vmem:[%s1 + $0x8b0] sm:$0xff]
    %v354 = vld [vmem:[%s1 + $0x8b8] sm:$0xff]
    %v355 = vld [vmem:[%s1 + $0x8c0] sm:$0xff]
    %v356 = vld [vmem:[%s1 + $0x8c8] sm:$0xff]
    %v357 = vld [vmem:[%s1 + $0x8d0] sm:$0xff]
    %v358 = vld [vmem:[%s1 + $0x8d8] sm:$0xff]
    %v359 = vld [vmem:[%s1 + $0x8e0] sm:$0xff]
    %v360 = vld [vmem:[%s1 + $0x8e8] sm:$0xff]
    %v361 = vld [vmem:[%s1 + $0x8f0] sm:$0xff]
    %v362 = vld [vmem:[%s1 + $0x8f8] sm:$0xff]
    %v363 = vld [vmem:[%s1 + $0x900] sm:$0xff]
    %v364 = vld [vmem:[%s1 + $0x908] sm:$0xff]
    %v365 = vld [vmem:[%s1 + $0x910] sm:$0xff]
    %v366 = vld [vmem:[%s1 + $0x918] sm:$0xff]
    %v367 = vld [vmem:[%s1 + $0x920] sm:$0xff]
    %v368 = vld [vmem:[%s1 + $0x928] sm:$0xff]
    %v369 = vld [vmem:[%s1 + $0x930] sm:$0xff]
    %v370 = vld [vmem:[%s1 + $0x938] sm:$0xff]
    %v371 = vld [vmem:[%s1 + $0x940] sm:$0xff]
    %v372 = vld [vmem:[%s1 + $0x948] sm:$0xff]
    %v373 = vld [vmem:[%s1 + $0x950] sm:$0xff]
    %v374 = vld [vmem:[%s1 + $0x958] sm:$0xff]
    %v375 = vld [vmem:[%s1 + $0x960] sm:$0xff]
    %v376 = vld [vmem:[%s1 + $0x968] sm:$0xff]
    %v377 = vld [vmem:[%s1 + $0x970] sm:$0xff]
    %v378 = vld [vmem:[%s1 + $0x978] sm:$0xff]
    %v379 = vld [vmem:[%s1 + $0x980] sm:$0xff]
    %v380 = vld [vmem:[%s1 + $0x988] sm:$0xff]
    %v381 = vld [vmem:[%s1 + $0x990] sm:$0xff]
    %v382 = vld [vmem:[%s1 + $0x998] sm:$0xff]
    %v383 = vld [vmem:[%s1 + $0x9a0] sm:$0xff]
    %v384 = vld [vmem:[%s1 + $0x9a8] sm:$0xff]
    %v385 = vld [vmem:[%s1 + $0x9b0] sm:$0xff]
    %v386 = vld [vmem:[%s1 + $0x9b8] sm:$0xff]
    %v387 = vld [vmem:[%s1 + $0x9c0] sm:$0xff]
    %v388 = vld [vmem:[%s1 + $0x9c8] sm:$0xff]
    %v389 = vld [vmem:[%s1 + $0x9d0] sm:$0xff]
    %v390 = vld [vmem:[%s1 + $0x9d8] sm:$0xff]
    %v391 = vld [vmem:[%s1 + $0x9e0] sm:$0xff]
    %v392 = vld [vmem:[%s1 + $0x9e8] sm:$0xff]
    %v393 = vld [vmem:[%s1 + $0x9f0] sm:$0xff]
    %v394 = vld [vmem:[%s1 + $0x9f8] sm:$0xff]
    %v395 = vld [vmem:[%s1 + $0xa00] sm:$0xff]
    %v396 = vld [vmem:[%s1 + $0xa08] sm:$0xff]
    %v397 = vld [vmem:[%s1 + $0xa10] sm:$0xff]
    %v398 = vld [vmem:[%s1 + $0xa18] sm:$0xff]
    %v399 = vld [vmem:[%s1 + $0xa20] sm:$0xff]
    %v400 = vld [vmem:[%s1 + $0xa28] sm:$0xff]
    %v401 = vld [vmem:[%s1 + $0xa30] sm:$0xff]
    %v402 = vld [vmem:[%s1 + $0xa38] sm:$0xff]
    %v403 = vld [vmem:[%s1 + $0xa40] sm:$0xff]
    %v404 = vld [vmem:[%s1 + $0xa48] sm:$0xff]
    %v405 = vld [vmem:[%s1 + $0xa50] sm:$0xff]
    %v406 = vld [vmem:[%s1 + $0xa58] sm:$0xff]
    %v407 = vld [vmem:[%s1 + $0xa60] sm:$0xff]
    %v408 = vld [vmem:[%s1 + $0xa68] sm:$0xff]
    %v409 = vld [vmem:[%s1 + $0xa70] sm:$0xff]
    %v410 = vld [vmem:[%s1 + $0xa78] sm:$0xff]
    %v411 = vld [vmem:[%s1 + $0xa80] sm:$0xff]
    %v412 = vld [vmem:[%s1 + $0xa88] sm:$0xff]
    %v413 = vld [vmem:[%s1 + $0xa90] sm:$0xff]
    %v414 = vld [vmem:[%s1 + $0xa98] sm:$0xff]
    %v415 = vld [vmem:[%s1 + $0xaa0] sm:$0xff]
    %v416 = vld [vmem:[%s1 + $0xaa8] sm:$0xff]
    %v417 = vld [vmem:[%s1 + $0xab0] sm:$0xff]
    %v418 = vld [vmem:[%s1 + $0xab8] sm:$0xff]
    %v419 = vld [vmem:[%s1 + $0xac0] sm:$0xff]
    %v420 = vld [vmem:[%s1 + $0xac8] sm:$0xff]
    %v421 = vld [vmem:[%s1 + $0xad0] sm:$0xff]
    %v422 = vld [vmem:[%s1 + $0xad8] sm:$0xff]
    %v423 = vld [vmem:[%s1 + $0xae0] sm:$0xff]
    %v424 = vld [vmem:[%s1 + $0xae8] sm:$0xff]
    %v425 = vld [vmem:[%s1 + $0xaf0] sm:$0xff]
    %v426 = vld [vmem:[%s1 + $0xaf8] sm:$0xff]
    %v427 = vld [vmem:[%s1 + $0xb00] sm:$0xff]
    %v428 = vld [vmem:[%s1 + $0xb08] sm:$0xff]
    %v429 = vld [vmem:[%s1 + $0xb10] sm:$0xff]
    %v430 = vld [vmem:[%s1 + $0xb18] sm:$0xff]
    %v431 = vld [vmem:[%s1 + $0xb20] sm:$0xff]
    %v432 = vld [vmem:[%s1 + $0xb28] sm:$0xff]
    %v433 = vld [vmem:[%s1 + $0xb30] sm:$0xff]
    %v434 = vld [vmem:[%s1 + $0xb38] sm:$0xff]
    %v435 = vld [vmem:[%s1 + $0xb40] sm:$0xff]
    %v436 = vld [vmem:[%s1 + $0xb48] sm:$0xff]
    %v437 = vld [vmem:[%s1 + $0xb50] sm:$0xff]
    %v438 = vld [vmem:[%s1 + $0xb58] sm:$0xff]
    %v439 = vld [vmem:[%s1 + $0xb60] sm:$0xff]
    %v440 = vld [vmem:[%s1 + $0xb68] sm:$0xff]
    %v441 = vld [vmem:[%s1 + $0xb70] sm:$0xff]
    %v442 = vld [vmem:[%s1 + $0xb78] sm:$0xff]
    %v443 = vld [vmem:[%s1 + $0xb80] sm:$0xff]
    %v444 = vld [vmem:[%s1 + $0xb88] sm:$0xff]
    %v445 = vld [vmem:[%s1 + $0xb90] sm:$0xff]
    %v446 = vld [vmem:[%s1 + $0xb98] sm:$0xff]
    %v447 = vld [vmem:[%s1 + $0xba0] sm:$0xff]
    %v448 = vld [vmem:[%s1 + $0xba8] sm:$0xff]
    %v449 = vld [vmem:[%s1 + $0xbb0] sm:$0xff]
    %v450 = vld [vmem:[%s1 + $0xbb8] sm:$0xff]
    %v451 = vld [vmem:[%s1 + $0xbc0] sm:$0xff]
    %v452 = vld [vmem:[%s1 + $0xbc8] sm:$0xff]
    %v453 = vld [vmem:[%s1 + $0xbd0] sm:$0xff]
    %v454 = vld [vmem:[%s1 + $0xbd8] sm:$0xff]
    %v455 = vld [vmem:[%s1 + $0xbe0] sm:$0xff]
    %v456 = vld [vmem:[%s1 + $0xbe8] sm:$0xff]
    %v457 = vld [vmem:[%s1 + $0xbf0] sm:$0xff]
    %v458 = vld [vmem:[%s1 + $0xbf8] sm:$0xff]
    %v843 = vunpack.c.l.b16 %v75
    %v844 = vunpack.c.h.b16 %v75
    %v845 = vunpack.c.l.b16 %v76
    %v846 = vunpack.c.h.b16 %v76
    %v847 = vunpack.c.l.b16 %v77
    %v848 = vunpack.c.h.b16 %v77
    %v849 = vunpack.c.l.b16 %v78
    %v850 = vunpack.c.h.b16 %v78
    %v851 = vunpack.c.l.b16 %v79
    %v852 = vunpack.c.h.b16 %v79
    %v853 = vunpack.c.l.b16 %v80
    %v854 = vunpack.c.h.b16 %v80
    %v855 = vunpack.c.l.b16 %v81
    %v856 = vunpack.c.h.b16 %v81
    %v857 = vunpack.c.l.b16 %v82
    %v858 = vunpack.c.h.b16 %v82
    %v859 = vunpack.c.l.b16 %v83
    %v860 = vunpack.c.h.b16 %v83
    %v861 = vunpack.c.l.b16 %v84
    %v862 = vunpack.c.h.b16 %v84
    %v863 = vunpack.c.l.b16 %v85
    %v864 = vunpack.c.h.b16 %v85
    %v865 = vunpack.c.l.b16 %v86
    %v866 = vunpack.c.h.b16 %v86
    %v867 = vunpack.c.l.b16 %v87
    %v868 = vunpack.c.h.b16 %v87
    %v869 = vunpack.c.l.b16 %v88
    %v870 = vunpack.c.h.b16 %v88
    %v871 = vunpack.c.l.b16 %v89
    %v872 = vunpack.c.h.b16 %v89
    %v873 = vunpack.c.l.b16 %v90
    %v874 = vunpack.c.h.b16 %v90
    %v875 = vunpack.c.l.b16 %v91
    %v876 = vunpack.c.h.b16 %v91
    %v877 = vunpack.c.l.b16 %v92
    %v878 = vunpack.c.h.b16 %v92
    %v879 = vunpack.c.l.b16 %v93
    %v880 = vunpack.c.h.b16 %v93
    %v881 = vunpack.c.l.b16 %v94
    %v882 = vunpack.c.h.b16 %v94
    %v883 = vunpack.c.l.b16 %v95
    %v884 = vunpack.c.h.b16 %v95
    %v885 = vunpack.c.l.b16 %v96
    %v886 = vunpack.c.h.b16 %v96
    %v887 = vunpack.c.l.b16 %v97
    %v888 = vunpack.c.h.b16 %v97
    %v889 = vunpack.c.l.b16 %v98
    %v890 = vunpack.c.h.b16 %v98
    %v891 = vunpack.c.l.b16 %v99
    %v892 = vunpack.c.h.b16 %v99
    %v893 = vunpack.c.l.b16 %v100
    %v894 = vunpack.c.h.b16 %v100
    %v895 = vunpack.c.l.b16 %v101
    %v896 = vunpack.c.h.b16 %v101
    %v897 = vunpack.c.l.b16 %v102
    %v898 = vunpack.c.h.b16 %v102
    %v899 = vunpack.c.l.b16 %v103
    %v900 = vunpack.c.h.b16 %v103
    %v901 = vunpack.c.l.b16 %v104
    %v902 = vunpack.c.h.b16 %v104
    %v903 = vunpack.c.l.b16 %v105
    %v904 = vunpack.c.h.b16 %v105
    %v905 = vunpack.c.l.b16 %v106
    %v906 = vunpack.c.h.b16 %v106
    %v907 = vunpack.c.l.b16 %v107
    %v908 = vunpack.c.h.b16 %v107
    %v909 = vunpack.c.l.b16 %v108
    %v910 = vunpack.c.h.b16 %v108
    %v911 = vunpack.c.l.b16 %v109
    %v912 = vunpack.c.h.b16 %v109
    %v913 = vunpack.c.l.b16 %v110
    %v914 = vunpack.c.h.b16 %v110
    %v915 = vunpack.c.l.b16 %v111
    %v916 = vunpack.c.h.b16 %v111
    %v917 = vunpack.c.l.b16 %v112
    %v918 = vunpack.c.h.b16 %v112
    %v919 = vunpack.c.l.b16 %v113
    %v920 = vunpack.c.h.b16 %v113
    %v921 = vunpack.c.l.b16 %v114
    %v922 = vunpack.c.h.b16 %v114
    %v923 = vunpack.c.l.b16 %v115
    %v924 = vunpack.c.h.b16 %v115
    %v925 = vunpack.c.l.b16 %v116
    %v926 = vunpack.c.h.b16 %v116
    %v927 = vunpack.c.l.b16 %v117
    %v928 = vunpack.c.h.b16 %v117
    %v929 = vunpack.c.l.b16 %v118
    %v930 = vunpack.c.h.b16 %v118
    %v931 = vunpack.c.l.b16 %v119
    %v932 = vunpack.c.h.b16 %v119
    %v933 = vunpack.c.l.b16 %v120
    %v934 = vunpack.c.h.b16 %v120
    %v935 = vunpack.c.l.b16 %v121
    %v936 = vunpack.c.h.b16 %v121
    %v937 = vunpack.c.l.b16 %v122
    %v938 = vunpack.c.h.b16 %v122
    %v939 = vunpack.c.l.b16 %v123
    %v940 = vunpack.c.h.b16 %v123
    %v941 = vunpack.c.l.b16 %v124
    %v942 = vunpack.c.h.b16 %v124
    %v943 = vunpack.c.l.b16 %v125
    %v944 = vunpack.c.h.b16 %v125
    %v945 = vunpack.c.l.b16 %v126
    %v946 = vunpack.c.h.b16 %v126
    %v947 = vunpack.c.l.b16 %v127
    %v948 = vunpack.c.h.b16 %v127
    %v949 = vunpack.c.l.b16 %v128
    %v950 = vunpack.c.h.b16 %v128
    %v951 = vunpack.c.l.b16 %v129
    %v952 = vunpack.c.h.b16 %v129
    %v953 = vunpack.c.l.b16 %v130
    %v954 = vunpack.c.h.b16 %v130
    %v955 = vunpack.c.l.b16 %v131
    %v956 = vunpack.c.h.b16 %v131
    %v957 = vunpack.c.l.b16 %v132
    %v958 = vunpack.c.h.b16 %v132
    %v959 = vunpack.c.l.b16 %v133
    %v960 = vunpack.c.h.b16 %v133
    %v961 = vunpack.c.l.b16 %v134
    %v962 = vunpack.c.h.b16 %v134
    %v963 = vunpack.c.l.b16 %v135
    %v964 = vunpack.c.h.b16 %v135
    %v965 = vunpack.c.l.b16 %v136
    %v966 = vunpack.c.h.b16 %v136
    %v967 = vunpack.c.l.b16 %v137
    %v968 = vunpack.c.h.b16 %v137
    %v969 = vunpack.c.l.b16 %v138
    %v970 = vunpack.c.h.b16 %v138
    %v971 = vunpack.c.l.b16 %v139
    %v972 = vunpack.c.h.b16 %v139
    %v973 = vunpack.c.l.b16 %v140
    %v974 = vunpack.c.h.b16 %v140
    %v975 = vunpack.c.l.b16 %v141
    %v976 = vunpack.c.h.b16 %v141
    %v977 = vunpack.c.l.b16 %v142
    %v978 = vunpack.c.h.b16 %v142
    %v979 = vunpack.c.l.b16 %v143
    %v980 = vunpack.c.h.b16 %v143
    %v981 = vunpack.c.l.b16 %v144
    %v982 = vunpack.c.h.b16 %v144
    %v983 = vunpack.c.l.b16 %v145
    %v984 = vunpack.c.h.b16 %v145
    %v985 = vunpack.c.l.b16 %v146
    %v986 = vunpack.c.h.b16 %v146
    %v987 = vunpack.c.l.b16 %v147
    %v988 = vunpack.c.h.b16 %v147
    %v989 = vunpack.c.l.b16 %v148
    %v990 = vunpack.c.h.b16 %v148
    %v991 = vunpack.c.l.b16 %v149
    %v992 = vunpack.c.h.b16 %v149
    %v993 = vunpack.c.l.b16 %v150
    %v994 = vunpack.c.h.b16 %v150
    %v995 = vunpack.c.l.b16 %v151
    %v996 = vunpack.c.h.b16 %v151
    %v997 = vunpack.c.l.b16 %v152
    %v998 = vunpack.c.h.b16 %v152
    %v999 = vunpack.c.l.b16 %v153
    %v1000 = vunpack.c.h.b16 %v153
    %v1001 = vunpack.c.l.b16 %v154
    %v1002 = vunpack.c.h.b16 %v154
    %v1003 = vunpack.c.l.b16 %v155
    %v1004 = vunpack.c.h.b16 %v155
    %v1005 = vunpack.c.l.b16 %v156
    %v1006 = vunpack.c.h.b16 %v156
    %v1007 = vunpack.c.l.b16 %v157
    %v1008 = vunpack.c.h.b16 %v157
    %v1009 = vunpack.c.l.b16 %v158
    %v1010 = vunpack.c.h.b16 %v158
    %v1011 = vunpack.c.l.b16 %v159
    %v1012 = vunpack.c.h.b16 %v159
    %v1013 = vunpack.c.l.b16 %v160
    %v1014 = vunpack.c.h.b16 %v160
    %v1015 = vunpack.c.l.b16 %v161
    %v1016 = vunpack.c.h.b16 %v161
    %v1017 = vunpack.c.l.b16 %v162
    %v1018 = vunpack.c.h.b16 %v162
    %v1019 = vunpack.c.l.b16 %v163
    %v1020 = vunpack.c.h.b16 %v163
    %v1021 = vunpack.c.l.b16 %v164
    %v1022 = vunpack.c.h.b16 %v164
    %v1023 = vunpack.c.l.b16 %v165
    %v1024 = vunpack.c.h.b16 %v165
    %v1025 = vunpack.c.l.b16 %v166
    %v1026 = vunpack.c.h.b16 %v166
    %v1027 = vunpack.c.l.b16 %v167
    %v1028 = vunpack.c.h.b16 %v167
    %v1029 = vunpack.c.l.b16 %v168
    %v1030 = vunpack.c.h.b16 %v168
    %v1031 = vunpack.c.l.b16 %v169
    %v1032 = vunpack.c.h.b16 %v169
    %v1033 = vunpack.c.l.b16 %v170
    %v1034 = vunpack.c.h.b16 %v170
    %v1035 = vunpack.c.l.b16 %v171
    %v1036 = vunpack.c.h.b16 %v171
    %v1037 = vunpack.c.l.b16 %v172
    %v1038 = vunpack.c.h.b16 %v172
    %v1039 = vunpack.c.l.b16 %v173
    %v1040 = vunpack.c.h.b16 %v173
    %v1041 = vunpack.c.l.b16 %v174
    %v1042 = vunpack.c.h.b16 %v174
    %v1043 = vunpack.c.l.b16 %v175
    %v1044 = vunpack.c.h.b16 %v175
    %v1045 = vunpack.c.l.b16 %v176
    %v1046 = vunpack.c.h.b16 %v176
    %v1047 = vunpack.c.l.b16 %v177
    %v1048 = vunpack.c.h.b16 %v177
    %v1049 = vunpack.c.l.b16 %v178
    %v1050 = vunpack.c.h.b16 %v178
    %v1051 = vunpack.c.l.b16 %v179
    %v1052 = vunpack.c.h.b16 %v179
    %v1053 = vunpack.c.l.b16 %v180
    %v1054 = vunpack.c.h.b16 %v180
    %v1055 = vunpack.c.l.b16 %v181
    %v1056 = vunpack.c.h.b16 %v181
    %v1057 = vunpack.c.l.b16 %v182
    %v1058 = vunpack.c.h.b16 %v182
    %v1059 = vunpack.c.l.b16 %v183
    %v1060 = vunpack.c.h.b16 %v183
    %v1061 = vunpack.c.l.b16 %v184
    %v1062 = vunpack.c.h.b16 %v184
    %v1063 = vunpack.c.l.b16 %v185
    %v1064 = vunpack.c.h.b16 %v185
    %v1065 = vunpack.c.l.b16 %v186
    %v1066 = vunpack.c.h.b16 %v186
    %v1067 = vunpack.c.l.b16 %v187
    %v1068 = vunpack.c.h.b16 %v187
    %v1069 = vunpack.c.l.b16 %v188
    %v1070 = vunpack.c.h.b16 %v188
    %v1071 = vunpack.c.l.b16 %v189
    %v1072 = vunpack.c.h.b16 %v189
    %v1073 = vunpack.c.l.b16 %v190
    %v1074 = vunpack.c.h.b16 %v190
    %v1075 = vunpack.c.l.b16 %v191
    %v1076 = vunpack.c.h.b16 %v191
    %v1077 = vunpack.c.l.b16 %v192
    %v1078 = vunpack.c.h.b16 %v192
    %v1079 = vunpack.c.l.b16 %v193
    %v1080 = vunpack.c.h.b16 %v193
    %v1081 = vunpack.c.l.b16 %v194
    %v1082 = vunpack.c.h.b16 %v194
    %v1083 = vunpack.c.l.b16 %v195
    %v1084 = vunpack.c.h.b16 %v195
    %v1085 = vunpack.c.l.b16 %v196
    %v1086 = vunpack.c.h.b16 %v196
    %v1087 = vunpack.c.l.b16 %v197
    %v1088 = vunpack.c.h.b16 %v197
    %v1089 = vunpack.c.l.b16 %v198
    %v1090 = vunpack.c.h.b16 %v198
    %v1091 = vunpack.c.l.b16 %v199
    %v1092 = vunpack.c.h.b16 %v199
    %v1093 = vunpack.c.l.b16 %v200
    %v1094 = vunpack.c.h.b16 %v200
    %v1095 = vunpack.c.l.b16 %v201
    %v1096 = vunpack.c.h.b16 %v201
    %v1097 = vunpack.c.l.b16 %v202
    %v1098 = vunpack.c.h.b16 %v202
    %v1099 = vunpack.c.l.b16 %v203
    %v1100 = vunpack.c.h.b16 %v203
    %v1101 = vunpack.c.l.b16 %v204
    %v1102 = vunpack.c.h.b16 %v204
    %v1103 = vunpack.c.l.b16 %v205
    %v1104 = vunpack.c.h.b16 %v205
    %v1105 = vunpack.c.l.b16 %v206
    %v1106 = vunpack.c.h.b16 %v206
    %v1107 = vunpack.c.l.b16 %v207
    %v1108 = vunpack.c.h.b16 %v207
    %v1109 = vunpack.c.l.b16 %v208
    %v1110 = vunpack.c.h.b16 %v208
    %v1111 = vunpack.c.l.b16 %v209
    %v1112 = vunpack.c.h.b16 %v209
    %v1113 = vunpack.c.l.b16 %v210
    %v1114 = vunpack.c.h.b16 %v210
    %v1115 = vunpack.c.l.b16 %v211
    %v1116 = vunpack.c.h.b16 %v211
    %v1117 = vunpack.c.l.b16 %v212
    %v1118 = vunpack.c.h.b16 %v212
    %v1119 = vunpack.c.l.b16 %v213
    %v1120 = vunpack.c.h.b16 %v213
    %v1121 = vunpack.c.l.b16 %v214
    %v1122 = vunpack.c.h.b16 %v214
    %v1123 = vunpack.c.l.b16 %v215
    %v1124 = vunpack.c.h.b16 %v215
    %v1125 = vunpack.c.l.b16 %v216
    %v1126 = vunpack.c.h.b16 %v216
    %v1127 = vunpack.c.l.b16 %v217
    %v1128 = vunpack.c.h.b16 %v217
    %v1129 = vunpack.c.l.b16 %v218
    %v1130 = vunpack.c.h.b16 %v218
    %v1131 = vunpack.c.l.b16 %v219
    %v1132 = vunpack.c.h.b16 %v219
    %v1133 = vunpack.c.l.b16 %v220
    %v1134 = vunpack.c.h.b16 %v220
    %v1135 = vunpack.c.l.b16 %v221
    %v1136 = vunpack.c.h.b16 %v221
    %v1137 = vunpack.c.l.b16 %v222
    %v1138 = vunpack.c.h.b16 %v222
    %v1139 = vunpack.c.l.b16 %v223
    %v1140 = vunpack.c.h.b16 %v223
    %v1141 = vunpack.c.l.b16 %v224
    %v1142 = vunpack.c.h.b16 %v224
    %v1143 = vunpack.c.l.b16 %v225
    %v1144 = vunpack.c.h.b16 %v225
    %v1145 = vunpack.c.l.b16 %v226
    %v1146 = vunpack.c.h.b16 %v226
    %v1147 = vunpack.c.l.b16 %v227
    %v1148 = vunpack.c.h.b16 %v227
    %v1149 = vunpack.c.l.b16 %v228
    %v1150 = vunpack.c.h.b16 %v228
    %v1151 = vunpack.c.l.b16 %v229
    %v1152 = vunpack.c.h.b16 %v229
    %v1153 = vunpack.c.l.b16 %v230
    %v1154 = vunpack.c.h.b16 %v230
    %v1155 = vunpack.c.l.b16 %v231
    %v1156 = vunpack.c.h.b16 %v231
    %v1157 = vunpack.c.l.b16 %v232
    %v1158 = vunpack.c.h.b16 %v232
    %v1159 = vunpack.c.l.b16 %v233
    %v1160 = vunpack.c.h.b16 %v233
    %v1161 = vunpack.c.l.b16 %v234
    %v1162 = vunpack.c.h.b16 %v234
    %v1163 = vunpack.c.l.b16 %v235
    %v1164 = vunpack.c.h.b16 %v235
    %v1165 = vunpack.c.l.b16 %v236
    %v1166 = vunpack.c.h.b16 %v236
    %v1167 = vunpack.c.l.b16 %v237
    %v1168 = vunpack.c.h.b16 %v237
    %v1169 = vunpack.c.l.b16 %v238
    %v1170 = vunpack.c.h.b16 %v238
    %v1171 = vunpack.c.l.b16 %v239
    %v1172 = vunpack.c.h.b16 %v239
    %v1173 = vunpack.c.l.b16 %v240
    %v1174 = vunpack.c.h.b16 %v240
    %v1175 = vunpack.c.l.b16 %v241
    %v1176 = vunpack.c.h.b16 %v241
    %v1177 = vunpack.c.l.b16 %v242
    %v1178 = vunpack.c.h.b16 %v242
    %v1179 = vunpack.c.l.b16 %v243
    %v1180 = vunpack.c.h.b16 %v243
    %v1181 = vunpack.c.l.b16 %v244
    %v1182 = vunpack.c.h.b16 %v244
    %v1183 = vunpack.c.l.b16 %v245
    %v1184 = vunpack.c.h.b16 %v245
    %v1185 = vunpack.c.l.b16 %v246
    %v1186 = vunpack.c.h.b16 %v246
    %v1187 = vunpack.c.l.b16 %v247
    %v1188 = vunpack.c.h.b16 %v247
    %v1189 = vunpack.c.l.b16 %v248
    %v1190 = vunpack.c.h.b16 %v248
    %v1191 = vunpack.c.l.b16 %v249
    %v1192 = vunpack.c.h.b16 %v249
    %v1193 = vunpack.c.l.b16 %v250
    %v1194 = vunpack.c.h.b16 %v250
    %v1195 = vunpack.c.l.b16 %v251
    %v1196 = vunpack.c.h.b16 %v251
    %v1197 = vunpack.c.l.b16 %v252
    %v1198 = vunpack.c.h.b16 %v252
    %v1199 = vunpack.c.l.b16 %v253
    %v1200 = vunpack.c.h.b16 %v253
    %v1201 = vunpack.c.l.b16 %v254
    %v1202 = vunpack.c.h.b16 %v254
    %v1203 = vunpack.c.l.b16 %v255
    %v1204 = vunpack.c.h.b16 %v255
    %v1205 = vunpack.c.l.b16 %v256
    %v1206 = vunpack.c.h.b16 %v256
    %v1207 = vunpack.c.l.b16 %v257
    %v1208 = vunpack.c.h.b16 %v257
    %v1209 = vunpack.c.l.b16 %v258
    %v1210 = vunpack.c.h.b16 %v258
    %v1211 = vunpack.c.l.b16 %v259
    %v1212 = vunpack.c.h.b16 %v259
    %v1213 = vunpack.c.l.b16 %v260
    %v1214 = vunpack.c.h.b16 %v260
    %v1215 = vunpack.c.l.b16 %v261
    %v1216 = vunpack.c.h.b16 %v261
    %v1217 = vunpack.c.l.b16 %v262
    %v1218 = vunpack.c.h.b16 %v262
    %v1219 = vunpack.c.l.b16 %v263
    %v1220 = vunpack.c.h.b16 %v263
    %v1221 = vunpack.c.l.b16 %v264
    %v1222 = vunpack.c.h.b16 %v264
    %v1223 = vunpack.c.l.b16 %v265
    %v1224 = vunpack.c.h.b16 %v265
    %v1225 = vunpack.c.l.b16 %v266
    %v1226 = vunpack.c.h.b16 %v266
    %v1227 = vunpack.c.l.b16 %v267
    %v1228 = vunpack.c.h.b16 %v267
    %v1229 = vunpack.c.l.b16 %v268
    %v1230 = vunpack.c.h.b16 %v268
    %v1231 = vunpack.c.l.b16 %v269
    %v1232 = vunpack.c.h.b16 %v269
    %v1233 = vunpack.c.l.b16 %v270
    %v1234 = vunpack.c.h.b16 %v270
    %v1235 = vunpack.c.l.b16 %v271
    %v1236 = vunpack.c.h.b16 %v271
    %v1237 = vunpack.c.l.b16 %v272
    %v1238 = vunpack.c.h.b16 %v272
    %v1239 = vunpack.c.l.b16 %v273
    %v1240 = vunpack.c.h.b16 %v273
    %v1241 = vunpack.c.l.b16 %v274
    %v1242 = vunpack.c.h.b16 %v274
    %v1243 = vunpack.c.l.b16 %v275
    %v1244 = vunpack.c.h.b16 %v275
    %v1245 = vunpack.c.l.b16 %v276
    %v1246 = vunpack.c.h.b16 %v276
    %v1247 = vunpack.c.l.b16 %v277
    %v1248 = vunpack.c.h.b16 %v277
    %v1249 = vunpack.c.l.b16 %v278
    %v1250 = vunpack.c.h.b16 %v278
    %v1251 = vunpack.c.l.b16 %v279
    %v1252 = vunpack.c.h.b16 %v279
    %v1253 = vunpack.c.l.b16 %v280
    %v1254 = vunpack.c.h.b16 %v280
    %v1255 = vunpack.c.l.b16 %v281
    %v1256 = vunpack.c.h.b16 %v281
    %v1257 = vunpack.c.l.b16 %v282
    %v1258 = vunpack.c.h.b16 %v282
    %v1259 = vunpack.c.l.b16 %v283
    %v1260 = vunpack.c.h.b16 %v283
    %v1261 = vunpack.c.l.b16 %v284
    %v1262 = vunpack.c.h.b16 %v284
    %v1263 = vunpack.c.l.b16 %v285
    %v1264 = vunpack.c.h.b16 %v285
    %v1265 = vunpack.c.l.b16 %v286
    %v1266 = vunpack.c.h.b16 %v286
    %v1267 = vunpack.c.l.b16 %v287
    %v1268 = vunpack.c.h.b16 %v287
    %v1269 = vunpack.c.l.b16 %v288
    %v1270 = vunpack.c.h.b16 %v288
    %v1271 = vunpack.c.l.b16 %v289
    %v1272 = vunpack.c.h.b16 %v289
    %v1273 = vunpack.c.l.b16 %v290
    %v1274 = vunpack.c.h.b16 %v290
    %v1275 = vunpack.c.l.b16 %v291
    %v1276 = vunpack.c.h.b16 %v291
    %v1277 = vunpack.c.l.b16 %v292
    %v1278 = vunpack.c.h.b16 %v292
    %v1279 = vunpack.c.l.b16 %v293
    %v1280 = vunpack.c.h.b16 %v293
    %v1281 = vunpack.c.l.b16 %v294
    %v1282 = vunpack.c.h.b16 %v294
    %v1283 = vunpack.c.l.b16 %v295
    %v1284 = vunpack.c.h.b16 %v295
    %v1285 = vunpack.c.l.b16 %v296
    %v1286 = vunpack.c.h.b16 %v296
    %v1287 = vunpack.c.l.b16 %v297
    %v1288 = vunpack.c.h.b16 %v297
    %v1289 = vunpack.c.l.b16 %v298
    %v1290 = vunpack.c.h.b16 %v298
    %v1291 = vunpack.c.l.b16 %v299
    %v1292 = vunpack.c.h.b16 %v299
    %v1293 = vunpack.c.l.b16 %v300
    %v1294 = vunpack.c.h.b16 %v300
    %v1295 = vunpack.c.l.b16 %v301
    %v1296 = vunpack.c.h.b16 %v301
    %v1297 = vunpack.c.l.b16 %v302
    %v1298 = vunpack.c.h.b16 %v302
    %v1299 = vunpack.c.l.b16 %v303
    %v1300 = vunpack.c.h.b16 %v303
    %v1301 = vunpack.c.l.b16 %v304
    %v1302 = vunpack.c.h.b16 %v304
    %v1303 = vunpack.c.l.b16 %v305
    %v1304 = vunpack.c.h.b16 %v305
    %v1305 = vunpack.c.l.b16 %v306
    %v1306 = vunpack.c.h.b16 %v306
    %v1307 = vunpack.c.l.b16 %v307
    %v1308 = vunpack.c.h.b16 %v307
    %v1309 = vunpack.c.l.b16 %v308
    %v1310 = vunpack.c.h.b16 %v308
    %v1311 = vunpack.c.l.b16 %v309
    %v1312 = vunpack.c.h.b16 %v309
    %v1313 = vunpack.c.l.b16 %v310
    %v1314 = vunpack.c.h.b16 %v310
    %v1315 = vunpack.c.l.b16 %v311
    %v1316 = vunpack.c.h.b16 %v311
    %v1317 = vunpack.c.l.b16 %v312
    %v1318 = vunpack.c.h.b16 %v312
    %v1319 = vunpack.c.l.b16 %v313
    %v1320 = vunpack.c.h.b16 %v313
    %v1321 = vunpack.c.l.b16 %v314
    %v1322 = vunpack.c.h.b16 %v314
    %v1323 = vunpack.c.l.b16 %v315
    %v1324 = vunpack.c.h.b16 %v315
    %v1325 = vunpack.c.l.b16 %v316
    %v1326 = vunpack.c.h.b16 %v316
    %v1327 = vunpack.c.l.b16 %v317
    %v1328 = vunpack.c.h.b16 %v317
    %v1329 = vunpack.c.l.b16 %v318
    %v1330 = vunpack.c.h.b16 %v318
    %v1331 = vunpack.c.l.b16 %v319
    %v1332 = vunpack.c.h.b16 %v319
    %v1333 = vunpack.c.l.b16 %v320
    %v1334 = vunpack.c.h.b16 %v320
    %v1335 = vunpack.c.l.b16 %v321
    %v1336 = vunpack.c.h.b16 %v321
    %v1337 = vunpack.c.l.b16 %v322
    %v1338 = vunpack.c.h.b16 %v322
    %v1339 = vunpack.c.l.b16 %v323
    %v1340 = vunpack.c.h.b16 %v323
    %v1341 = vunpack.c.l.b16 %v324
    %v1342 = vunpack.c.h.b16 %v324
    %v1343 = vunpack.c.l.b16 %v325
    %v1344 = vunpack.c.h.b16 %v325
    %v1345 = vunpack.c.l.b16 %v326
    %v1346 = vunpack.c.h.b16 %v326
    %v1347 = vunpack.c.l.b16 %v327
    %v1348 = vunpack.c.h.b16 %v327
    %v1349 = vunpack.c.l.b16 %v328
    %v1350 = vunpack.c.h.b16 %v328
    %v1351 = vunpack.c.l.b16 %v329
    %v1352 = vunpack.c.h.b16 %v329
    %v1353 = vunpack.c.l.b16 %v330
    %v1354 = vunpack.c.h.b16 %v330
    %v1355 = vunpack.c.l.b16 %v331
    %v1356 = vunpack.c.h.b16 %v331
    %v1357 = vunpack.c.l.b16 %v332
    %v1358 = vunpack.c.h.b16 %v332
    %v1359 = vunpack.c.l.b16 %v333
    %v1360 = vunpack.c.h.b16 %v333
    %v1361 = vunpack.c.l.b16 %v334
    %v1362 = vunpack.c.h.b16 %v334
    %v1363 = vunpack.c.l.b16 %v335
    %v1364 = vunpack.c.h.b16 %v335
    %v1365 = vunpack.c.l.b16 %v336
    %v1366 = vunpack.c.h.b16 %v336
    %v1367 = vunpack.c.l.b16 %v337
    %v1368 = vunpack.c.h.b16 %v337
    %v1369 = vunpack.c.l.b16 %v338
    %v1370 = vunpack.c.h.b16 %v338
    %v1371 = vunpack.c.l.b16 %v339
    %v1372 = vunpack.c.h.b16 %v339
    %v1373 = vunpack.c.l.b16 %v340
    %v1374 = vunpack.c.h.b16 %v340
    %v1375 = vunpack.c.l.b16 %v341
    %v1376 = vunpack.c.h.b16 %v341
    %v1377 = vunpack.c.l.b16 %v342
    %v1378 = vunpack.c.h.b16 %v342
    %v1379 = vunpack.c.l.b16 %v343
    %v1380 = vunpack.c.h.b16 %v343
    %v1381 = vunpack.c.l.b16 %v344
    %v1382 = vunpack.c.h.b16 %v344
    %v1383 = vunpack.c.l.b16 %v345
    %v1384 = vunpack.c.h.b16 %v345
    %v1385 = vunpack.c.l.b16 %v346
    %v1386 = vunpack.c.h.b16 %v346
    %v1387 = vunpack.c.l.b16 %v347
    %v1388 = vunpack.c.h.b16 %v347
    %v1389 = vunpack.c.l.b16 %v348
    %v1390 = vunpack.c.h.b16 %v348
    %v1391 = vunpack.c.l.b16 %v349
    %v1392 = vunpack.c.h.b16 %v349
    %v1393 = vunpack.c.l.b16 %v350
    %v1394 = vunpack.c.h.b16 %v350
    %v1395 = vunpack.c.l.b16 %v351
    %v1396 = vunpack.c.h.b16 %v351
    %v1397 = vunpack.c.l.b16 %v352
    %v1398 = vunpack.c.h.b16 %v352
    %v1399 = vunpack.c.l.b16 %v353
    %v1400 = vunpack.c.h.b16 %v353
    %v1401 = vunpack.c.l.b16 %v354
    %v1402 = vunpack.c.h.b16 %v354
    %v1403 = vunpack.c.l.b16 %v355
    %v1404 = vunpack.c.h.b16 %v355
    %v1405 = vunpack.c.l.b16 %v356
    %v1406 = vunpack.c.h.b16 %v356
    %v1407 = vunpack.c.l.b16 %v357
    %v1408 = vunpack.c.h.b16 %v357
    %v1409 = vunpack.c.l.b16 %v358
    %v1410 = vunpack.c.h.b16 %v358
    %v1411 = vunpack.c.l.b16 %v359
    %v1412 = vunpack.c.h.b16 %v359
    %v1413 = vunpack.c.l.b16 %v360
    %v1414 = vunpack.c.h.b16 %v360
    %v1415 = vunpack.c.l.b16 %v361
    %v1416 = vunpack.c.h.b16 %v361
    %v1417 = vunpack.c.l.b16 %v362
    %v1418 = vunpack.c.h.b16 %v362
    %v1419 = vunpack.c.l.b16 %v363
    %v1420 = vunpack.c.h.b16 %v363
    %v1421 = vunpack.c.l.b16 %v364
    %v1422 = vunpack.c.h.b16 %v364
    %v1423 = vunpack.c.l.b16 %v365
    %v1424 = vunpack.c.h.b16 %v365
    %v1425 = vunpack.c.l.b16 %v366
    %v1426 = vunpack.c.h.b16 %v366
    %v1427 = vunpack.c.l.b16 %v367
    %v1428 = vunpack.c.h.b16 %v367
    %v1429 = vunpack.c.l.b16 %v368
    %v1430 = vunpack.c.h.b16 %v368
    %v1431 = vunpack.c.l.b16 %v369
    %v1432 = vunpack.c.h.b16 %v369
    %v1433 = vunpack.c.l.b16 %v370
    %v1434 = vunpack.c.h.b16 %v370
    %v1435 = vunpack.c.l.b16 %v371
    %v1436 = vunpack.c.h.b16 %v371
    %v1437 = vunpack.c.l.b16 %v372
    %v1438 = vunpack.c.h.b16 %v372
    %v1439 = vunpack.c.l.b16 %v373
    %v1440 = vunpack.c.h.b16 %v373
    %v1441 = vunpack.c.l.b16 %v374
    %v1442 = vunpack.c.h.b16 %v374
    %v1443 = vunpack.c.l.b16 %v375
    %v1444 = vunpack.c.h.b16 %v375
    %v1445 = vunpack.c.l.b16 %v376
    %v1446 = vunpack.c.h.b16 %v376
    %v1447 = vunpack.c.l.b16 %v377
    %v1448 = vunpack.c.h.b16 %v377
    %v1449 = vunpack.c.l.b16 %v378
    %v1450 = vunpack.c.h.b16 %v378
    %v1451 = vunpack.c.l.b16 %v379
    %v1452 = vunpack.c.h.b16 %v379
    %v1453 = vunpack.c.l.b16 %v380
    %v1454 = vunpack.c.h.b16 %v380
    %v1455 = vunpack.c.l.b16 %v381
    %v1456 = vunpack.c.h.b16 %v381
    %v1457 = vunpack.c.l.b16 %v382
    %v1458 = vunpack.c.h.b16 %v382
    %v1459 = vunpack.c.l.b16 %v383
    %v1460 = vunpack.c.h.b16 %v383
    %v1461 = vunpack.c.l.b16 %v384
    %v1462 = vunpack.c.h.b16 %v384
    %v1463 = vunpack.c.l.b16 %v385
    %v1464 = vunpack.c.h.b16 %v385
    %v1465 = vunpack.c.l.b16 %v386
    %v1466 = vunpack.c.h.b16 %v386
    %v1467 = vunpack.c.l.b16 %v387
    %v1468 = vunpack.c.h.b16 %v387
    %v1469 = vunpack.c.l.b16 %v388
    %v1470 = vunpack.c.h.b16 %v388
    %v1471 = vunpack.c.l.b16 %v389
    %v1472 = vunpack.c.h.b16 %v389
    %v1473 = vunpack.c.l.b16 %v390
    %v1474 = vunpack.c.h.b16 %v390
    %v1475 = vunpack.c.l.b16 %v391
    %v1476 = vunpack.c.h.b16 %v391
    %v1477 = vunpack.c.l.b16 %v392
    %v1478 = vunpack.c.h.b16 %v392
    %v1479 = vunpack.c.l.b16 %v393
    %v1480 = vunpack.c.h.b16 %v393
    %v1481 = vunpack.c.l.b16 %v394
    %v1482 = vunpack.c.h.b16 %v394
    %v1483 = vunpack.c.l.b16 %v395
    %v1484 = vunpack.c.h.b16 %v395
    %v1485 = vunpack.c.l.b16 %v396
    %v1486 = vunpack.c.h.b16 %v396
    %v1487 = vunpack.c.l.b16 %v397
    %v1488 = vunpack.c.h.b16 %v397
    %v1489 = vunpack.c.l.b16 %v398
    %v1490 = vunpack.c.h.b16 %v398
    %v1491 = vunpack.c.l.b16 %v399
    %v1492 = vunpack.c.h.b16 %v399
    %v1493 = vunpack.c.l.b16 %v400
    %v1494 = vunpack.c.h.b16 %v400
    %v1495 = vunpack.c.l.b16 %v401
    %v1496 = vunpack.c.h.b16 %v401
    %v1497 = vunpack.c.l.b16 %v402
    %v1498 = vunpack.c.h.b16 %v402
    %v1499 = vunpack.c.l.b16 %v403
    %v1500 = vunpack.c.h.b16 %v403
    %v1501 = vunpack.c.l.b16 %v404
    %v1502 = vunpack.c.h.b16 %v404
    %v1503 = vunpack.c.l.b16 %v405
    %v1504 = vunpack.c.h.b16 %v405
    %v1505 = vunpack.c.l.b16 %v406
    %v1506 = vunpack.c.h.b16 %v406
    %v1507 = vunpack.c.l.b16 %v407
    %v1508 = vunpack.c.h.b16 %v407
    %v1509 = vunpack.c.l.b16 %v408
    %v1510 = vunpack.c.h.b16 %v408
    %v1511 = vunpack.c.l.b16 %v409
    %v1512 = vunpack.c.h.b16 %v409
    %v1513 = vunpack.c.l.b16 %v410
    %v1514 = vunpack.c.h.b16 %v410
    %v1515 = vunpack.c.l.b16 %v411
    %v1516 = vunpack.c.h.b16 %v411
    %v1517 = vunpack.c.l.b16 %v412
    %v1518 = vunpack.c.h.b16 %v412
    %v1519 = vunpack.c.l.b16 %v413
    %v1520 = vunpack.c.h.b16 %v413
    %v1521 = vunpack.c.l.b16 %v414
    %v1522 = vunpack.c.h.b16 %v414
    %v1523 = vunpack.c.l.b16 %v415
    %v1524 = vunpack.c.h.b16 %v415
    %v1525 = vunpack.c.l.b16 %v416
    %v1526 = vunpack.c.h.b16 %v416
    %v1527 = vunpack.c.l.b16 %v417
    %v1528 = vunpack.c.h.b16 %v417
    %v1529 = vunpack.c.l.b16 %v418
    %v1530 = vunpack.c.h.b16 %v418
    %v1531 = vunpack.c.l.b16 %v419
    %v1532 = vunpack.c.h.b16 %v419
    %v1533 = vunpack.c.l.b16 %v420
    %v1534 = vunpack.c.h.b16 %v420
    %v1535 = vunpack.c.l.b16 %v421
    %v1536 = vunpack.c.h.b16 %v421
    %v1537 = vunpack.c.l.b16 %v422
    %v1538 = vunpack.c.h.b16 %v422
    %v1539 = vunpack.c.l.b16 %v423
    %v1540 = vunpack.c.h.b16 %v423
    %v1541 = vunpack.c.l.b16 %v424
    %v1542 = vunpack.c.h.b16 %v424
    %v1543 = vunpack.c.l.b16 %v425
    %v1544 = vunpack.c.h.b16 %v425
    %v1545 = vunpack.c.l.b16 %v426
    %v1546 = vunpack.c.h.b16 %v426
    %v1547 = vunpack.c.l.b16 %v427
    %v1548 = vunpack.c.h.b16 %v427
    %v1549 = vunpack.c.l.b16 %v428
    %v1550 = vunpack.c.h.b16 %v428
    %v1551 = vunpack.c.l.b16 %v429
    %v1552 = vunpack.c.h.b16 %v429
    %v1553 = vunpack.c.l.b16 %v430
    %v1554 = vunpack.c.h.b16 %v430
    %v1555 = vunpack.c.l.b16 %v431
    %v1556 = vunpack.c.h.b16 %v431
    %v1557 = vunpack.c.l.b16 %v432
    %v1558 = vunpack.c.h.b16 %v432
    %v1559 = vunpack.c.l.b16 %v433
    %v1560 = vunpack.c.h.b16 %v433
    %v1561 = vunpack.c.l.b16 %v434
    %v1562 = vunpack.c.h.b16 %v434
    %v1563 = vunpack.c.l.b16 %v435
    %v1564 = vunpack.c.h.b16 %v435
    %v1565 = vunpack.c.l.b16 %v436
    %v1566 = vunpack.c.h.b16 %v436
    %v1567 = vunpack.c.l.b16 %v437
    %v1568 = vunpack.c.h.b16 %v437
    %v1569 = vunpack.c.l.b16 %v438
    %v1570 = vunpack.c.h.b16 %v438
    %v1571 = vunpack.c.l.b16 %v439
    %v1572 = vunpack.c.h.b16 %v439
    %v1573 = vunpack.c.l.b16 %v440
    %v1574 = vunpack.c.h.b16 %v440
    %v1575 = vunpack.c.l.b16 %v441
    %v1576 = vunpack.c.h.b16 %v441
    %v1577 = vunpack.c.l.b16 %v442
    %v1578 = vunpack.c.h.b16 %v442
    %v1579 = vunpack.c.l.b16 %v443
    %v1580 = vunpack.c.h.b16 %v443
    %v1581 = vunpack.c.l.b16 %v444
    %v1582 = vunpack.c.h.b16 %v444
    %v1583 = vunpack.c.l.b16 %v445
    %v1584 = vunpack.c.h.b16 %v445
    %v1585 = vunpack.c.l.b16 %v446
    %v1586 = vunpack.c.h.b16 %v446
    %v1587 = vunpack.c.l.b16 %v447
    %v1588 = vunpack.c.h.b16 %v447
    %v1589 = vunpack.c.l.b16 %v448
    %v1590 = vunpack.c.h.b16 %v448
    %v1591 = vunpack.c.l.b16 %v449
    %v1592 = vunpack.c.h.b16 %v449
    %v1593 = vunpack.c.l.b16 %v450
    %v1594 = vunpack.c.h.b16 %v450
    %v1595 = vunpack.c.l.b16 %v451
    %v1596 = vunpack.c.h.b16 %v451
    %v1597 = vunpack.c.l.b16 %v452
    %v1598 = vunpack.c.h.b16 %v452
    %v1599 = vunpack.c.l.b16 %v453
    %v1600 = vunpack.c.h.b16 %v453
    %v1601 = vunpack.c.l.b16 %v454
    %v1602 = vunpack.c.h.b16 %v454
    %v1603 = vunpack.c.l.b16 %v455
    %v1604 = vunpack.c.h.b16 %v455
    %v1605 = vunpack.c.l.b16 %v456
    %v1606 = vunpack.c.h.b16 %v456
    %v1607 = vunpack.c.l.b16 %v457
    %v1608 = vunpack.c.h.b16 %v457
    %v1609 = vunpack.c.l.b16 %v458
    %v1610 = vunpack.c.h.b16 %v458
    %v1611 = vpack.c.b16 %v851, %v843
    %v1612 = vpack.c.b16 %v852, %v844
    %v1613 = vpack.c.b16 %v853, %v845
    %v1614 = vpack.c.b16 %v854, %v846
    %v1615 = vpack.c.b16 %v855, %v847
    %v1616 = vpack.c.b16 %v856, %v848
    %v1617 = vpack.c.b16 %v857, %v849
    %v1618 = vpack.c.b16 %v858, %v850
    %v1619 = vpack.c.b16 %v867, %v859
    %v1620 = vpack.c.b16 %v868, %v860
    %v1621 = vpack.c.b16 %v869, %v861
    %v1622 = vpack.c.b16 %v870, %v862
    %v1623 = vpack.c.b16 %v871, %v863
    %v1624 = vpack.c.b16 %v872, %v864
    %v1625 = vpack.c.b16 %v873, %v865
    %v1626 = vpack.c.b16 %v874, %v866
    %v1627 = vpack.c.b16 %v883, %v875
    %v1628 = vpack.c.b16 %v884, %v876
    %v1629 = vpack.c.b16 %v885, %v877
    %v1630 = vpack.c.b16 %v886, %v878
    %v1631 = vpack.c.b16 %v887, %v879
    %v1632 = vpack.c.b16 %v888, %v880
    %v1633 = vpack.c.b16 %v889, %v881
    %v1634 = vpack.c.b16 %v890, %v882
    %v1635 = vpack.c.b16 %v899, %v891
    %v1636 = vpack.c.b16 %v900, %v892
    %v1637 = vpack.c.b16 %v901, %v893
    %v1638 = vpack.c.b16 %v902, %v894
    %v1639 = vpack.c.b16 %v903, %v895
    %v1640 = vpack.c.b16 %v904, %v896
    %v1641 = vpack.c.b16 %v905, %v897
    %v1642 = vpack.c.b16 %v906, %v898
    %v1643 = vpack.c.b16 %v915, %v907
    %v1644 = vpack.c.b16 %v916, %v908
    %v1645 = vpack.c.b16 %v917, %v909
    %v1646 = vpack.c.b16 %v918, %v910
    %v1647 = vpack.c.b16 %v919, %v911
    %v1648 = vpack.c.b16 %v920, %v912
    %v1649 = vpack.c.b16 %v921, %v913
    %v1650 = vpack.c.b16 %v922, %v914
    %v1651 = vpack.c.b16 %v931, %v923
    %v1652 = vpack.c.b16 %v932, %v924
    %v1653 = vpack.c.b16 %v933, %v925
    %v1654 = vpack.c.b16 %v934, %v926
    %v1655 = vpack.c.b16 %v935, %v927
    %v1656 = vpack.c.b16 %v936, %v928
    %v1657 = vpack.c.b16 %v937, %v929
    %v1658 = vpack.c.b16 %v938, %v930
    %v1659 = vpack.c.b16 %v947, %v939
    %v1660 = vpack.c.b16 %v948, %v940
    %v1661 = vpack.c.b16 %v949, %v941
    %v1662 = vpack.c.b16 %v950, %v942
    %v1663 = vpack.c.b16 %v951, %v943
    %v1664 = vpack.c.b16 %v952, %v944
    %v1665 = vpack.c.b16 %v953, %v945
    %v1666 = vpack.c.b16 %v954, %v946
    %v1667 = vpack.c.b16 %v963, %v955
    %v1668 = vpack.c.b16 %v964, %v956
    %v1669 = vpack.c.b16 %v965, %v957
    %v1670 = vpack.c.b16 %v966, %v958
    %v1671 = vpack.c.b16 %v967, %v959
    %v1672 = vpack.c.b16 %v968, %v960
    %v1673 = vpack.c.b16 %v969, %v961
    %v1674 = vpack.c.b16 %v970, %v962
    %v1675 = vpack.c.b16 %v979, %v971
    %v1676 = vpack.c.b16 %v980, %v972
    %v1677 = vpack.c.b16 %v981, %v973
    %v1678 = vpack.c.b16 %v982, %v974
    %v1679 = vpack.c.b16 %v983, %v975
    %v1680 = vpack.c.b16 %v984, %v976
    %v1681 = vpack.c.b16 %v985, %v977
    %v1682 = vpack.c.b16 %v986, %v978
    %v1683 = vpack.c.b16 %v995, %v987
    %v1684 = vpack.c.b16 %v996, %v988
    %v1685 = vpack.c.b16 %v997, %v989
    %v1686 = vpack.c.b16 %v998, %v990
    %v1687 = vpack.c.b16 %v999, %v991
    %v1688 = vpack.c.b16 %v1000, %v992
    %v1689 = vpack.c.b16 %v1001, %v993
    %v1690 = vpack.c.b16 %v1002, %v994
    %v1691 = vpack.c.b16 %v1011, %v1003
    %v1692 = vpack.c.b16 %v1012, %v1004
    %v1693 = vpack.c.b16 %v1013, %v1005
    %v1694 = vpack.c.b16 %v1014, %v1006
    %v1695 = vpack.c.b16 %v1015, %v1007
    %v1696 = vpack.c.b16 %v1016, %v1008
    %v1697 = vpack.c.b16 %v1017, %v1009
    %v1698 = vpack.c.b16 %v1018, %v1010
    %v1699 = vpack.c.b16 %v1027, %v1019
    %v1700 = vpack.c.b16 %v1028, %v1020
    %v1701 = vpack.c.b16 %v1029, %v1021
    %v1702 = vpack.c.b16 %v1030, %v1022
    %v1703 = vpack.c.b16 %v1031, %v1023
    %v1704 = vpack.c.b16 %v1032, %v1024
    %v1705 = vpack.c.b16 %v1033, %v1025
    %v1706 = vpack.c.b16 %v1034, %v1026
    %v1707 = vpack.c.b16 %v1043, %v1035
    %v1708 = vpack.c.b16 %v1044, %v1036
    %v1709 = vpack.c.b16 %v1045, %v1037
    %v1710 = vpack.c.b16 %v1046, %v1038
    %v1711 = vpack.c.b16 %v1047, %v1039
    %v1712 = vpack.c.b16 %v1048, %v1040
    %v1713 = vpack.c.b16 %v1049, %v1041
    %v1714 = vpack.c.b16 %v1050, %v1042
    %v1715 = vpack.c.b16 %v1059, %v1051
    %v1716 = vpack.c.b16 %v1060, %v1052
    %v1717 = vpack.c.b16 %v1061, %v1053
    %v1718 = vpack.c.b16 %v1062, %v1054
    %v1719 = vpack.c.b16 %v1063, %v1055
    %v1720 = vpack.c.b16 %v1064, %v1056
    %v1721 = vpack.c.b16 %v1065, %v1057
    %v1722 = vpack.c.b16 %v1066, %v1058
    %v1723 = vpack.c.b16 %v1075, %v1067
    %v1724 = vpack.c.b16 %v1076, %v1068
    %v1725 = vpack.c.b16 %v1077, %v1069
    %v1726 = vpack.c.b16 %v1078, %v1070
    %v1727 = vpack.c.b16 %v1079, %v1071
    %v1728 = vpack.c.b16 %v1080, %v1072
    %v1729 = vpack.c.b16 %v1081, %v1073
    %v1730 = vpack.c.b16 %v1082, %v1074
    %v1731 = vpack.c.b16 %v1091, %v1083
    %v1732 = vpack.c.b16 %v1092, %v1084
    %v1733 = vpack.c.b16 %v1093, %v1085
    %v1734 = vpack.c.b16 %v1094, %v1086
    %v1735 = vpack.c.b16 %v1095, %v1087
    %v1736 = vpack.c.b16 %v1096, %v1088
    %v1737 = vpack.c.b16 %v1097, %v1089
    %v1738 = vpack.c.b16 %v1098, %v1090
    %v1739 = vpack.c.b16 %v1107, %v1099
    %v1740 = vpack.c.b16 %v1108, %v1100
    %v1741 = vpack.c.b16 %v1109, %v1101
    %v1742 = vpack.c.b16 %v1110, %v1102
    %v1743 = vpack.c.b16 %v1111, %v1103
    %v1744 = vpack.c.b16 %v1112, %v1104
    %v1745 = vpack.c.b16 %v1113, %v1105
    %v1746 = vpack.c.b16 %v1114, %v1106
    %v1747 = vpack.c.b16 %v1123, %v1115
    %v1748 = vpack.c.b16 %v1124, %v1116
    %v1749 = vpack.c.b16 %v1125, %v1117
    %v1750 = vpack.c.b16 %v1126, %v1118
    %v1751 = vpack.c.b16 %v1127, %v1119
    %v1752 = vpack.c.b16 %v1128, %v1120
    %v1753 = vpack.c.b16 %v1129, %v1121
    %v1754 = vpack.c.b16 %v1130, %v1122
    %v1755 = vpack.c.b16 %v1139, %v1131
    %v1756 = vpack.c.b16 %v1140, %v1132
    %v1757 = vpack.c.b16 %v1141, %v1133
    %v1758 = vpack.c.b16 %v1142, %v1134
    %v1759 = vpack.c.b16 %v1143, %v1135
    %v1760 = vpack.c.b16 %v1144, %v1136
    %v1761 = vpack.c.b16 %v1145, %v1137
    %v1762 = vpack.c.b16 %v1146, %v1138
    %v1763 = vpack.c.b16 %v1155, %v1147
    %v1764 = vpack.c.b16 %v1156, %v1148
    %v1765 = vpack.c.b16 %v1157, %v1149
    %v1766 = vpack.c.b16 %v1158, %v1150
    %v1767 = vpack.c.b16 %v1159, %v1151
    %v1768 = vpack.c.b16 %v1160, %v1152
    %v1769 = vpack.c.b16 %v1161, %v1153
    %v1770 = vpack.c.b16 %v1162, %v1154
    %v1771 = vpack.c.b16 %v1171, %v1163
    %v1772 = vpack.c.b16 %v1172, %v1164
    %v1773 = vpack.c.b16 %v1173, %v1165
    %v1774 = vpack.c.b16 %v1174, %v1166
    %v1775 = vpack.c.b16 %v1175, %v1167
    %v1776 = vpack.c.b16 %v1176, %v1168
    %v1777 = vpack.c.b16 %v1177, %v1169
    %v1778 = vpack.c.b16 %v1178, %v1170
    %v1779 = vpack.c.b16 %v1187, %v1179
    %v1780 = vpack.c.b16 %v1188, %v1180
    %v1781 = vpack.c.b16 %v1189, %v1181
    %v1782 = vpack.c.b16 %v1190, %v1182
    %v1783 = vpack.c.b16 %v1191, %v1183
    %v1784 = vpack.c.b16 %v1192, %v1184
    %v1785 = vpack.c.b16 %v1193, %v1185
    %v1786 = vpack.c.b16 %v1194, %v1186
    %v1787 = vpack.c.b16 %v1203, %v1195
    %v1788 = vpack.c.b16 %v1204, %v1196
    %v1789 = vpack.c.b16 %v1205, %v1197
    %v1790 = vpack.c.b16 %v1206, %v1198
    %v1791 = vpack.c.b16 %v1207, %v1199
    %v1792 = vpack.c.b16 %v1208, %v1200
    %v1793 = vpack.c.b16 %v1209, %v1201
    %v1794 = vpack.c.b16 %v1210, %v1202
    %v1795 = vpack.c.b16 %v1219, %v1211
    %v1796 = vpack.c.b16 %v1220, %v1212
    %v1797 = vpack.c.b16 %v1221, %v1213
    %v1798 = vpack.c.b16 %v1222, %v1214
    %v1799 = vpack.c.b16 %v1223, %v1215
    %v1800 = vpack.c.b16 %v1224, %v1216
    %v1801 = vpack.c.b16 %v1225, %v1217
    %v1802 = vpack.c.b16 %v1226, %v1218
    %v1803 = vpack.c.b16 %v1235, %v1227
    %v1804 = vpack.c.b16 %v1236, %v1228
    %v1805 = vpack.c.b16 %v1237, %v1229
    %v1806 = vpack.c.b16 %v1238, %v1230
    %v1807 = vpack.c.b16 %v1239, %v1231
    %v1808 = vpack.c.b16 %v1240, %v1232
    %v1809 = vpack.c.b16 %v1241, %v1233
    %v1810 = vpack.c.b16 %v1242, %v1234
    %v1811 = vpack.c.b16 %v1251, %v1243
    %v1812 = vpack.c.b16 %v1252, %v1244
    %v1813 = vpack.c.b16 %v1253, %v1245
    %v1814 = vpack.c.b16 %v1254, %v1246
    %v1815 = vpack.c.b16 %v1255, %v1247
    %v1816 = vpack.c.b16 %v1256, %v1248
    %v1817 = vpack.c.b16 %v1257, %v1249
    %v1818 = vpack.c.b16 %v1258, %v1250
    %v1819 = vpack.c.b16 %v1267, %v1259
    %v1820 = vpack.c.b16 %v1268, %v1260
    %v1821 = vpack.c.b16 %v1269, %v1261
    %v1822 = vpack.c.b16 %v1270, %v1262
    %v1823 = vpack.c.b16 %v1271, %v1263
    %v1824 = vpack.c.b16 %v1272, %v1264
    %v1825 = vpack.c.b16 %v1273, %v1265
    %v1826 = vpack.c.b16 %v1274, %v1266
    %v1827 = vpack.c.b16 %v1283, %v1275
    %v1828 = vpack.c.b16 %v1284, %v1276
    %v1829 = vpack.c.b16 %v1285, %v1277
    %v1830 = vpack.c.b16 %v1286, %v1278
    %v1831 = vpack.c.b16 %v1287, %v1279
    %v1832 = vpack.c.b16 %v1288, %v1280
    %v1833 = vpack.c.b16 %v1289, %v1281
    %v1834 = vpack.c.b16 %v1290, %v1282
    %v1835 = vpack.c.b16 %v1299, %v1291
    %v1836 = vpack.c.b16 %v1300, %v1292
    %v1837 = vpack.c.b16 %v1301, %v1293
    %v1838 = vpack.c.b16 %v1302, %v1294
    %v1839 = vpack.c.b16 %v1303, %v1295
    %v1840 = vpack.c.b16 %v1304, %v1296
    %v1841 = vpack.c.b16 %v1305, %v1297
    %v1842 = vpack.c.b16 %v1306, %v1298
    %v1843 = vpack.c.b16 %v1315, %v1307
    %v1844 = vpack.c.b16 %v1316, %v1308
    %v1845 = vpack.c.b16 %v1317, %v1309
    %v1846 = vpack.c.b16 %v1318, %v1310
    %v1847 = vpack.c.b16 %v1319, %v1311
    %v1848 = vpack.c.b16 %v1320, %v1312
    %v1849 = vpack.c.b16 %v1321, %v1313
    %v1850 = vpack.c.b16 %v1322, %v1314
    %v1851 = vpack.c.b16 %v1331, %v1323
    %v1852 = vpack.c.b16 %v1332, %v1324
    %v1853 = vpack.c.b16 %v1333, %v1325
    %v1854 = vpack.c.b16 %v1334, %v1326
    %v1855 = vpack.c.b16 %v1335, %v1327
    %v1856 = vpack.c.b16 %v1336, %v1328
    %v1857 = vpack.c.b16 %v1337, %v1329
    %v1858 = vpack.c.b16 %v1338, %v1330
    %v1859 = vpack.c.b16 %v1347, %v1339
    %v1860 = vpack.c.b16 %v1348, %v1340
    %v1861 = vpack.c.b16 %v1349, %v1341
    %v1862 = vpack.c.b16 %v1350, %v1342
    %v1863 = vpack.c.b16 %v1351, %v1343
    %v1864 = vpack.c.b16 %v1352, %v1344
    %v1865 = vpack.c.b16 %v1353, %v1345
    %v1866 = vpack.c.b16 %v1354, %v1346
    %v1867 = vpack.c.b16 %v1363, %v1355
    %v1868 = vpack.c.b16 %v1364, %v1356
    %v1869 = vpack.c.b16 %v1365, %v1357
    %v1870 = vpack.c.b16 %v1366, %v1358
    %v1871 = vpack.c.b16 %v1367, %v1359
    %v1872 = vpack.c.b16 %v1368, %v1360
    %v1873 = vpack.c.b16 %v1369, %v1361
    %v1874 = vpack.c.b16 %v1370, %v1362
    %v1875 = vpack.c.b16 %v1379, %v1371
    %v1876 = vpack.c.b16 %v1380, %v1372
    %v1877 = vpack.c.b16 %v1381, %v1373
    %v1878 = vpack.c.b16 %v1382, %v1374
    %v1879 = vpack.c.b16 %v1383, %v1375
    %v1880 = vpack.c.b16 %v1384, %v1376
    %v1881 = vpack.c.b16 %v1385, %v1377
    %v1882 = vpack.c.b16 %v1386, %v1378
    %v1883 = vpack.c.b16 %v1395, %v1387
    %v1884 = vpack.c.b16 %v1396, %v1388
    %v1885 = vpack.c.b16 %v1397, %v1389
    %v1886 = vpack.c.b16 %v1398, %v1390
    %v1887 = vpack.c.b16 %v1399, %v1391
    %v1888 = vpack.c.b16 %v1400, %v1392
    %v1889 = vpack.c.b16 %v1401, %v1393
    %v1890 = vpack.c.b16 %v1402, %v1394
    %v1891 = vpack.c.b16 %v1411, %v1403
    %v1892 = vpack.c.b16 %v1412, %v1404
    %v1893 = vpack.c.b16 %v1413, %v1405
    %v1894 = vpack.c.b16 %v1414, %v1406
    %v1895 = vpack.c.b16 %v1415, %v1407
    %v1896 = vpack.c.b16 %v1416, %v1408
    %v1897 = vpack.c.b16 %v1417, %v1409
    %v1898 = vpack.c.b16 %v1418, %v1410
    %v1899 = vpack.c.b16 %v1427, %v1419
    %v1900 = vpack.c.b16 %v1428, %v1420
    %v1901 = vpack.c.b16 %v1429, %v1421
    %v1902 = vpack.c.b16 %v1430, %v1422
    %v1903 = vpack.c.b16 %v1431, %v1423
    %v1904 = vpack.c.b16 %v1432, %v1424
    %v1905 = vpack.c.b16 %v1433, %v1425
    %v1906 = vpack.c.b16 %v1434, %v1426
    %v1907 = vpack.c.b16 %v1443, %v1435
    %v1908 = vpack.c.b16 %v1444, %v1436
    %v1909 = vpack.c.b16 %v1445, %v1437
    %v1910 = vpack.c.b16 %v1446, %v1438
    %v1911 = vpack.c.b16 %v1447, %v1439
    %v1912 = vpack.c.b16 %v1448, %v1440
    %v1913 = vpack.c.b16 %v1449, %v1441
    %v1914 = vpack.c.b16 %v1450, %v1442
    %v1915 = vpack.c.b16 %v1459, %v1451
    %v1916 = vpack.c.b16 %v1460, %v1452
    %v1917 = vpack.c.b16 %v1461, %v1453
    %v1918 = vpack.c.b16 %v1462, %v1454
    %v1919 = vpack.c.b16 %v1463, %v1455
    %v1920 = vpack.c.b16 %v1464, %v1456
    %v1921 = vpack.c.b16 %v1465, %v1457
    %v1922 = vpack.c.b16 %v1466, %v1458
    %v1923 = vpack.c.b16 %v1475, %v1467
    %v1924 = vpack.c.b16 %v1476, %v1468
    %v1925 = vpack.c.b16 %v1477, %v1469
    %v1926 = vpack.c.b16 %v1478, %v1470
    %v1927 = vpack.c.b16 %v1479, %v1471
    %v1928 = vpack.c.b16 %v1480, %v1472
    %v1929 = vpack.c.b16 %v1481, %v1473
    %v1930 = vpack.c.b16 %v1482, %v1474
    %v1931 = vpack.c.b16 %v1491, %v1483
    %v1932 = vpack.c.b16 %v1492, %v1484
    %v1933 = vpack.c.b16 %v1493, %v1485
    %v1934 = vpack.c.b16 %v1494, %v1486
    %v1935 = vpack.c.b16 %v1495, %v1487
    %v1936 = vpack.c.b16 %v1496, %v1488
    %v1937 = vpack.c.b16 %v1497, %v1489
    %v1938 = vpack.c.b16 %v1498, %v1490
    %v1939 = vpack.c.b16 %v1507, %v1499
    %v1940 = vpack.c.b16 %v1508, %v1500
    %v1941 = vpack.c.b16 %v1509, %v1501
    %v1942 = vpack.c.b16 %v1510, %v1502
    %v1943 = vpack.c.b16 %v1511, %v1503
    %v1944 = vpack.c.b16 %v1512, %v1504
    %v1945 = vpack.c.b16 %v1513, %v1505
    %v1946 = vpack.c.b16 %v1514, %v1506
    %v1947 = vpack.c.b16 %v1523, %v1515
    %v1948 = vpack.c.b16 %v1524, %v1516
    %v1949 = vpack.c.b16 %v1525, %v1517
    %v1950 = vpack.c.b16 %v1526, %v1518
    %v1951 = vpack.c.b16 %v1527, %v1519
    %v1952 = vpack.c.b16 %v1528, %v1520
    %v1953 = vpack.c.b16 %v1529, %v1521
    %v1954 = vpack.c.b16 %v1530, %v1522
    %v1955 = vpack.c.b16 %v1539, %v1531
    %v1956 = vpack.c.b16 %v1540, %v1532
    %v1957 = vpack.c.b16 %v1541, %v1533
    %v1958 = vpack.c.b16 %v1542, %v1534
    %v1959 = vpack.c.b16 %v1543, %v1535
    %v1960 = vpack.c.b16 %v1544, %v1536
    %v1961 = vpack.c.b16 %v1545, %v1537
    %v1962 = vpack.c.b16 %v1546, %v1538
    %v1963 = vpack.c.b16 %v1555, %v1547
    %v1964 = vpack.c.b16 %v1556, %v1548
    %v1965 = vpack.c.b16 %v1557, %v1549
    %v1966 = vpack.c.b16 %v1558, %v1550
    %v1967 = vpack.c.b16 %v1559, %v1551
    %v1968 = vpack.c.b16 %v1560, %v1552
    %v1969 = vpack.c.b16 %v1561, %v1553
    %v1970 = vpack.c.b16 %v1562, %v1554
    %v1971 = vpack.c.b16 %v1571, %v1563
    %v1972 = vpack.c.b16 %v1572, %v1564
    %v1973 = vpack.c.b16 %v1573, %v1565
    %v1974 = vpack.c.b16 %v1574, %v1566
    %v1975 = vpack.c.b16 %v1575, %v1567
    %v1976 = vpack.c.b16 %v1576, %v1568
    %v1977 = vpack.c.b16 %v1577, %v1569
    %v1978 = vpack.c.b16 %v1578, %v1570
    %v1979 = vpack.c.b16 %v1587, %v1579
    %v1980 = vpack.c.b16 %v1588, %v1580
    %v1981 = vpack.c.b16 %v1589, %v1581
    %v1982 = vpack.c.b16 %v1590, %v1582
    %v1983 = vpack.c.b16 %v1591, %v1583
    %v1984 = vpack.c.b16 %v1592, %v1584
    %v1985 = vpack.c.b16 %v1593, %v1585
    %v1986 = vpack.c.b16 %v1594, %v1586
    %v1987 = vpack.c.b16 %v1603, %v1595
    %v1988 = vpack.c.b16 %v1604, %v1596
    %v1989 = vpack.c.b16 %v1605, %v1597
    %v1990 = vpack.c.b16 %v1606, %v1598
    %v1991 = vpack.c.b16 %v1607, %v1599
    %v1992 = vpack.c.b16 %v1608, %v1600
    %v1993 = vpack.c.b16 %v1609, %v1601
    %v1994 = vpack.c.b16 %v1610, %v1602
    %2379 = vmatprep.subr.bf16.mxu0 %v1612
    %2380 = vmatpush1.bf16.msra.mxu0 %v1611
    %2381 = vmatprep.subr.bf16.mxu0 %v1620
    %2382 = vmatpush1.bf16.msra.mxu0 %v1619
    %2383 = vmatprep.subr.bf16.mxu0 %v1628
    %2384 = vmatpush1.bf16.msra.mxu0 %v1627
    %2385 = vmatprep.subr.bf16.mxu0 %v1636
    %2386 = vmatpush1.bf16.msra.mxu0 %v1635
    %2387 = vmatprep.subr.bf16.mxu0 %v1644
    %2388 = vmatpush1.bf16.msra.mxu0 %v1643
    %2389 = vmatprep.subr.bf16.mxu0 %v1652
    %2390 = vmatpush1.bf16.msra.mxu0 %v1651
    %2391 = vmatprep.subr.bf16.mxu0 %v1660
    %2392 = vmatpush1.bf16.msra.mxu0 %v1659
    %2393 = vmatprep.subr.bf16.mxu0 %v1668
    %2394 = vmatpush1.bf16.msra.mxu0 %v1667
    %2395 = vmatprep.subr.bf16.mxu0 %v1676
    %2396 = vmatpush1.bf16.msra.mxu0 %v1675
    %2397 = vmatprep.subr.bf16.mxu0 %v1684
    %2398 = vmatpush1.bf16.msra.mxu0 %v1683
    %2399 = vmatprep.subr.bf16.mxu0 %v1692
    %2400 = vmatpush1.bf16.msra.mxu0 %v1691
    %2401 = vmatprep.subr.bf16.mxu0 %v1700
    %2402 = vmatpush1.bf16.msra.mxu0 %v1699
    %2403 = vmatprep.subr.bf16.mxu0 %v1708
    %2404 = vmatpush1.bf16.msra.mxu0 %v1707
    %2405 = vmatprep.subr.bf16.mxu0 %v1716
    %2406 = vmatpush1.bf16.msra.mxu0 %v1715
    %2407 = vmatprep.subr.bf16.mxu0 %v1724
    %2408 = vmatpush1.bf16.msra.mxu0 %v1723
    %2409 = vmatprep.subr.bf16.mxu0 %v1732
    %2410 = vmatpush1.bf16.msra.mxu0 %v1731
    %2411 = vmatprep.mubr.bf16.mxu0 %v70
    %2412 = vmatmul.mubr.bf16.gmra.mrb[0].mxu0 %v69
    %v2413 = vpop.f32.mrb[0].mxu0
    %v2414 = vadd.f32 0.0, %v2413
    %v2415 = vpop.f32.mrb[0].mxu0
    %v2416 = vadd.f32 0.0, %v2415
    %v2417 = vpop.f32.mrb[0].mxu0
    %v2418 = vpop.f32.mrb[0].mxu0
    %2419 = vdwg.mxu0
    %2420 = vmatprep.subr.bf16.mxu0 %v1740
    %2421 = vmatpush1.bf16.msra.mxu0 %v1739
    %2422 = vmatprep.subr.bf16.mxu0 %v1748
    %2423 = vmatpush1.bf16.msra.mxu0 %v1747
    %2424 = vmatprep.subr.bf16.mxu0 %v1756
    %2425 = vmatpush1.bf16.msra.mxu0 %v1755
    %2426 = vmatprep.subr.bf16.mxu0 %v1764
    %2427 = vmatpush1.bf16.msra.mxu0 %v1763
    %2428 = vmatprep.subr.bf16.mxu0 %v1772
    %2429 = vmatpush1.bf16.msra.mxu0 %v1771
    %2430 = vmatprep.subr.bf16.mxu0 %v1780
    %2431 = vmatpush1.bf16.msra.mxu0 %v1779
    %2432 = vmatprep.subr.bf16.mxu0 %v1788
    %2433 = vmatpush1.bf16.msra.mxu0 %v1787
    %2434 = vmatprep.subr.bf16.mxu0 %v1796
    %2435 = vmatpush1.bf16.msra.mxu0 %v1795
    %2436 = vmatprep.subr.bf16.mxu0 %v1804
    %2437 = vmatpush1.bf16.msra.mxu0 %v1803
    %2438 = vmatprep.subr.bf16.mxu0 %v1812
    %2439 = vmatpush1.bf16.msra.mxu0 %v1811
    %2440 = vmatprep.subr.bf16.mxu0 %v1820
    %2441 = vmatpush1.bf16.msra.mxu0 %v1819
    %2442 = vmatprep.subr.bf16.mxu0 %v1828
    %2443 = vmatpush1.bf16.msra.mxu0 %v1827
    %2444 = vmatprep.subr.bf16.mxu0 %v1836
    %2445 = vmatpush1.bf16.msra.mxu0 %v1835
    %2446 = vmatprep.subr.bf16.mxu0 %v1844
    %2447 = vmatpush1.bf16.msra.mxu0 %v1843
    %2448 = vmatprep.subr.bf16.mxu0 %v1852
    %2449 = vmatpush1.bf16.msra.mxu0 %v1851
    %2450 = vmatprep.subr.bf16.mxu0 %v1860
    %2451 = vmatpush1.bf16.msra.mxu0 %v1859
    %2452 = vmatprep.mubr.bf16.mxu0 %v72
    %2453 = vmatmul.mubr.bf16.gmra.mrb[0].mxu0 %v71
    %v2454 = vpop.f32.mrb[0].mxu0
    %v2455 = vadd.f32 %v2414, %v2454
    %v2456 = vpop.f32.mrb[0].mxu0
    %v2457 = vadd.f32 %v2416, %v2456
    %v2458 = vpop.f32.mrb[0].mxu0
    %v2459 = vpop.f32.mrb[0].mxu0
    %2460 = vdwg.mxu0
    %2461 = vmatprep.subr.bf16.mxu0 %v1868
    %2462 = vmatpush1.bf16.msra.mxu0 %v1867
    %2463 = vmatprep.subr.bf16.mxu0 %v1876
    %2464 = vmatpush1.bf16.msra.mxu0 %v1875
    %2465 = vmatprep.subr.bf16.mxu0 %v1884
    %2466 = vmatpush1.bf16.msra.mxu0 %v1883
    %2467 = vmatprep.subr.bf16.mxu0 %v1892
    %2468 = vmatpush1.bf16.msra.mxu0 %v1891
    %2469 = vmatprep.subr.bf16.mxu0 %v1900
    %2470 = vmatpush1.bf16.msra.mxu0 %v1899
    %2471 = vmatprep.subr.bf16.mxu0 %v1908
    %2472 = vmatpush1.bf16.msra.mxu0 %v1907
    %2473 = vmatprep.subr.bf16.mxu0 %v1916
    %2474 = vmatpush1.bf16.msra.mxu0 %v1915
    %2475 = vmatprep.subr.bf16.mxu0 %v1924
    %2476 = vmatpush1.bf16.msra.mxu0 %v1923
    %2477 = vmatprep.subr.bf16.mxu0 %v1932
    %2478 = vmatpush1.bf16.msra.mxu0 %v1931
    %2479 = vmatprep.subr.bf16.mxu0 %v1940
    %2480 = vmatpush1.bf16.msra.mxu0 %v1939
    %2481 = vmatprep.subr.bf16.mxu0 %v1948
    %2482 = vmatpush1.bf16.msra.mxu0 %v1947
    %2483 = vmatprep.subr.bf16.mxu0 %v1956
    %2484 = vmatpush1.bf16.msra.mxu0 %v1955
    %2485 = vmatprep.subr.bf16.mxu0 %v1964
    %2486 = vmatpush1.bf16.msra.mxu0 %v1963
    %2487 = vmatprep.subr.bf16.mxu0 %v1972
    %2488 = vmatpush1.bf16.msra.mxu0 %v1971
    %2489 = vmatprep.subr.bf16.mxu0 %v1980
    %2490 = vmatpush1.bf16.msra.mxu0 %v1979
    %2491 = vmatprep.subr.bf16.mxu0 %v1988
    %2492 = vmatpush1.bf16.msra.mxu0 %v1987
    %2493 = vmatprep.mubr.bf16.mxu0 %v74
    %2494 = vmatmul.mubr.bf16.gmra.mrb[0].mxu0 %v73
    %v2495 = vpop.f32.mrb[0].mxu0
    %v2496 = vadd.f32 %v2455, %v2495
    %v2497 = vpop.f32.mrb[0].mxu0
    %v2498 = vadd.f32 %v2457, %v2497
    %v2499 = vpop.f32.mrb[0].mxu0
    %v2500 = vpop.f32.mrb[0].mxu0
    %2501 = vdwg.mxu0
    %2502 = vmatprep.subr.bf16.mxu0 %v1614
    %2503 = vmatpush1.bf16.msra.mxu0 %v1613
    %2504 = vmatprep.subr.bf16.mxu0 %v1622
    %2505 = vmatpush1.bf16.msra.mxu0 %v1621
    %2506 = vmatprep.subr.bf16.mxu0 %v1630
    %2507 = vmatpush1.bf16.msra.mxu0 %v1629
    %2508 = vmatprep.subr.bf16.mxu0 %v1638
    %2509 = vmatpush1.bf16.msra.mxu0 %v1637
    %2510 = vmatprep.subr.bf16.mxu0 %v1646
    %2511 = vmatpush1.bf16.msra.mxu0 %v1645
    %2512 = vmatprep.subr.bf16.mxu0 %v1654
    %2513 = vmatpush1.bf16.msra.mxu0 %v1653
    %2514 = vmatprep.subr.bf16.mxu0 %v1662
    %2515 = vmatpush1.bf16.msra.mxu0 %v1661
    %2516 = vmatprep.subr.bf16.mxu0 %v1670
    %2517 = vmatpush1.bf16.msra.mxu0 %v1669
    %2518 = vmatprep.subr.bf16.mxu0 %v1678
    %2519 = vmatpush1.bf16.msra.mxu0 %v1677
    %2520 = vmatprep.subr.bf16.mxu0 %v1686
    %2521 = vmatpush1.bf16.msra.mxu0 %v1685
    %2522 = vmatprep.subr.bf16.mxu0 %v1694
    %2523 = vmatpush1.bf16.msra.mxu0 %v1693
    %2524 = vmatprep.subr.bf16.mxu0 %v1702
    %2525 = vmatpush1.bf16.msra.mxu0 %v1701
    %2526 = vmatprep.subr.bf16.mxu0 %v1710
    %2527 = vmatpush1.bf16.msra.mxu0 %v1709
    %2528 = vmatprep.subr.bf16.mxu0 %v1718
    %2529 = vmatpush1.bf16.msra.mxu0 %v1717
    %2530 = vmatprep.subr.bf16.mxu0 %v1726
    %2531 = vmatpush1.bf16.msra.mxu0 %v1725
    %2532 = vmatprep.subr.bf16.mxu0 %v1734
    %2533 = vmatpush1.bf16.msra.mxu0 %v1733
    %2534 = vmatprep.mubr.bf16.mxu0 %v70
    %2535 = vmatmul.mubr.bf16.gmra.mrb[0].mxu0 %v69
    %v2536 = vpop.f32.mrb[0].mxu0
    %v2537 = vadd.f32 0.0, %v2536
    %v2538 = vpop.f32.mrb[0].mxu0
    %v2539 = vadd.f32 0.0, %v2538
    %v2540 = vpop.f32.mrb[0].mxu0
    %v2541 = vpop.f32.mrb[0].mxu0
    %2542 = vdwg.mxu0
    %2543 = vmatprep.subr.bf16.mxu0 %v1742
    %2544 = vmatpush1.bf16.msra.mxu0 %v1741
    %2545 = vmatprep.subr.bf16.mxu0 %v1750
    %2546 = vmatpush1.bf16.msra.mxu0 %v1749
    %2547 = vmatprep.subr.bf16.mxu0 %v1758
    %2548 = vmatpush1.bf16.msra.mxu0 %v1757
    %2549 = vmatprep.subr.bf16.mxu0 %v1766
    %2550 = vmatpush1.bf16.msra.mxu0 %v1765
    %2551 = vmatprep.subr.bf16.mxu0 %v1774
    %2552 = vmatpush1.bf16.msra.mxu0 %v1773
    %2553 = vmatprep.subr.bf16.mxu0 %v1782
    %2554 = vmatpush1.bf16.msra.mxu0 %v1781
    %2555 = vmatprep.subr.bf16.mxu0 %v1790
    %2556 = vmatpush1.bf16.msra.mxu0 %v1789
    %2557 = vmatprep.subr.bf16.mxu0 %v1798
    %2558 = vmatpush1.bf16.msra.mxu0 %v1797
    %2559 = vmatprep.subr.bf16.mxu0 %v1806
    %2560 = vmatpush1.bf16.msra.mxu0 %v1805
    %2561 = vmatprep.subr.bf16.mxu0 %v1814
    %2562 = vmatpush1.bf16.msra.mxu0 %v1813
    %2563 = vmatprep.subr.bf16.mxu0 %v1822
    %2564 = vmatpush1.bf16.msra.mxu0 %v1821
    %2565 = vmatprep.subr.bf16.mxu0 %v1830
    %2566 = vmatpush1.bf16.msra.mxu0 %v1829
    %2567 = vmatprep.subr.bf16.mxu0 %v1838
    %2568 = vmatpush1.bf16.msra.mxu0 %v1837
    %2569 = vmatprep.subr.bf16.mxu0 %v1846
    %2570 = vmatpush1.bf16.msra.mxu0 %v1845
    %2571 = vmatprep.subr.bf16.mxu0 %v1854
    %2572 = vmatpush1.bf16.msra.mxu0 %v1853
    %2573 = vmatprep.subr.bf16.mxu0 %v1862
    %2574 = vmatpush1.bf16.msra.mxu0 %v1861
    %2575 = vmatprep.mubr.bf16.mxu0 %v72
    %2576 = vmatmul.mubr.bf16.gmra.mrb[0].mxu0 %v71
    %v2577 = vpop.f32.mrb[0].mxu0
    %v2578 = vadd.f32 %v2537, %v2577
    %v2579 = vpop.f32.mrb[0].mxu0
    %v2580 = vadd.f32 %v2539, %v2579
    %v2581 = vpop.f32.mrb[0].mxu0
    %v2582 = vpop.f32.mrb[0].mxu0
    %2583 = vdwg.mxu0
    %2584 = vmatprep.subr.bf16.mxu0 %v1870
    %2585 = vmatpush1.bf16.msra.mxu0 %v1869
    %2586 = vmatprep.subr.bf16.mxu0 %v1878
    %2587 = vmatpush1.bf16.msra.mxu0 %v1877
    %2588 = vmatprep.subr.bf16.mxu0 %v1886
    %2589 = vmatpush1.bf16.msra.mxu0 %v1885
    %2590 = vmatprep.subr.bf16.mxu0 %v1894
    %2591 = vmatpush1.bf16.msra.mxu0 %v1893
    %2592 = vmatprep.subr.bf16.mxu0 %v1902
    %2593 = vmatpush1.bf16.msra.mxu0 %v1901
    %2594 = vmatprep.subr.bf16.mxu0 %v1910
    %2595 = vmatpush1.bf16.msra.mxu0 %v1909
    %2596 = vmatprep.subr.bf16.mxu0 %v1918
    %2597 = vmatpush1.bf16.msra.mxu0 %v1917
    %2598 = vmatprep.subr.bf16.mxu0 %v1926
    %2599 = vmatpush1.bf16.msra.mxu0 %v1925
    %2600 = vmatprep.subr.bf16.mxu0 %v1934
    %2601 = vmatpush1.bf16.msra.mxu0 %v1933
    %2602 = vmatprep.subr.bf16.mxu0 %v1942
    %2603 = vmatpush1.bf16.msra.mxu0 %v1941
    %2604 = vmatprep.subr.bf16.mxu0 %v1950
    %2605 = vmatpush1.bf16.msra.mxu0 %v1949
    %2606 = vmatprep.subr.bf16.mxu0 %v1958
    %2607 = vmatpush1.bf16.msra.mxu0 %v1957
    %2608 = vmatprep.subr.bf16.mxu0 %v1966
    %2609 = vmatpush1.bf16.msra.mxu0 %v1965
    %2610 = vmatprep.subr.bf16.mxu0 %v1974
    %2611 = vmatpush1.bf16.msra.mxu0 %v1973
    %2612 = vmatprep.subr.bf16.mxu0 %v1982
    %2613 = vmatpush1.bf16.msra.mxu0 %v1981
    %2614 = vmatprep.subr.bf16.mxu0 %v1990
    %2615 = vmatpush1.bf16.msra.mxu0 %v1989
    %2616 = vmatprep.mubr.bf16.mxu0 %v74
    %2617 = vmatmul.mubr.bf16.gmra.mrb[0].mxu0 %v73
    %v2618 = vpop.f32.mrb[0].mxu0
    %v2619 = vadd.f32 %v2578, %v2618
    %v2620 = vpop.f32.mrb[0].mxu0
    %v2621 = vadd.f32 %v2580, %v2620
    %v2622 = vpop.f32.mrb[0].mxu0
    %v2623 = vpop.f32.mrb[0].mxu0
    %2624 = vdwg.mxu0
    %2625 = vmatprep.subr.bf16.mxu0 %v1616
    %2626 = vmatpush1.bf16.msra.mxu0 %v1615
    %2627 = vmatprep.subr.bf16.mxu0 %v1624
    %2628 = vmatpush1.bf16.msra.mxu0 %v1623
    %2629 = vmatprep.subr.bf16.mxu0 %v1632
    %2630 = vmatpush1.bf16.msra.mxu0 %v1631
    %2631 = vmatprep.subr.bf16.mxu0 %v1640
    %2632 = vmatpush1.bf16.msra.mxu0 %v1639
    %2633 = vmatprep.subr.bf16.mxu0 %v1648
    %2634 = vmatpush1.bf16.msra.mxu0 %v1647
    %2635 = vmatprep.subr.bf16.mxu0 %v1656
    %2636 = vmatpush1.bf16.msra.mxu0 %v1655
    %2637 = vmatprep.subr.bf16.mxu0 %v1664
    %2638 = vmatpush1.bf16.msra.mxu0 %v1663
    %2639 = vmatprep.subr.bf16.mxu0 %v1672
    %2640 = vmatpush1.bf16.msra.mxu0 %v1671
    %2641 = vmatprep.subr.bf16.mxu0 %v1680
    %2642 = vmatpush1.bf16.msra.mxu0 %v1679
    %2643 = vmatprep.subr.bf16.mxu0 %v1688
    %2644 = vmatpush1.bf16.msra.mxu0 %v1687
    %2645 = vmatprep.subr.bf16.mxu0 %v1696
    %2646 = vmatpush1.bf16.msra.mxu0 %v1695
    %2647 = vmatprep.subr.bf16.mxu0 %v1704
    %2648 = vmatpush1.bf16.msra.mxu0 %v1703
    %2649 = vmatprep.subr.bf16.mxu0 %v1712
    %2650 = vmatpush1.bf16.msra.mxu0 %v1711
    %2651 = vmatprep.subr.bf16.mxu0 %v1720
    %2652 = vmatpush1.bf16.msra.mxu0 %v1719
    %2653 = vmatprep.subr.bf16.mxu0 %v1728
    %2654 = vmatpush1.bf16.msra.mxu0 %v1727
    %2655 = vmatprep.subr.bf16.mxu0 %v1736
    %2656 = vmatpush1.bf16.msra.mxu0 %v1735
    %2657 = vmatprep.mubr.bf16.mxu0 %v70
    %2658 = vmatmul.mubr.bf16.gmra.mrb[0].mxu0 %v69
    %v2659 = vpop.f32.mrb[0].mxu0
    %v2660 = vadd.f32 0.0, %v2659
    %v2661 = vpop.f32.mrb[0].mxu0
    %v2662 = vadd.f32 0.0, %v2661
    %v2663 = vpop.f32.mrb[0].mxu0
    %v2664 = vpop.f32.mrb[0].mxu0
    %2665 = vdwg.mxu0
    %2666 = vmatprep.subr.bf16.mxu0 %v1744
    %2667 = vmatpush1.bf16.msra.mxu0 %v1743
    %2668 = vmatprep.subr.bf16.mxu0 %v1752
    %2669 = vmatpush1.bf16.msra.mxu0 %v1751
    %2670 = vmatprep.subr.bf16.mxu0 %v1760
    %2671 = vmatpush1.bf16.msra.mxu0 %v1759
    %2672 = vmatprep.subr.bf16.mxu0 %v1768
    %2673 = vmatpush1.bf16.msra.mxu0 %v1767
    %2674 = vmatprep.subr.bf16.mxu0 %v1776
    %2675 = vmatpush1.bf16.msra.mxu0 %v1775
    %2676 = vmatprep.subr.bf16.mxu0 %v1784
    %2677 = vmatpush1.bf16.msra.mxu0 %v1783
    %2678 = vmatprep.subr.bf16.mxu0 %v1792
    %2679 = vmatpush1.bf16.msra.mxu0 %v1791
    %2680 = vmatprep.subr.bf16.mxu0 %v1800
    %2681 = vmatpush1.bf16.msra.mxu0 %v1799
    %2682 = vmatprep.subr.bf16.mxu0 %v1808
    %2683 = vmatpush1.bf16.msra.mxu0 %v1807
    %2684 = vmatprep.subr.bf16.mxu0 %v1816
    %2685 = vmatpush1.bf16.msra.mxu0 %v1815
    %2686 = vmatprep.subr.bf16.mxu0 %v1824
    %2687 = vmatpush1.bf16.msra.mxu0 %v1823
    %2688 = vmatprep.subr.bf16.mxu0 %v1832
    %2689 = vmatpush1.bf16.msra.mxu0 %v1831
    %2690 = vmatprep.subr.bf16.mxu0 %v1840
    %2691 = vmatpush1.bf16.msra.mxu0 %v1839
    %2692 = vmatprep.subr.bf16.mxu0 %v1848
    %2693 = vmatpush1.bf16.msra.mxu0 %v1847
    %2694 = vmatprep.subr.bf16.mxu0 %v1856
    %2695 = vmatpush1.bf16.msra.mxu0 %v1855
    %2696 = vmatprep.subr.bf16.mxu0 %v1864
    %2697 = vmatpush1.bf16.msra.mxu0 %v1863
    %2698 = vmatprep.mubr.bf16.mxu0 %v72
    %2699 = vmatmul.mubr.bf16.gmra.mrb[0].mxu0 %v71
    %v2700 = vpop.f32.mrb[0].mxu0
    %v2701 = vadd.f32 %v2660, %v2700
    %v2702 = vpop.f32.mrb[0].mxu0
    %v2703 = vadd.f32 %v2662, %v2702
    %v2704 = vpop.f32.mrb[0].mxu0
    %v2705 = vpop.f32.mrb[0].mxu0
    %2706 = vdwg.mxu0
    %2707 = vmatprep.subr.bf16.mxu0 %v1872
    %2708 = vmatpush1.bf16.msra.mxu0 %v1871
    %2709 = vmatprep.subr.bf16.mxu0 %v1880
    %2710 = vmatpush1.bf16.msra.mxu0 %v1879
    %2711 = vmatprep.subr.bf16.mxu0 %v1888
    %2712 = vmatpush1.bf16.msra.mxu0 %v1887
    %2713 = vmatprep.subr.bf16.mxu0 %v1896
    %2714 = vmatpush1.bf16.msra.mxu0 %v1895
    %2715 = vmatprep.subr.bf16.mxu0 %v1904
    %2716 = vmatpush1.bf16.msra.mxu0 %v1903
    %2717 = vmatprep.subr.bf16.mxu0 %v1912
    %2718 = vmatpush1.bf16.msra.mxu0 %v1911
    %2719 = vmatprep.subr.bf16.mxu0 %v1920
    %2720 = vmatpush1.bf16.msra.mxu0 %v1919
    %2721 = vmatprep.subr.bf16.mxu0 %v1928
    %2722 = vmatpush1.bf16.msra.mxu0 %v1927
    %2723 = vmatprep.subr.bf16.mxu0 %v1936
    %2724 = vmatpush1.bf16.msra.mxu0 %v1935
    %2725 = vmatprep.subr.bf16.mxu0 %v1944
    %2726 = vmatpush1.bf16.msra.mxu0 %v1943
    %2727 = vmatprep.subr.bf16.mxu0 %v1952
    %2728 = vmatpush1.bf16.msra.mxu0 %v1951
    %2729 = vmatprep.subr.bf16.mxu0 %v1960
    %2730 = vmatpush1.bf16.msra.mxu0 %v1959
    %2731 = vmatprep.subr.bf16.mxu0 %v1968
    %2732 = vmatpush1.bf16.msra.mxu0 %v1967
    %2733 = vmatprep.subr.bf16.mxu0 %v1976
    %2734 = vmatpush1.bf16.msra.mxu0 %v1975
    %2735 = vmatprep.subr.bf16.mxu0 %v1984
    %2736 = vmatpush1.bf16.msra.mxu0 %v1983
    %2737 = vmatprep.subr.bf16.mxu0 %v1992
    %2738 = vmatpush1.bf16.msra.mxu0 %v1991
    %2739 = vmatprep.mubr.bf16.mxu0 %v74
    %2740 = vmatmul.mubr.bf16.gmra.mrb[0].mxu0 %v73
    %v2741 = vpop.f32.mrb[0].mxu0
    %v2742 = vadd.f32 %v2701, %v2741
    %v2743 = vpop.f32.mrb[0].mxu0
    %v2744 = vadd.f32 %v2703, %v2743
    %v2745 = vpop.f32.mrb[0].mxu0
    %v2746 = vpop.f32.mrb[0].mxu0
    %2747 = vdwg.mxu0
    %2748 = vmatprep.subr.bf16.mxu0 %v1618
    %2749 = vmatpush1.bf16.msra.mxu0 %v1617
    %2750 = vmatprep.subr.bf16.mxu0 %v1626
    %2751 = vmatpush1.bf16.msra.mxu0 %v1625
    %2752 = vmatprep.subr.bf16.mxu0 %v1634
    %2753 = vmatpush1.bf16.msra.mxu0 %v1633
    %2754 = vmatprep.subr.bf16.mxu0 %v1642
    %2755 = vmatpush1.bf16.msra.mxu0 %v1641
    %2756 = vmatprep.subr.bf16.mxu0 %v1650
    %2757 = vmatpush1.bf16.msra.mxu0 %v1649
    %2758 = vmatprep.subr.bf16.mxu0 %v1658
    %2759 = vmatpush1.bf16.msra.mxu0 %v1657
    %2760 = vmatprep.subr.bf16.mxu0 %v1666
    %2761 = vmatpush1.bf16.msra.mxu0 %v1665
    %2762 = vmatprep.subr.bf16.mxu0 %v1674
    %2763 = vmatpush1.bf16.msra.mxu0 %v1673
    %2764 = vmatprep.subr.bf16.mxu0 %v1682
    %2765 = vmatpush1.bf16.msra.mxu0 %v1681
    %2766 = vmatprep.subr.bf16.mxu0 %v1690
    %2767 = vmatpush1.bf16.msra.mxu0 %v1689
    %2768 = vmatprep.subr.bf16.mxu0 %v1698
    %2769 = vmatpush1.bf16.msra.mxu0 %v1697
    %2770 = vmatprep.subr.bf16.mxu0 %v1706
    %2771 = vmatpush1.bf16.msra.mxu0 %v1705
    %2772 = vmatprep.subr.bf16.mxu0 %v1714
    %2773 = vmatpush1.bf16.msra.mxu0 %v1713
    %2774 = vmatprep.subr.bf16.mxu0 %v1722
    %2775 = vmatpush1.bf16.msra.mxu0 %v1721
    %2776 = vmatprep.subr.bf16.mxu0 %v1730
    %2777 = vmatpush1.bf16.msra.mxu0 %v1729
    %2778 = vmatprep.subr.bf16.mxu0 %v1738
    %2779 = vmatpush1.bf16.msra.mxu0 %v1737
    %2780 = vmatprep.mubr.bf16.mxu0 %v70
    %2781 = vmatmul.mubr.bf16.gmra.mrb[0].mxu0 %v69
    %v2782 = vpop.f32.mrb[0].mxu0
    %v2783 = vadd.f32 0.0, %v2782
    %v2784 = vpop.f32.mrb[0].mxu0
    %v2785 = vadd.f32 0.0, %v2784
    %v2786 = vpop.f32.mrb[0].mxu0
    %v2787 = vpop.f32.mrb[0].mxu0
    %2788 = vdwg.mxu0
    %2789 = vmatprep.subr.bf16.mxu0 %v1746
    %2790 = vmatpush1.bf16.msra.mxu0 %v1745
    %2791 = vmatprep.subr.bf16.mxu0 %v1754
    %2792 = vmatpush1.bf16.msra.mxu0 %v1753
    %2793 = vmatprep.subr.bf16.mxu0 %v1762
    %2794 = vmatpush1.bf16.msra.mxu0 %v1761
    %2795 = vmatprep.subr.bf16.mxu0 %v1770
    %2796 = vmatpush1.bf16.msra.mxu0 %v1769
    %2797 = vmatprep.subr.bf16.mxu0 %v1778
    %2798 = vmatpush1.bf16.msra.mxu0 %v1777
    %2799 = vmatprep.subr.bf16.mxu0 %v1786
    %2800 = vmatpush1.bf16.msra.mxu0 %v1785
    %2801 = vmatprep.subr.bf16.mxu0 %v1794
    %2802 = vmatpush1.bf16.msra.mxu0 %v1793
    %2803 = vmatprep.subr.bf16.mxu0 %v1802
    %2804 = vmatpush1.bf16.msra.mxu0 %v1801
    %2805 = vmatprep.subr.bf16.mxu0 %v1810
    %2806 = vmatpush1.bf16.msra.mxu0 %v1809
    %2807 = vmatprep.subr.bf16.mxu0 %v1818
    %2808 = vmatpush1.bf16.msra.mxu0 %v1817
    %2809 = vmatprep.subr.bf16.mxu0 %v1826
    %2810 = vmatpush1.bf16.msra.mxu0 %v1825
    %2811 = vmatprep.subr.bf16.mxu0 %v1834
    %2812 = vmatpush1.bf16.msra.mxu0 %v1833
    %2813 = vmatprep.subr.bf16.mxu0 %v1842
    %2814 = vmatpush1.bf16.msra.mxu0 %v1841
    %2815 = vmatprep.subr.bf16.mxu0 %v1850
    %2816 = vmatpush1.bf16.msra.mxu0 %v1849
    %2817 = vmatprep.subr.bf16.mxu0 %v1858
    %2818 = vmatpush1.bf16.msra.mxu0 %v1857
    %2819 = vmatprep.subr.bf16.mxu0 %v1866
    %2820 = vmatpush1.bf16.msra.mxu0 %v1865
    %2821 = vmatprep.mubr.bf16.mxu0 %v72
    %2822 = vmatmul.mubr.bf16.gmra.mrb[0].mxu0 %v71
    %v2823 = vpop.f32.mrb[0].mxu0
    %v2824 = vadd.f32 %v2783, %v2823
    %v2825 = vpop.f32.mrb[0].mxu0
    %v2826 = vadd.f32 %v2785, %v2825
    %v2827 = vpop.f32.mrb[0].mxu0
    %v2828 = vpop.f32.mrb[0].mxu0
    %2829 = vdwg.mxu0
    %2830 = vmatprep.subr.bf16.mxu0 %v1874
    %2831 = vmatpush1.bf16.msra.mxu0 %v1873
    %2832 = vmatprep.subr.bf16.mxu0 %v1882
    %2833 = vmatpush1.bf16.msra.mxu0 %v1881
    %2834 = vmatprep.subr.bf16.mxu0 %v1890
    %2835 = vmatpush1.bf16.msra.mxu0 %v1889
    %2836 = vmatprep.subr.bf16.mxu0 %v1898
    %2837 = vmatpush1.bf16.msra.mxu0 %v1897
    %2838 = vmatprep.subr.bf16.mxu0 %v1906
    %2839 = vmatpush1.bf16.msra.mxu0 %v1905
    %2840 = vmatprep.subr.bf16.mxu0 %v1914
    %2841 = vmatpush1.bf16.msra.mxu0 %v1913
    %2842 = vmatprep.subr.bf16.mxu0 %v1922
    %2843 = vmatpush1.bf16.msra.mxu0 %v1921
    %2844 = vmatprep.subr.bf16.mxu0 %v1930
    %2845 = vmatpush1.bf16.msra.mxu0 %v1929
    %2846 = vmatprep.subr.bf16.mxu0 %v1938
    %2847 = vmatpush1.bf16.msra.mxu0 %v1937
    %2848 = vmatprep.subr.bf16.mxu0 %v1946
    %2849 = vmatpush1.bf16.msra.mxu0 %v1945
    %2850 = vmatprep.subr.bf16.mxu0 %v1954
    %2851 = vmatpush1.bf16.msra.mxu0 %v1953
    %2852 = vmatprep.subr.bf16.mxu0 %v1962
    %2853 = vmatpush1.bf16.msra.mxu0 %v1961
    %2854 = vmatprep.subr.bf16.mxu0 %v1970
    %2855 = vmatpush1.bf16.msra.mxu0 %v1969
    %2856 = vmatprep.subr.bf16.mxu0 %v1978
    %2857 = vmatpush1.bf16.msra.mxu0 %v1977
    %2858 = vmatprep.subr.bf16.mxu0 %v1986
    %2859 = vmatpush1.bf16.msra.mxu0 %v1985
    %2860 = vmatprep.subr.bf16.mxu0 %v1994
    %2861 = vmatpush1.bf16.msra.mxu0 %v1993
    %2862 = vmatprep.mubr.bf16.mxu0 %v74
    %2863 = vmatmul.mubr.bf16.gmra.mrb[0].mxu0 %v73
    %v2864 = vpop.f32.mrb[0].mxu0
    %v2865 = vadd.f32 %v2824, %v2864
    %v2866 = vpop.f32.mrb[0].mxu0
    %v2867 = vadd.f32 %v2826, %v2866
    %v2868 = vpop.f32.mrb[0].mxu0
    %v2869 = vpop.f32.mrb[0].mxu0
    %2870 = vdwg.mxu0
    %vm2871 = vcmask 1041408
    %v2872 = vsel %vm2871, %v2496, 0.0
    %v2873 = vrot.slane %v2872, 4
    %v2874 = vadd.f32 %v2872, %v2873
    %v2875 = vrot.slane %v2874, 2
    %v2876 = vadd.f32 %v2874, %v2875
    %v2877 = vrot.slane %v2876, 1
    %v2878 = vadd.f32 %v2876, %v2877
    %v2879 = vsel %vm2871, %v2498, 0.0
    %v2880 = vrot.slane %v2879, 4
    %v2881 = vadd.f32 %v2879, %v2880
    %v2882 = vrot.slane %v2881, 2
    %v2883 = vadd.f32 %v2881, %v2882
    %v2884 = vrot.slane %v2883, 1
    %v2885 = vadd.f32 %v2883, %v2884
    %v2886 = vsel %vm2871, %v2619, 0.0
    %v2887 = vrot.slane %v2886, 4
    %v2888 = vadd.f32 %v2886, %v2887
    %v2889 = vrot.slane %v2888, 2
    %v2890 = vadd.f32 %v2888, %v2889
    %v2891 = vrot.slane %v2890, 1
    %v2892 = vadd.f32 %v2890, %v2891
    %v2893 = vsel %vm2871, %v2621, 0.0
    %v2894 = vrot.slane %v2893, 4
    %v2895 = vadd.f32 %v2893, %v2894
    %v2896 = vrot.slane %v2895, 2
    %v2897 = vadd.f32 %v2895, %v2896
    %v2898 = vrot.slane %v2897, 1
    %v2899 = vadd.f32 %v2897, %v2898
    %v2900 = vsel %vm2871, %v2742, 0.0
    %v2901 = vrot.slane %v2900, 4
    %v2902 = vadd.f32 %v2900, %v2901
    %v2903 = vrot.slane %v2902, 2
    %v2904 = vadd.f32 %v2902, %v2903
    %v2905 = vrot.slane %v2904, 1
    %v2906 = vadd.f32 %v2904, %v2905
    %v2907 = vsel %vm2871, %v2744, 0.0
    %v2908 = vrot.slane %v2907, 4
    %v2909 = vadd.f32 %v2907, %v2908
    %v2910 = vrot.slane %v2909, 2
    %v2911 = vadd.f32 %v2909, %v2910
    %v2912 = vrot.slane %v2911, 1
    %v2913 = vadd.f32 %v2911, %v2912
    %v2914 = vsel %vm2871, %v2865, 0.0
    %v2915 = vrot.slane %v2914, 4
    %v2916 = vadd.f32 %v2914, %v2915
    %v2917 = vrot.slane %v2916, 2
    %v2918 = vadd.f32 %v2916, %v2917
    %v2919 = vrot.slane %v2918, 1
    %v2920 = vadd.f32 %v2918, %v2919
    %v2921 = vsel %vm2871, %v2867, 0.0
    %v2922 = vrot.slane %v2921, 4
    %v2923 = vadd.f32 %v2921, %v2922
    %v2924 = vrot.slane %v2923, 2
    %v2925 = vadd.f32 %v2923, %v2924
    %v2926 = vrot.slane %v2925, 1
    %v2927 = vadd.f32 %v2925, %v2926
    %v2928 = vrcp.pop 2.0
    %v2929 = vmul.f32 %v2878, %v2928
    %v2930 = vmul.f32 %v2885, %v2928
    %v2931 = vmul.f32 %v2892, %v2928
    %v2932 = vmul.f32 %v2899, %v2928
    %v2933 = vmul.f32 %v2906, %v2928
    %v2934 = vmul.f32 %v2913, %v2928
    %v2935 = vmul.f32 %v2920, %v2928
    %v2936 = vmul.f32 %v2927, %v2928
    %v2937 = vsub.f32 %v2496, %v2929
    %v2938 = vsub.f32 %v2498, %v2930
    %v2939 = vsub.f32 %v2619, %v2931
    %v2940 = vsub.f32 %v2621, %v2932
    %v2941 = vsub.f32 %v2742, %v2933
    %v2942 = vsub.f32 %v2744, %v2934
    %v2943 = vsub.f32 %v2865, %v2935
    %v2944 = vsub.f32 %v2867, %v2936
    %v2945 = vmul.f32 %v2937, %v2937
    %v2946 = vmul.f32 %v2938, %v2938
    %v2947 = vmul.f32 %v2939, %v2939
    %v2948 = vmul.f32 %v2940, %v2940
    %v2949 = vmul.f32 %v2941, %v2941
    %v2950 = vmul.f32 %v2942, %v2942
    %v2951 = vmul.f32 %v2943, %v2943
    %v2952 = vmul.f32 %v2944, %v2944
    %v2953 = vsel %vm2871, %v2945, 0.0
    %v2954 = vrot.slane %v2953, 4
    %v2955 = vadd.f32 %v2953, %v2954
    %v2956 = vrot.slane %v2955, 2
    %v2957 = vadd.f32 %v2955, %v2956
    %v2958 = vrot.slane %v2957, 1
    %v2959 = vadd.f32 %v2957, %v2958
    %v2960 = vsel %vm2871, %v2946, 0.0
    %v2961 = vrot.slane %v2960, 4
    %v2962 = vadd.f32 %v2960, %v2961
    %v2963 = vrot.slane %v2962, 2
    %v2964 = vadd.f32 %v2962, %v2963
    %v2965 = vrot.slane %v2964, 1
    %v2966 = vadd.f32 %v2964, %v2965
    %v2967 = vsel %vm2871, %v2947, 0.0
    %v2968 = vrot.slane %v2967, 4
    %v2969 = vadd.f32 %v2967, %v2968
    %v2970 = vrot.slane %v2969, 2
    %v2971 = vadd.f32 %v2969, %v2970
    %v2972 = vrot.slane %v2971, 1
    %v2973 = vadd.f32 %v2971, %v2972
    %v2974 = vsel %vm2871, %v2948, 0.0
    %v2975 = vrot.slane %v2974, 4
    %v2976 = vadd.f32 %v2974, %v2975
    %v2977 = vrot.slane %v2976, 2
    %v2978 = vadd.f32 %v2976, %v2977
    %v2979 = vrot.slane %v2978, 1
    %v2980 = vadd.f32 %v2978, %v2979
    %v2981 = vsel %vm2871, %v2949, 0.0
    %v2982 = vrot.slane %v2981, 4
    %v2983 = vadd.f32 %v2981, %v2982
    %v2984 = vrot.slane %v2983, 2
    %v2985 = vadd.f32 %v2983, %v2984
    %v2986 = vrot.slane %v2985, 1
    %v2987 = vadd.f32 %v2985, %v2986
    %v2988 = vsel %vm2871, %v2950, 0.0
    %v2989 = vrot.slane %v2988, 4
    %v2990 = vadd.f32 %v2988, %v2989
    %v2991 = vrot.slane %v2990, 2
    %v2992 = vadd.f32 %v2990, %v2991
    %v2993 = vrot.slane %v2992, 1
    %v2994 = vadd.f32 %v2992, %v2993
    %v2995 = vsel %vm2871, %v2951, 0.0
    %v2996 = vrot.slane %v2995, 4
    %v2997 = vadd.f32 %v2995, %v2996
    %v2998 = vrot.slane %v2997, 2
    %v2999 = vadd.f32 %v2997, %v2998
    %v3000 = vrot.slane %v2999, 1
    %v3001 = vadd.f32 %v2999, %v3000
    %v3002 = vsel %vm2871, %v2952, 0.0
    %v3003 = vrot.slane %v3002, 4
    %v3004 = vadd.f32 %v3002, %v3003
    %v3005 = vrot.slane %v3004, 2
    %v3006 = vadd.f32 %v3004, %v3005
    %v3007 = vrot.slane %v3006, 1
    %v3008 = vadd.f32 %v3006, %v3007
    %v3009 = vmul.f32 %v2959, %v2928
    %v3010 = vmul.f32 %v2966, %v2928
    %v3011 = vmul.f32 %v2973, %v2928
    %v3012 = vmul.f32 %v2980, %v2928
    %v3013 = vmul.f32 %v2987, %v2928
    %v3014 = vmul.f32 %v2994, %v2928
    %v3015 = vmul.f32 %v3001, %v2928
    %v3016 = vmul.f32 %v3008, %v2928
    %v3017 = vadd.f32 %v3009, 1e-05
    %v3018 = vadd.f32 %v3010, 1e-05
    %v3019 = vadd.f32 %v3011, 1e-05
    %v3020 = vadd.f32 %v3012, 1e-05
    %v3021 = vadd.f32 %v3013, 1e-05
    %v3022 = vadd.f32 %v3014, 1e-05
    %v3023 = vadd.f32 %v3015, 1e-05
    %v3024 = vadd.f32 %v3016, 1e-05
    %v3025 = vrsqrt.pop %v3017
    %v3026 = vrsqrt.pop %v3018
    %v3027 = vrsqrt.pop %v3019
    %v3028 = vrsqrt.pop %v3020
    %v3029 = vrsqrt.pop %v3021
    %v3030 = vrsqrt.pop %v3022
    %v3031 = vrsqrt.pop %v3023
    %v3032 = vrsqrt.pop %v3024
    %v3033 = vld [vmem:[%s2] sm:$0xff]
    %v3035 = vlaneseq
    %v3036 = vshrl.u32 %v3035, 7
    %v3037 = vsub.s32 0, %v3036
    %v3038 = vrot.slane %v3033, %v3037
    %v3039 = vlaneseq
    %v3040 = vshrl.u32 %v3039, 7
    %v3041 = vsub.s32 1, %v3040
    %v3042 = vrot.slane %v3033, %v3041
    %v3043 = vlaneseq
    %v3044 = vshrl.u32 %v3043, 7
    %v3045 = vsub.s32 2, %v3044
    %v3046 = vrot.slane %v3033, %v3045
    %v3047 = vlaneseq
    %v3048 = vshrl.u32 %v3047, 7
    %v3049 = vsub.s32 3, %v3048
    %v3050 = vrot.slane %v3033, %v3049
    %v3051 = vlaneseq
    %v3052 = vshrl.u32 %v3051, 7
    %v3053 = vsub.s32 4, %v3052
    %v3054 = vrot.slane %v3033, %v3053
    %v3055 = vlaneseq
    %v3056 = vshrl.u32 %v3055, 7
    %v3057 = vsub.s32 5, %v3056
    %v3058 = vrot.slane %v3033, %v3057
    %v3059 = vlaneseq
    %v3060 = vshrl.u32 %v3059, 7
    %v3061 = vsub.s32 6, %v3060
    %v3062 = vrot.slane %v3033, %v3061
    %v3063 = vlaneseq
    %v3064 = vshrl.u32 %v3063, 7
    %v3065 = vsub.s32 7, %v3064
    %v3066 = vrot.slane %v3033, %v3065
    %v3075 = vmul.f32 %v3025, %v3038
    %v3076 = vmul.f32 %v3026, %v3042
    %v3077 = vmul.f32 %v3027, %v3046
    %v3078 = vmul.f32 %v3028, %v3050
    %v3079 = vmul.f32 %v3029, %v3054
    %v3080 = vmul.f32 %v3030, %v3058
    %v3081 = vmul.f32 %v3031, %v3062
    %v3082 = vmul.f32 %v3032, %v3066
    %v3083 = vlaneseq
    %v3084 = vshrl.u32 %v3083, 7
    %v3085 = vsub.s32 0, %v3084
    %v3086 = vrot.slane %v3075, %v3085
    %v3087 = vlaneseq
    %v3088 = vshrl.u32 %v3087, 7
    %v3089 = vsub.s32 0, %v3088
    %v3090 = vrot.slane %v3076, %v3089
    %v3091 = vlaneseq
    %v3092 = vshrl.u32 %v3091, 7
    %v3093 = vsub.s32 0, %v3092
    %v3094 = vrot.slane %v3077, %v3093
    %v3095 = vlaneseq
    %v3096 = vshrl.u32 %v3095, 7
    %v3097 = vsub.s32 0, %v3096
    %v3098 = vrot.slane %v3078, %v3097
    %v3099 = vlaneseq
    %v3100 = vshrl.u32 %v3099, 7
    %v3101 = vsub.s32 0, %v3100
    %v3102 = vrot.slane %v3079, %v3101
    %v3103 = vlaneseq
    %v3104 = vshrl.u32 %v3103, 7
    %v3105 = vsub.s32 0, %v3104
    %v3106 = vrot.slane %v3080, %v3105
    %v3107 = vlaneseq
    %v3108 = vshrl.u32 %v3107, 7
    %v3109 = vsub.s32 0, %v3108
    %v3110 = vrot.slane %v3081, %v3109
    %v3111 = vlaneseq
    %v3112 = vshrl.u32 %v3111, 7
    %v3113 = vsub.s32 0, %v3112
    %v3114 = vrot.slane %v3082, %v3113
    %v3115 = vmul.f32 %v2937, %v3086
    %v3116 = vmul.f32 %v2938, %v3090
    %v3117 = vmul.f32 %v2939, %v3094
    %v3118 = vmul.f32 %v2940, %v3098
    %v3119 = vmul.f32 %v2941, %v3102
    %v3120 = vmul.f32 %v2942, %v3106
    %v3121 = vmul.f32 %v2943, %v3110
    %v3122 = vmul.f32 %v2944, %v3114
    %v3123 = vld [vmem:[%s3] sm:$0xff]
    %v3125 = vlaneseq
    %v3126 = vshrl.u32 %v3125, 7
    %v3127 = vsub.s32 0, %v3126
    %v3128 = vrot.slane %v3123, %v3127
    %v3129 = vlaneseq
    %v3130 = vshrl.u32 %v3129, 7
    %v3131 = vsub.s32 1, %v3130
    %v3132 = vrot.slane %v3123, %v3131
    %v3133 = vlaneseq
    %v3134 = vshrl.u32 %v3133, 7
    %v3135 = vsub.s32 2, %v3134
    %v3136 = vrot.slane %v3123, %v3135
    %v3137 = vlaneseq
    %v3138 = vshrl.u32 %v3137, 7
    %v3139 = vsub.s32 3, %v3138
    %v3140 = vrot.slane %v3123, %v3139
    %v3141 = vlaneseq
    %v3142 = vshrl.u32 %v3141, 7
    %v3143 = vsub.s32 4, %v3142
    %v3144 = vrot.slane %v3123, %v3143
    %v3145 = vlaneseq
    %v3146 = vshrl.u32 %v3145, 7
    %v3147 = vsub.s32 5, %v3146
    %v3148 = vrot.slane %v3123, %v3147
    %v3149 = vlaneseq
    %v3150 = vshrl.u32 %v3149, 7
    %v3151 = vsub.s32 6, %v3150
    %v3152 = vrot.slane %v3123, %v3151
    %v3153 = vlaneseq
    %v3154 = vshrl.u32 %v3153, 7
    %v3155 = vsub.s32 7, %v3154
    %v3156 = vrot.slane %v3123, %v3155
    %v3165 = vadd.f32 %v3115, %v3128
    %v3166 = vadd.f32 %v3116, %v3132
    %v3167 = vadd.f32 %v3117, %v3136
    %v3168 = vadd.f32 %v3118, %v3140
    %v3169 = vadd.f32 %v3119, %v3144
    %v3170 = vadd.f32 %v3120, %v3148
    %v3171 = vadd.f32 %v3121, %v3152
    %v3172 = vadd.f32 %v3122, %v3156
    %v3173 = vmax.f32 %v3165, 0.0
    %v3174 = vmax.f32 %v3166, 0.0
    %v3175 = vmax.f32 %v3167, 0.0
    %v3176 = vmax.f32 %v3168, 0.0
    %v3177 = vmax.f32 %v3169, 0.0
    %v3178 = vmax.f32 %v3170, 0.0
    %v3179 = vmax.f32 %v3171, 0.0
    %v3180 = vmax.f32 %v3172, 0.0
    %v3181 = vpack.c.bf16 %v3173, %v3173
    %v3182 = vpack.c.bf16 %v3174, %v3174
    %v3183 = vpack.c.bf16 %v3175, %v3175
    %v3184 = vpack.c.bf16 %v3176, %v3176
    %v3185 = vpack.c.bf16 %v3177, %v3177
    %v3186 = vpack.c.bf16 %v3178, %v3178
    %v3187 = vpack.c.bf16 %v3179, %v3179
    %v3188 = vpack.c.bf16 %v3180, %v3180
    %v3189 = vld [vmem:[%s4] sm:$0xff]
    %v3190 = vld [vmem:[%s4 + $0x8] sm:$0xff]
    %v3191 = vld [vmem:[%s4 + $0x10] sm:$0xff]
    %v3192 = vld [vmem:[%s4 + $0x18] sm:$0xff]
    %v3193 = vld [vmem:[%s4 + $0x20] sm:$0xff]
    %v3194 = vld [vmem:[%s4 + $0x28] sm:$0xff]
    %v3195 = vld [vmem:[%s4 + $0x30] sm:$0xff]
    %v3196 = vld [vmem:[%s4 + $0x38] sm:$0xff]
    %v3197 = vld [vmem:[%s4 + $0x40] sm:$0xff]
    %v3198 = vld [vmem:[%s4 + $0x48] sm:$0xff]
    %v3199 = vld [vmem:[%s4 + $0x50] sm:$0xff]
    %v3200 = vld [vmem:[%s4 + $0x58] sm:$0xff]
    %v3201 = vld [vmem:[%s4 + $0x60] sm:$0xff]
    %v3202 = vld [vmem:[%s4 + $0x68] sm:$0xff]
    %v3203 = vld [vmem:[%s4 + $0x70] sm:$0xff]
    %v3204 = vld [vmem:[%s4 + $0x78] sm:$0xff]
    %v3205 = vld [vmem:[%s4 + $0x80] sm:$0xff]
    %v3206 = vld [vmem:[%s4 + $0x88] sm:$0xff]
    %v3207 = vld [vmem:[%s4 + $0x90] sm:$0xff]
    %v3208 = vld [vmem:[%s4 + $0x98] sm:$0xff]
    %v3209 = vld [vmem:[%s4 + $0xa0] sm:$0xff]
    %v3210 = vld [vmem:[%s4 + $0xa8] sm:$0xff]
    %v3211 = vld [vmem:[%s4 + $0xb0] sm:$0xff]
    %v3212 = vld [vmem:[%s4 + $0xb8] sm:$0xff]
    %v3213 = vld [vmem:[%s4 + $0xc0] sm:$0xff]
    %v3214 = vld [vmem:[%s4 + $0xc8] sm:$0xff]
    %v3215 = vld [vmem:[%s4 + $0xd0] sm:$0xff]
    %v3216 = vld [vmem:[%s4 + $0xd8] sm:$0xff]
    %v3217 = vld [vmem:[%s4 + $0xe0] sm:$0xff]
    %v3218 = vld [vmem:[%s4 + $0xe8] sm:$0xff]
    %v3219 = vld [vmem:[%s4 + $0xf0] sm:$0xff]
    %v3220 = vld [vmem:[%s4 + $0xf8] sm:$0xff]
    %v3221 = vld [vmem:[%s4 + $0x100] sm:$0xff]
    %v3222 = vld [vmem:[%s4 + $0x108] sm:$0xff]
    %v3223 = vld [vmem:[%s4 + $0x110] sm:$0xff]
    %v3224 = vld [vmem:[%s4 + $0x118] sm:$0xff]
    %v3225 = vld [vmem:[%s4 + $0x120] sm:$0xff]
    %v3226 = vld [vmem:[%s4 + $0x128] sm:$0xff]
    %v3227 = vld [vmem:[%s4 + $0x130] sm:$0xff]
    %v3228 = vld [vmem:[%s4 + $0x138] sm:$0xff]
    %v3229 = vld [vmem:[%s4 + $0x140] sm:$0xff]
    %v3230 = vld [vmem:[%s4 + $0x148] sm:$0xff]
    %v3231 = vld [vmem:[%s4 + $0x150] sm:$0xff]
    %v3232 = vld [vmem:[%s4 + $0x158] sm:$0xff]
    %v3233 = vld [vmem:[%s4 + $0x160] sm:$0xff]
    %v3234 = vld [vmem:[%s4 + $0x168] sm:$0xff]
    %v3235 = vld [vmem:[%s4 + $0x170] sm:$0xff]
    %v3236 = vld [vmem:[%s4 + $0x178] sm:$0xff]
    %v3237 = vld [vmem:[%s4 + $0x180] sm:$0xff]
    %v3238 = vld [vmem:[%s4 + $0x188] sm:$0xff]
    %v3239 = vld [vmem:[%s4 + $0x190] sm:$0xff]
    %v3240 = vld [vmem:[%s4 + $0x198] sm:$0xff]
    %v3241 = vld [vmem:[%s4 + $0x1a0] sm:$0xff]
    %v3242 = vld [vmem:[%s4 + $0x1a8] sm:$0xff]
    %v3243 = vld [vmem:[%s4 + $0x1b0] sm:$0xff]
    %v3244 = vld [vmem:[%s4 + $0x1b8] sm:$0xff]
    %v3245 = vld [vmem:[%s4 + $0x1c0] sm:$0xff]
    %v3246 = vld [vmem:[%s4 + $0x1c8] sm:$0xff]
    %v3247 = vld [vmem:[%s4 + $0x1d0] sm:$0xff]
    %v3248 = vld [vmem:[%s4 + $0x1d8] sm:$0xff]
    %v3249 = vld [vmem:[%s4 + $0x1e0] sm:$0xff]
    %v3250 = vld [vmem:[%s4 + $0x1e8] sm:$0xff]
    %v3251 = vld [vmem:[%s4 + $0x1f0] sm:$0xff]
    %v3252 = vld [vmem:[%s4 + $0x1f8] sm:$0xff]
    %v3253 = vld [vmem:[%s4 + $0x200] sm:$0xff]
    %v3254 = vld [vmem:[%s4 + $0x208] sm:$0xff]
    %v3255 = vld [vmem:[%s4 + $0x210] sm:$0xff]
    %v3256 = vld [vmem:[%s4 + $0x218] sm:$0xff]
    %v3257 = vld [vmem:[%s4 + $0x220] sm:$0xff]
    %v3258 = vld [vmem:[%s4 + $0x228] sm:$0xff]
    %v3259 = vld [vmem:[%s4 + $0x230] sm:$0xff]
    %v3260 = vld [vmem:[%s4 + $0x238] sm:$0xff]
    %v3261 = vld [vmem:[%s4 + $0x240] sm:$0xff]
    %v3262 = vld [vmem:[%s4 + $0x248] sm:$0xff]
    %v3263 = vld [vmem:[%s4 + $0x250] sm:$0xff]
    %v3264 = vld [vmem:[%s4 + $0x258] sm:$0xff]
    %v3265 = vld [vmem:[%s4 + $0x260] sm:$0xff]
    %v3266 = vld [vmem:[%s4 + $0x268] sm:$0xff]
    %v3267 = vld [vmem:[%s4 + $0x270] sm:$0xff]
    %v3268 = vld [vmem:[%s4 + $0x278] sm:$0xff]
    %v3269 = vld [vmem:[%s4 + $0x280] sm:$0xff]
    %v3270 = vld [vmem:[%s4 + $0x288] sm:$0xff]
    %v3271 = vld [vmem:[%s4 + $0x290] sm:$0xff]
    %v3272 = vld [vmem:[%s4 + $0x298] sm:$0xff]
    %v3273 = vld [vmem:[%s4 + $0x2a0] sm:$0xff]
    %v3274 = vld [vmem:[%s4 + $0x2a8] sm:$0xff]
    %v3275 = vld [vmem:[%s4 + $0x2b0] sm:$0xff]
    %v3276 = vld [vmem:[%s4 + $0x2b8] sm:$0xff]
    %v3277 = vld [vmem:[%s4 + $0x2c0] sm:$0xff]
    %v3278 = vld [vmem:[%s4 + $0x2c8] sm:$0xff]
    %v3279 = vld [vmem:[%s4 + $0x2d0] sm:$0xff]
    %v3280 = vld [vmem:[%s4 + $0x2d8] sm:$0xff]
    %v3281 = vld [vmem:[%s4 + $0x2e0] sm:$0xff]
    %v3282 = vld [vmem:[%s4 + $0x2e8] sm:$0xff]
    %v3283 = vld [vmem:[%s4 + $0x2f0] sm:$0xff]
    %v3284 = vld [vmem:[%s4 + $0x2f8] sm:$0xff]
    %v3285 = vld [vmem:[%s4 + $0x300] sm:$0xff]
    %v3286 = vld [vmem:[%s4 + $0x308] sm:$0xff]
    %v3287 = vld [vmem:[%s4 + $0x310] sm:$0xff]
    %v3288 = vld [vmem:[%s4 + $0x318] sm:$0xff]
    %v3289 = vld [vmem:[%s4 + $0x320] sm:$0xff]
    %v3290 = vld [vmem:[%s4 + $0x328] sm:$0xff]
    %v3291 = vld [vmem:[%s4 + $0x330] sm:$0xff]
    %v3292 = vld [vmem:[%s4 + $0x338] sm:$0xff]
    %v3293 = vld [vmem:[%s4 + $0x340] sm:$0xff]
    %v3294 = vld [vmem:[%s4 + $0x348] sm:$0xff]
    %v3295 = vld [vmem:[%s4 + $0x350] sm:$0xff]
    %v3296 = vld [vmem:[%s4 + $0x358] sm:$0xff]
    %v3297 = vld [vmem:[%s4 + $0x360] sm:$0xff]
    %v3298 = vld [vmem:[%s4 + $0x368] sm:$0xff]
    %v3299 = vld [vmem:[%s4 + $0x370] sm:$0xff]
    %v3300 = vld [vmem:[%s4 + $0x378] sm:$0xff]
    %v3301 = vld [vmem:[%s4 + $0x380] sm:$0xff]
    %v3302 = vld [vmem:[%s4 + $0x388] sm:$0xff]
    %v3303 = vld [vmem:[%s4 + $0x390] sm:$0xff]
    %v3304 = vld [vmem:[%s4 + $0x398] sm:$0xff]
    %v3305 = vld [vmem:[%s4 + $0x3a0] sm:$0xff]
    %v3306 = vld [vmem:[%s4 + $0x3a8] sm:$0xff]
    %v3307 = vld [vmem:[%s4 + $0x3b0] sm:$0xff]
    %v3308 = vld [vmem:[%s4 + $0x3b8] sm:$0xff]
    %v3309 = vld [vmem:[%s4 + $0x3c0] sm:$0xff]
    %v3310 = vld [vmem:[%s4 + $0x3c8] sm:$0xff]
    %v3311 = vld [vmem:[%s4 + $0x3d0] sm:$0xff]
    %v3312 = vld [vmem:[%s4 + $0x3d8] sm:$0xff]
    %v3313 = vld [vmem:[%s4 + $0x3e0] sm:$0xff]
    %v3314 = vld [vmem:[%s4 + $0x3e8] sm:$0xff]
    %v3315 = vld [vmem:[%s4 + $0x3f0] sm:$0xff]
    %v3316 = vld [vmem:[%s4 + $0x3f8] sm:$0xff]
    %v3317 = vld [vmem:[%s4 + $0x400] sm:$0xff]
    %v3318 = vld [vmem:[%s4 + $0x408] sm:$0xff]
    %v3319 = vld [vmem:[%s4 + $0x410] sm:$0xff]
    %v3320 = vld [vmem:[%s4 + $0x418] sm:$0xff]
    %v3321 = vld [vmem:[%s4 + $0x420] sm:$0xff]
    %v3322 = vld [vmem:[%s4 + $0x428] sm:$0xff]
    %v3323 = vld [vmem:[%s4 + $0x430] sm:$0xff]
    %v3324 = vld [vmem:[%s4 + $0x438] sm:$0xff]
    %v3325 = vld [vmem:[%s4 + $0x440] sm:$0xff]
    %v3326 = vld [vmem:[%s4 + $0x448] sm:$0xff]
    %v3327 = vld [vmem:[%s4 + $0x450] sm:$0xff]
    %v3328 = vld [vmem:[%s4 + $0x458] sm:$0xff]
    %v3329 = vld [vmem:[%s4 + $0x460] sm:$0xff]
    %v3330 = vld [vmem:[%s4 + $0x468] sm:$0xff]
    %v3331 = vld [vmem:[%s4 + $0x470] sm:$0xff]
    %v3332 = vld [vmem:[%s4 + $0x478] sm:$0xff]
    %v3333 = vld [vmem:[%s4 + $0x480] sm:$0xff]
    %v3334 = vld [vmem:[%s4 + $0x488] sm:$0xff]
    %v3335 = vld [vmem:[%s4 + $0x490] sm:$0xff]
    %v3336 = vld [vmem:[%s4 + $0x498] sm:$0xff]
    %v3337 = vld [vmem:[%s4 + $0x4a0] sm:$0xff]
    %v3338 = vld [vmem:[%s4 + $0x4a8] sm:$0xff]
    %v3339 = vld [vmem:[%s4 + $0x4b0] sm:$0xff]
    %v3340 = vld [vmem:[%s4 + $0x4b8] sm:$0xff]
    %v3341 = vld [vmem:[%s4 + $0x4c0] sm:$0xff]
    %v3342 = vld [vmem:[%s4 + $0x4c8] sm:$0xff]
    %v3343 = vld [vmem:[%s4 + $0x4d0] sm:$0xff]
    %v3344 = vld [vmem:[%s4 + $0x4d8] sm:$0xff]
    %v3345 = vld [vmem:[%s4 + $0x4e0] sm:$0xff]
    %v3346 = vld [vmem:[%s4 + $0x4e8] sm:$0xff]
    %v3347 = vld [vmem:[%s4 + $0x4f0] sm:$0xff]
    %v3348 = vld [vmem:[%s4 + $0x4f8] sm:$0xff]
    %v3349 = vld [vmem:[%s4 + $0x500] sm:$0xff]
    %v3350 = vld [vmem:[%s4 + $0x508] sm:$0xff]
    %v3351 = vld [vmem:[%s4 + $0x510] sm:$0xff]
    %v3352 = vld [vmem:[%s4 + $0x518] sm:$0xff]
    %v3353 = vld [vmem:[%s4 + $0x520] sm:$0xff]
    %v3354 = vld [vmem:[%s4 + $0x528] sm:$0xff]
    %v3355 = vld [vmem:[%s4 + $0x530] sm:$0xff]
    %v3356 = vld [vmem:[%s4 + $0x538] sm:$0xff]
    %v3357 = vld [vmem:[%s4 + $0x540] sm:$0xff]
    %v3358 = vld [vmem:[%s4 + $0x548] sm:$0xff]
    %v3359 = vld [vmem:[%s4 + $0x550] sm:$0xff]
    %v3360 = vld [vmem:[%s4 + $0x558] sm:$0xff]
    %v3361 = vld [vmem:[%s4 + $0x560] sm:$0xff]
    %v3362 = vld [vmem:[%s4 + $0x568] sm:$0xff]
    %v3363 = vld [vmem:[%s4 + $0x570] sm:$0xff]
    %v3364 = vld [vmem:[%s4 + $0x578] sm:$0xff]
    %v3365 = vld [vmem:[%s4 + $0x580] sm:$0xff]
    %v3366 = vld [vmem:[%s4 + $0x588] sm:$0xff]
    %v3367 = vld [vmem:[%s4 + $0x590] sm:$0xff]
    %v3368 = vld [vmem:[%s4 + $0x598] sm:$0xff]
    %v3369 = vld [vmem:[%s4 + $0x5a0] sm:$0xff]
    %v3370 = vld [vmem:[%s4 + $0x5a8] sm:$0xff]
    %v3371 = vld [vmem:[%s4 + $0x5b0] sm:$0xff]
    %v3372 = vld [vmem:[%s4 + $0x5b8] sm:$0xff]
    %v3373 = vld [vmem:[%s4 + $0x5c0] sm:$0xff]
    %v3374 = vld [vmem:[%s4 + $0x5c8] sm:$0xff]
    %v3375 = vld [vmem:[%s4 + $0x5d0] sm:$0xff]
    %v3376 = vld [vmem:[%s4 + $0x5d8] sm:$0xff]
    %v3377 = vld [vmem:[%s4 + $0x5e0] sm:$0xff]
    %v3378 = vld [vmem:[%s4 + $0x5e8] sm:$0xff]
    %v3379 = vld [vmem:[%s4 + $0x5f0] sm:$0xff]
    %v3380 = vld [vmem:[%s4 + $0x5f8] sm:$0xff]
    %v3381 = vld [vmem:[%s4 + $0x600] sm:$0xff]
    %v3382 = vld [vmem:[%s4 + $0x608] sm:$0xff]
    %v3383 = vld [vmem:[%s4 + $0x610] sm:$0xff]
    %v3384 = vld [vmem:[%s4 + $0x618] sm:$0xff]
    %v3385 = vld [vmem:[%s4 + $0x620] sm:$0xff]
    %v3386 = vld [vmem:[%s4 + $0x628] sm:$0xff]
    %v3387 = vld [vmem:[%s4 + $0x630] sm:$0xff]
    %v3388 = vld [vmem:[%s4 + $0x638] sm:$0xff]
    %v3389 = vld [vmem:[%s4 + $0x640] sm:$0xff]
    %v3390 = vld [vmem:[%s4 + $0x648] sm:$0xff]
    %v3391 = vld [vmem:[%s4 + $0x650] sm:$0xff]
    %v3392 = vld [vmem:[%s4 + $0x658] sm:$0xff]
    %v3393 = vld [vmem:[%s4 + $0x660] sm:$0xff]
    %v3394 = vld [vmem:[%s4 + $0x668] sm:$0xff]
    %v3395 = vld [vmem:[%s4 + $0x670] sm:$0xff]
    %v3396 = vld [vmem:[%s4 + $0x678] sm:$0xff]
    %v3397 = vld [vmem:[%s4 + $0x680] sm:$0xff]
    %v3398 = vld [vmem:[%s4 + $0x688] sm:$0xff]
    %v3399 = vld [vmem:[%s4 + $0x690] sm:$0xff]
    %v3400 = vld [vmem:[%s4 + $0x698] sm:$0xff]
    %v3401 = vld [vmem:[%s4 + $0x6a0] sm:$0xff]
    %v3402 = vld [vmem:[%s4 + $0x6a8] sm:$0xff]
    %v3403 = vld [vmem:[%s4 + $0x6b0] sm:$0xff]
    %v3404 = vld [vmem:[%s4 + $0x6b8] sm:$0xff]
    %v3405 = vld [vmem:[%s4 + $0x6c0] sm:$0xff]
    %v3406 = vld [vmem:[%s4 + $0x6c8] sm:$0xff]
    %v3407 = vld [vmem:[%s4 + $0x6d0] sm:$0xff]
    %v3408 = vld [vmem:[%s4 + $0x6d8] sm:$0xff]
    %v3409 = vld [vmem:[%s4 + $0x6e0] sm:$0xff]
    %v3410 = vld [vmem:[%s4 + $0x6e8] sm:$0xff]
    %v3411 = vld [vmem:[%s4 + $0x6f0] sm:$0xff]
    %v3412 = vld [vmem:[%s4 + $0x6f8] sm:$0xff]
    %v3413 = vld [vmem:[%s4 + $0x700] sm:$0xff]
    %v3414 = vld [vmem:[%s4 + $0x708] sm:$0xff]
    %v3415 = vld [vmem:[%s4 + $0x710] sm:$0xff]
    %v3416 = vld [vmem:[%s4 + $0x718] sm:$0xff]
    %v3417 = vld [vmem:[%s4 + $0x720] sm:$0xff]
    %v3418 = vld [vmem:[%s4 + $0x728] sm:$0xff]
    %v3419 = vld [vmem:[%s4 + $0x730] sm:$0xff]
    %v3420 = vld [vmem:[%s4 + $0x738] sm:$0xff]
    %v3421 = vld [vmem:[%s4 + $0x740] sm:$0xff]
    %v3422 = vld [vmem:[%s4 + $0x748] sm:$0xff]
    %v3423 = vld [vmem:[%s4 + $0x750] sm:$0xff]
    %v3424 = vld [vmem:[%s4 + $0x758] sm:$0xff]
    %v3425 = vld [vmem:[%s4 + $0x760] sm:$0xff]
    %v3426 = vld [vmem:[%s4 + $0x768] sm:$0xff]
    %v3427 = vld [vmem:[%s4 + $0x770] sm:$0xff]
    %v3428 = vld [vmem:[%s4 + $0x778] sm:$0xff]
    %v3429 = vld [vmem:[%s4 + $0x780] sm:$0xff]
    %v3430 = vld [vmem:[%s4 + $0x788] sm:$0xff]
    %v3431 = vld [vmem:[%s4 + $0x790] sm:$0xff]
    %v3432 = vld [vmem:[%s4 + $0x798] sm:$0xff]
    %v3433 = vld [vmem:[%s4 + $0x7a0] sm:$0xff]
    %v3434 = vld [vmem:[%s4 + $0x7a8] sm:$0xff]
    %v3435 = vld [vmem:[%s4 + $0x7b0] sm:$0xff]
    %v3436 = vld [vmem:[%s4 + $0x7b8] sm:$0xff]
    %v3437 = vld [vmem:[%s4 + $0x7c0] sm:$0xff]
    %v3438 = vld [vmem:[%s4 + $0x7c8] sm:$0xff]
    %v3439 = vld [vmem:[%s4 + $0x7d0] sm:$0xff]
    %v3440 = vld [vmem:[%s4 + $0x7d8] sm:$0xff]
    %v3441 = vld [vmem:[%s4 + $0x7e0] sm:$0xff]
    %v3442 = vld [vmem:[%s4 + $0x7e8] sm:$0xff]
    %v3443 = vld [vmem:[%s4 + $0x7f0] sm:$0xff]
    %v3444 = vld [vmem:[%s4 + $0x7f8] sm:$0xff]
    %v3701 = vunpack.c.l.b16 %v3189
    %v3702 = vunpack.c.h.b16 %v3189
    %v3703 = vunpack.c.l.b16 %v3190
    %v3704 = vunpack.c.h.b16 %v3190
    %v3705 = vunpack.c.l.b16 %v3191
    %v3706 = vunpack.c.h.b16 %v3191
    %v3707 = vunpack.c.l.b16 %v3192
    %v3708 = vunpack.c.h.b16 %v3192
    %v3709 = vunpack.c.l.b16 %v3193
    %v3710 = vunpack.c.h.b16 %v3193
    %v3711 = vunpack.c.l.b16 %v3194
    %v3712 = vunpack.c.h.b16 %v3194
    %v3713 = vunpack.c.l.b16 %v3195
    %v3714 = vunpack.c.h.b16 %v3195
    %v3715 = vunpack.c.l.b16 %v3196
    %v3716 = vunpack.c.h.b16 %v3196
    %v3717 = vunpack.c.l.b16 %v3197
    %v3718 = vunpack.c.h.b16 %v3197
    %v3719 = vunpack.c.l.b16 %v3198
    %v3720 = vunpack.c.h.b16 %v3198
    %v3721 = vunpack.c.l.b16 %v3199
    %v3722 = vunpack.c.h.b16 %v3199
    %v3723 = vunpack.c.l.b16 %v3200
    %v3724 = vunpack.c.h.b16 %v3200
    %v3725 = vunpack.c.l.b16 %v3201
    %v3726 = vunpack.c.h.b16 %v3201
    %v3727 = vunpack.c.l.b16 %v3202
    %v3728 = vunpack.c.h.b16 %v3202
    %v3729 = vunpack.c.l.b16 %v3203
    %v3730 = vunpack.c.h.b16 %v3203
    %v3731 = vunpack.c.l.b16 %v3204
    %v3732 = vunpack.c.h.b16 %v3204
    %v3733 = vunpack.c.l.b16 %v3205
    %v3734 = vunpack.c.h.b16 %v3205
    %v3735 = vunpack.c.l.b16 %v3206
    %v3736 = vunpack.c.h.b16 %v3206
    %v3737 = vunpack.c.l.b16 %v3207
    %v3738 = vunpack.c.h.b16 %v3207
    %v3739 = vunpack.c.l.b16 %v3208
    %v3740 = vunpack.c.h.b16 %v3208
    %v3741 = vunpack.c.l.b16 %v3209
    %v3742 = vunpack.c.h.b16 %v3209
    %v3743 = vunpack.c.l.b16 %v3210
    %v3744 = vunpack.c.h.b16 %v3210
    %v3745 = vunpack.c.l.b16 %v3211
    %v3746 = vunpack.c.h.b16 %v3211
    %v3747 = vunpack.c.l.b16 %v3212
    %v3748 = vunpack.c.h.b16 %v3212
    %v3749 = vunpack.c.l.b16 %v3213
    %v3750 = vunpack.c.h.b16 %v3213
    %v3751 = vunpack.c.l.b16 %v3214
    %v3752 = vunpack.c.h.b16 %v3214
    %v3753 = vunpack.c.l.b16 %v3215
    %v3754 = vunpack.c.h.b16 %v3215
    %v3755 = vunpack.c.l.b16 %v3216
    %v3756 = vunpack.c.h.b16 %v3216
    %v3757 = vunpack.c.l.b16 %v3217
    %v3758 = vunpack.c.h.b16 %v3217
    %v3759 = vunpack.c.l.b16 %v3218
    %v3760 = vunpack.c.h.b16 %v3218
    %v3761 = vunpack.c.l.b16 %v3219
    %v3762 = vunpack.c.h.b16 %v3219
    %v3763 = vunpack.c.l.b16 %v3220
    %v3764 = vunpack.c.h.b16 %v3220
    %v3765 = vunpack.c.l.b16 %v3221
    %v3766 = vunpack.c.h.b16 %v3221
    %v3767 = vunpack.c.l.b16 %v3222
    %v3768 = vunpack.c.h.b16 %v3222
    %v3769 = vunpack.c.l.b16 %v3223
    %v3770 = vunpack.c.h.b16 %v3223
    %v3771 = vunpack.c.l.b16 %v3224
    %v3772 = vunpack.c.h.b16 %v3224
    %v3773 = vunpack.c.l.b16 %v3225
    %v3774 = vunpack.c.h.b16 %v3225
    %v3775 = vunpack.c.l.b16 %v3226
    %v3776 = vunpack.c.h.b16 %v3226
    %v3777 = vunpack.c.l.b16 %v3227
    %v3778 = vunpack.c.h.b16 %v3227
    %v3779 = vunpack.c.l.b16 %v3228
    %v3780 = vunpack.c.h.b16 %v3228
    %v3781 = vunpack.c.l.b16 %v3229
    %v3782 = vunpack.c.h.b16 %v3229
    %v3783 = vunpack.c.l.b16 %v3230
    %v3784 = vunpack.c.h.b16 %v3230
    %v3785 = vunpack.c.l.b16 %v3231
    %v3786 = vunpack.c.h.b16 %v3231
    %v3787 = vunpack.c.l.b16 %v3232
    %v3788 = vunpack.c.h.b16 %v3232
    %v3789 = vunpack.c.l.b16 %v3233
    %v3790 = vunpack.c.h.b16 %v3233
    %v3791 = vunpack.c.l.b16 %v3234
    %v3792 = vunpack.c.h.b16 %v3234
    %v3793 = vunpack.c.l.b16 %v3235
    %v3794 = vunpack.c.h.b16 %v3235
    %v3795 = vunpack.c.l.b16 %v3236
    %v3796 = vunpack.c.h.b16 %v3236
    %v3797 = vunpack.c.l.b16 %v3237
    %v3798 = vunpack.c.h.b16 %v3237
    %v3799 = vunpack.c.l.b16 %v3238
    %v3800 = vunpack.c.h.b16 %v3238
    %v3801 = vunpack.c.l.b16 %v3239
    %v3802 = vunpack.c.h.b16 %v3239
    %v3803 = vunpack.c.l.b16 %v3240
    %v3804 = vunpack.c.h.b16 %v3240
    %v3805 = vunpack.c.l.b16 %v3241
    %v3806 = vunpack.c.h.b16 %v3241
    %v3807 = vunpack.c.l.b16 %v3242
    %v3808 = vunpack.c.h.b16 %v3242
    %v3809 = vunpack.c.l.b16 %v3243
    %v3810 = vunpack.c.h.b16 %v3243
    %v3811 = vunpack.c.l.b16 %v3244
    %v3812 = vunpack.c.h.b16 %v3244
    %v3813 = vunpack.c.l.b16 %v3245
    %v3814 = vunpack.c.h.b16 %v3245
    %v3815 = vunpack.c.l.b16 %v3246
    %v3816 = vunpack.c.h.b16 %v3246
    %v3817 = vunpack.c.l.b16 %v3247
    %v3818 = vunpack.c.h.b16 %v3247
    %v3819 = vunpack.c.l.b16 %v3248
    %v3820 = vunpack.c.h.b16 %v3248
    %v3821 = vunpack.c.l.b16 %v3249
    %v3822 = vunpack.c.h.b16 %v3249
    %v3823 = vunpack.c.l.b16 %v3250
    %v3824 = vunpack.c.h.b16 %v3250
    %v3825 = vunpack.c.l.b16 %v3251
    %v3826 = vunpack.c.h.b16 %v3251
    %v3827 = vunpack.c.l.b16 %v3252
    %v3828 = vunpack.c.h.b16 %v3252
    %v3829 = vunpack.c.l.b16 %v3253
    %v3830 = vunpack.c.h.b16 %v3253
    %v3831 = vunpack.c.l.b16 %v3254
    %v3832 = vunpack.c.h.b16 %v3254
    %v3833 = vunpack.c.l.b16 %v3255
    %v3834 = vunpack.c.h.b16 %v3255
    %v3835 = vunpack.c.l.b16 %v3256
    %v3836 = vunpack.c.h.b16 %v3256
    %v3837 = vunpack.c.l.b16 %v3257
    %v3838 = vunpack.c.h.b16 %v3257
    %v3839 = vunpack.c.l.b16 %v3258
    %v3840 = vunpack.c.h.b16 %v3258
    %v3841 = vunpack.c.l.b16 %v3259
    %v3842 = vunpack.c.h.b16 %v3259
    %v3843 = vunpack.c.l.b16 %v3260
    %v3844 = vunpack.c.h.b16 %v3260
    %v3845 = vunpack.c.l.b16 %v3261
    %v3846 = vunpack.c.h.b16 %v3261
    %v3847 = vunpack.c.l.b16 %v3262
    %v3848 = vunpack.c.h.b16 %v3262
    %v3849 = vunpack.c.l.b16 %v3263
    %v3850 = vunpack.c.h.b16 %v3263
    %v3851 = vunpack.c.l.b16 %v3264
    %v3852 = vunpack.c.h.b16 %v3264
    %v3853 = vunpack.c.l.b16 %v3265
    %v3854 = vunpack.c.h.b16 %v3265
    %v3855 = vunpack.c.l.b16 %v3266
    %v3856 = vunpack.c.h.b16 %v3266
    %v3857 = vunpack.c.l.b16 %v3267
    %v3858 = vunpack.c.h.b16 %v3267
    %v3859 = vunpack.c.l.b16 %v3268
    %v3860 = vunpack.c.h.b16 %v3268
    %v3861 = vunpack.c.l.b16 %v3269
    %v3862 = vunpack.c.h.b16 %v3269
    %v3863 = vunpack.c.l.b16 %v3270
    %v3864 = vunpack.c.h.b16 %v3270
    %v3865 = vunpack.c.l.b16 %v3271
    %v3866 = vunpack.c.h.b16 %v3271
    %v3867 = vunpack.c.l.b16 %v3272
    %v3868 = vunpack.c.h.b16 %v3272
    %v3869 = vunpack.c.l.b16 %v3273
    %v3870 = vunpack.c.h.b16 %v3273
    %v3871 = vunpack.c.l.b16 %v3274
    %v3872 = vunpack.c.h.b16 %v3274
    %v3873 = vunpack.c.l.b16 %v3275
    %v3874 = vunpack.c.h.b16 %v3275
    %v3875 = vunpack.c.l.b16 %v3276
    %v3876 = vunpack.c.h.b16 %v3276
    %v3877 = vunpack.c.l.b16 %v3277
    %v3878 = vunpack.c.h.b16 %v3277
    %v3879 = vunpack.c.l.b16 %v3278
    %v3880 = vunpack.c.h.b16 %v3278
    %v3881 = vunpack.c.l.b16 %v3279
    %v3882 = vunpack.c.h.b16 %v3279
    %v3883 = vunpack.c.l.b16 %v3280
    %v3884 = vunpack.c.h.b16 %v3280
    %v3885 = vunpack.c.l.b16 %v3281
    %v3886 = vunpack.c.h.b16 %v3281
    %v3887 = vunpack.c.l.b16 %v3282
    %v3888 = vunpack.c.h.b16 %v3282
    %v3889 = vunpack.c.l.b16 %v3283
    %v3890 = vunpack.c.h.b16 %v3283
    %v3891 = vunpack.c.l.b16 %v3284
    %v3892 = vunpack.c.h.b16 %v3284
    %v3893 = vunpack.c.l.b16 %v3285
    %v3894 = vunpack.c.h.b16 %v3285
    %v3895 = vunpack.c.l.b16 %v3286
    %v3896 = vunpack.c.h.b16 %v3286
    %v3897 = vunpack.c.l.b16 %v3287
    %v3898 = vunpack.c.h.b16 %v3287
    %v3899 = vunpack.c.l.b16 %v3288
    %v3900 = vunpack.c.h.b16 %v3288
    %v3901 = vunpack.c.l.b16 %v3289
    %v3902 = vunpack.c.h.b16 %v3289
    %v3903 = vunpack.c.l.b16 %v3290
    %v3904 = vunpack.c.h.b16 %v3290
    %v3905 = vunpack.c.l.b16 %v3291
    %v3906 = vunpack.c.h.b16 %v3291
    %v3907 = vunpack.c.l.b16 %v3292
    %v3908 = vunpack.c.h.b16 %v3292
    %v3909 = vunpack.c.l.b16 %v3293
    %v3910 = vunpack.c.h.b16 %v3293
    %v3911 = vunpack.c.l.b16 %v3294
    %v3912 = vunpack.c.h.b16 %v3294
    %v3913 = vunpack.c.l.b16 %v3295
    %v3914 = vunpack.c.h.b16 %v3295
    %v3915 = vunpack.c.l.b16 %v3296
    %v3916 = vunpack.c.h.b16 %v3296
    %v3917 = vunpack.c.l.b16 %v3297
    %v3918 = vunpack.c.h.b16 %v3297
    %v3919 = vunpack.c.l.b16 %v3298
    %v3920 = vunpack.c.h.b16 %v3298
    %v3921 = vunpack.c.l.b16 %v3299
    %v3922 = vunpack.c.h.b16 %v3299
    %v3923 = vunpack.c.l.b16 %v3300
    %v3924 = vunpack.c.h.b16 %v3300
    %v3925 = vunpack.c.l.b16 %v3301
    %v3926 = vunpack.c.h.b16 %v3301
    %v3927 = vunpack.c.l.b16 %v3302
    %v3928 = vunpack.c.h.b16 %v3302
    %v3929 = vunpack.c.l.b16 %v3303
    %v3930 = vunpack.c.h.b16 %v3303
    %v3931 = vunpack.c.l.b16 %v3304
    %v3932 = vunpack.c.h.b16 %v3304
    %v3933 = vunpack.c.l.b16 %v3305
    %v3934 = vunpack.c.h.b16 %v3305
    %v3935 = vunpack.c.l.b16 %v3306
    %v3936 = vunpack.c.h.b16 %v3306
    %v3937 = vunpack.c.l.b16 %v3307
    %v3938 = vunpack.c.h.b16 %v3307
    %v3939 = vunpack.c.l.b16 %v3308
    %v3940 = vunpack.c.h.b16 %v3308
    %v3941 = vunpack.c.l.b16 %v3309
    %v3942 = vunpack.c.h.b16 %v3309
    %v3943 = vunpack.c.l.b16 %v3310
    %v3944 = vunpack.c.h.b16 %v3310
    %v3945 = vunpack.c.l.b16 %v3311
    %v3946 = vunpack.c.h.b16 %v3311
    %v3947 = vunpack.c.l.b16 %v3312
    %v3948 = vunpack.c.h.b16 %v3312
    %v3949 = vunpack.c.l.b16 %v3313
    %v3950 = vunpack.c.h.b16 %v3313
    %v3951 = vunpack.c.l.b16 %v3314
    %v3952 = vunpack.c.h.b16 %v3314
    %v3953 = vunpack.c.l.b16 %v3315
    %v3954 = vunpack.c.h.b16 %v3315
    %v3955 = vunpack.c.l.b16 %v3316
    %v3956 = vunpack.c.h.b16 %v3316
    %v3957 = vunpack.c.l.b16 %v3317
    %v3958 = vunpack.c.h.b16 %v3317
    %v3959 = vunpack.c.l.b16 %v3318
    %v3960 = vunpack.c.h.b16 %v3318
    %v3961 = vunpack.c.l.b16 %v3319
    %v3962 = vunpack.c.h.b16 %v3319
    %v3963 = vunpack.c.l.b16 %v3320
    %v3964 = vunpack.c.h.b16 %v3320
    %v3965 = vunpack.c.l.b16 %v3321
    %v3966 = vunpack.c.h.b16 %v3321
    %v3967 = vunpack.c.l.b16 %v3322
    %v3968 = vunpack.c.h.b16 %v3322
    %v3969 = vunpack.c.l.b16 %v3323
    %v3970 = vunpack.c.h.b16 %v3323
    %v3971 = vunpack.c.l.b16 %v3324
    %v3972 = vunpack.c.h.b16 %v3324
    %v3973 = vunpack.c.l.b16 %v3325
    %v3974 = vunpack.c.h.b16 %v3325
    %v3975 = vunpack.c.l.b16 %v3326
    %v3976 = vunpack.c.h.b16 %v3326
    %v3977 = vunpack.c.l.b16 %v3327
    %v3978 = vunpack.c.h.b16 %v3327
    %v3979 = vunpack.c.l.b16 %v3328
    %v3980 = vunpack.c.h.b16 %v3328
    %v3981 = vunpack.c.l.b16 %v3329
    %v3982 = vunpack.c.h.b16 %v3329
    %v3983 = vunpack.c.l.b16 %v3330
    %v3984 = vunpack.c.h.b16 %v3330
    %v3985 = vunpack.c.l.b16 %v3331
    %v3986 = vunpack.c.h.b16 %v3331
    %v3987 = vunpack.c.l.b16 %v3332
    %v3988 = vunpack.c.h.b16 %v3332
    %v3989 = vunpack.c.l.b16 %v3333
    %v3990 = vunpack.c.h.b16 %v3333
    %v3991 = vunpack.c.l.b16 %v3334
    %v3992 = vunpack.c.h.b16 %v3334
    %v3993 = vunpack.c.l.b16 %v3335
    %v3994 = vunpack.c.h.b16 %v3335
    %v3995 = vunpack.c.l.b16 %v3336
    %v3996 = vunpack.c.h.b16 %v3336
    %v3997 = vunpack.c.l.b16 %v3337
    %v3998 = vunpack.c.h.b16 %v3337
    %v3999 = vunpack.c.l.b16 %v3338
    %v4000 = vunpack.c.h.b16 %v3338
    %v4001 = vunpack.c.l.b16 %v3339
    %v4002 = vunpack.c.h.b16 %v3339
    %v4003 = vunpack.c.l.b16 %v3340
    %v4004 = vunpack.c.h.b16 %v3340
    %v4005 = vunpack.c.l.b16 %v3341
    %v4006 = vunpack.c.h.b16 %v3341
    %v4007 = vunpack.c.l.b16 %v3342
    %v4008 = vunpack.c.h.b16 %v3342
    %v4009 = vunpack.c.l.b16 %v3343
    %v4010 = vunpack.c.h.b16 %v3343
    %v4011 = vunpack.c.l.b16 %v3344
    %v4012 = vunpack.c.h.b16 %v3344
    %v4013 = vunpack.c.l.b16 %v3345
    %v4014 = vunpack.c.h.b16 %v3345
    %v4015 = vunpack.c.l.b16 %v3346
    %v4016 = vunpack.c.h.b16 %v3346
    %v4017 = vunpack.c.l.b16 %v3347
    %v4018 = vunpack.c.h.b16 %v3347
    %v4019 = vunpack.c.l.b16 %v3348
    %v4020 = vunpack.c.h.b16 %v3348
    %v4021 = vunpack.c.l.b16 %v3349
    %v4022 = vunpack.c.h.b16 %v3349
    %v4023 = vunpack.c.l.b16 %v3350
    %v4024 = vunpack.c.h.b16 %v3350
    %v4025 = vunpack.c.l.b16 %v3351
    %v4026 = vunpack.c.h.b16 %v3351
    %v4027 = vunpack.c.l.b16 %v3352
    %v4028 = vunpack.c.h.b16 %v3352
    %v4029 = vunpack.c.l.b16 %v3353
    %v4030 = vunpack.c.h.b16 %v3353
    %v4031 = vunpack.c.l.b16 %v3354
    %v4032 = vunpack.c.h.b16 %v3354
    %v4033 = vunpack.c.l.b16 %v3355
    %v4034 = vunpack.c.h.b16 %v3355
    %v4035 = vunpack.c.l.b16 %v3356
    %v4036 = vunpack.c.h.b16 %v3356
    %v4037 = vunpack.c.l.b16 %v3357
    %v4038 = vunpack.c.h.b16 %v3357
    %v4039 = vunpack.c.l.b16 %v3358
    %v4040 = vunpack.c.h.b16 %v3358
    %v4041 = vunpack.c.l.b16 %v3359
    %v4042 = vunpack.c.h.b16 %v3359
    %v4043 = vunpack.c.l.b16 %v3360
    %v4044 = vunpack.c.h.b16 %v3360
    %v4045 = vunpack.c.l.b16 %v3361
    %v4046 = vunpack.c.h.b16 %v3361
    %v4047 = vunpack.c.l.b16 %v3362
    %v4048 = vunpack.c.h.b16 %v3362
    %v4049 = vunpack.c.l.b16 %v3363
    %v4050 = vunpack.c.h.b16 %v3363
    %v4051 = vunpack.c.l.b16 %v3364
    %v4052 = vunpack.c.h.b16 %v3364
    %v4053 = vunpack.c.l.b16 %v3365
    %v4054 = vunpack.c.h.b16 %v3365
    %v4055 = vunpack.c.l.b16 %v3366
    %v4056 = vunpack.c.h.b16 %v3366
    %v4057 = vunpack.c.l.b16 %v3367
    %v4058 = vunpack.c.h.b16 %v3367
    %v4059 = vunpack.c.l.b16 %v3368
    %v4060 = vunpack.c.h.b16 %v3368
    %v4061 = vunpack.c.l.b16 %v3369
    %v4062 = vunpack.c.h.b16 %v3369
    %v4063 = vunpack.c.l.b16 %v3370
    %v4064 = vunpack.c.h.b16 %v3370
    %v4065 = vunpack.c.l.b16 %v3371
    %v4066 = vunpack.c.h.b16 %v3371
    %v4067 = vunpack.c.l.b16 %v3372
    %v4068 = vunpack.c.h.b16 %v3372
    %v4069 = vunpack.c.l.b16 %v3373
    %v4070 = vunpack.c.h.b16 %v3373
    %v4071 = vunpack.c.l.b16 %v3374
    %v4072 = vunpack.c.h.b16 %v3374
    %v4073 = vunpack.c.l.b16 %v3375
    %v4074 = vunpack.c.h.b16 %v3375
    %v4075 = vunpack.c.l.b16 %v3376
    %v4076 = vunpack.c.h.b16 %v3376
    %v4077 = vunpack.c.l.b16 %v3377
    %v4078 = vunpack.c.h.b16 %v3377
    %v4079 = vunpack.c.l.b16 %v3378
    %v4080 = vunpack.c.h.b16 %v3378
    %v4081 = vunpack.c.l.b16 %v3379
    %v4082 = vunpack.c.h.b16 %v3379
    %v4083 = vunpack.c.l.b16 %v3380
    %v4084 = vunpack.c.h.b16 %v3380
    %v4085 = vunpack.c.l.b16 %v3381
    %v4086 = vunpack.c.h.b16 %v3381
    %v4087 = vunpack.c.l.b16 %v3382
    %v4088 = vunpack.c.h.b16 %v3382
    %v4089 = vunpack.c.l.b16 %v3383
    %v4090 = vunpack.c.h.b16 %v3383
    %v4091 = vunpack.c.l.b16 %v3384
    %v4092 = vunpack.c.h.b16 %v3384
    %v4093 = vunpack.c.l.b16 %v3385
    %v4094 = vunpack.c.h.b16 %v3385
    %v4095 = vunpack.c.l.b16 %v3386
    %v4096 = vunpack.c.h.b16 %v3386
    %v4097 = vunpack.c.l.b16 %v3387
    %v4098 = vunpack.c.h.b16 %v3387
    %v4099 = vunpack.c.l.b16 %v3388
    %v4100 = vunpack.c.h.b16 %v3388
    %v4101 = vunpack.c.l.b16 %v3389
    %v4102 = vunpack.c.h.b16 %v3389
    %v4103 = vunpack.c.l.b16 %v3390
    %v4104 = vunpack.c.h.b16 %v3390
    %v4105 = vunpack.c.l.b16 %v3391
    %v4106 = vunpack.c.h.b16 %v3391
    %v4107 = vunpack.c.l.b16 %v3392
    %v4108 = vunpack.c.h.b16 %v3392
    %v4109 = vunpack.c.l.b16 %v3393
    %v4110 = vunpack.c.h.b16 %v3393
    %v4111 = vunpack.c.l.b16 %v3394
    %v4112 = vunpack.c.h.b16 %v3394
    %v4113 = vunpack.c.l.b16 %v3395
    %v4114 = vunpack.c.h.b16 %v3395
    %v4115 = vunpack.c.l.b16 %v3396
    %v4116 = vunpack.c.h.b16 %v3396
    %v4117 = vunpack.c.l.b16 %v3397
    %v4118 = vunpack.c.h.b16 %v3397
    %v4119 = vunpack.c.l.b16 %v3398
    %v4120 = vunpack.c.h.b16 %v3398
    %v4121 = vunpack.c.l.b16 %v3399
    %v4122 = vunpack.c.h.b16 %v3399
    %v4123 = vunpack.c.l.b16 %v3400
    %v4124 = vunpack.c.h.b16 %v3400
    %v4125 = vunpack.c.l.b16 %v3401
    %v4126 = vunpack.c.h.b16 %v3401
    %v4127 = vunpack.c.l.b16 %v3402
    %v4128 = vunpack.c.h.b16 %v3402
    %v4129 = vunpack.c.l.b16 %v3403
    %v4130 = vunpack.c.h.b16 %v3403
    %v4131 = vunpack.c.l.b16 %v3404
    %v4132 = vunpack.c.h.b16 %v3404
    %v4133 = vunpack.c.l.b16 %v3405
    %v4134 = vunpack.c.h.b16 %v3405
    %v4135 = vunpack.c.l.b16 %v3406
    %v4136 = vunpack.c.h.b16 %v3406
    %v4137 = vunpack.c.l.b16 %v3407
    %v4138 = vunpack.c.h.b16 %v3407
    %v4139 = vunpack.c.l.b16 %v3408
    %v4140 = vunpack.c.h.b16 %v3408
    %v4141 = vunpack.c.l.b16 %v3409
    %v4142 = vunpack.c.h.b16 %v3409
    %v4143 = vunpack.c.l.b16 %v3410
    %v4144 = vunpack.c.h.b16 %v3410
    %v4145 = vunpack.c.l.b16 %v3411
    %v4146 = vunpack.c.h.b16 %v3411
    %v4147 = vunpack.c.l.b16 %v3412
    %v4148 = vunpack.c.h.b16 %v3412
    %v4149 = vunpack.c.l.b16 %v3413
    %v4150 = vunpack.c.h.b16 %v3413
    %v4151 = vunpack.c.l.b16 %v3414
    %v4152 = vunpack.c.h.b16 %v3414
    %v4153 = vunpack.c.l.b16 %v3415
    %v4154 = vunpack.c.h.b16 %v3415
    %v4155 = vunpack.c.l.b16 %v3416
    %v4156 = vunpack.c.h.b16 %v3416
    %v4157 = vunpack.c.l.b16 %v3417
    %v4158 = vunpack.c.h.b16 %v3417
    %v4159 = vunpack.c.l.b16 %v3418
    %v4160 = vunpack.c.h.b16 %v3418
    %v4161 = vunpack.c.l.b16 %v3419
    %v4162 = vunpack.c.h.b16 %v3419
    %v4163 = vunpack.c.l.b16 %v3420
    %v4164 = vunpack.c.h.b16 %v3420
    %v4165 = vunpack.c.l.b16 %v3421
    %v4166 = vunpack.c.h.b16 %v3421
    %v4167 = vunpack.c.l.b16 %v3422
    %v4168 = vunpack.c.h.b16 %v3422
    %v4169 = vunpack.c.l.b16 %v3423
    %v4170 = vunpack.c.h.b16 %v3423
    %v4171 = vunpack.c.l.b16 %v3424
    %v4172 = vunpack.c.h.b16 %v3424
    %v4173 = vunpack.c.l.b16 %v3425
    %v4174 = vunpack.c.h.b16 %v3425
    %v4175 = vunpack.c.l.b16 %v3426
    %v4176 = vunpack.c.h.b16 %v3426
    %v4177 = vunpack.c.l.b16 %v3427
    %v4178 = vunpack.c.h.b16 %v3427
    %v4179 = vunpack.c.l.b16 %v3428
    %v4180 = vunpack.c.h.b16 %v3428
    %v4181 = vunpack.c.l.b16 %v3429
    %v4182 = vunpack.c.h.b16 %v3429
    %v4183 = vunpack.c.l.b16 %v3430
    %v4184 = vunpack.c.h.b16 %v3430
    %v4185 = vunpack.c.l.b16 %v3431
    %v4186 = vunpack.c.h.b16 %v3431
    %v4187 = vunpack.c.l.b16 %v3432
    %v4188 = vunpack.c.h.b16 %v3432
    %v4189 = vunpack.c.l.b16 %v3433
    %v4190 = vunpack.c.h.b16 %v3433
    %v4191 = vunpack.c.l.b16 %v3434
    %v4192 = vunpack.c.h.b16 %v3434
    %v4193 = vunpack.c.l.b16 %v3435
    %v4194 = vunpack.c.h.b16 %v3435
    %v4195 = vunpack.c.l.b16 %v3436
    %v4196 = vunpack.c.h.b16 %v3436
    %v4197 = vunpack.c.l.b16 %v3437
    %v4198 = vunpack.c.h.b16 %v3437
    %v4199 = vunpack.c.l.b16 %v3438
    %v4200 = vunpack.c.h.b16 %v3438
    %v4201 = vunpack.c.l.b16 %v3439
    %v4202 = vunpack.c.h.b16 %v3439
    %v4203 = vunpack.c.l.b16 %v3440
    %v4204 = vunpack.c.h.b16 %v3440
    %v4205 = vunpack.c.l.b16 %v3441
    %v4206 = vunpack.c.h.b16 %v3441
    %v4207 = vunpack.c.l.b16 %v3442
    %v4208 = vunpack.c.h.b16 %v3442
    %v4209 = vunpack.c.l.b16 %v3443
    %v4210 = vunpack.c.h.b16 %v3443
    %v4211 = vunpack.c.l.b16 %v3444
    %v4212 = vunpack.c.h.b16 %v3444
    %v4213 = vpack.c.b16 %v3705, %v3701
    %v4214 = vpack.c.b16 %v3706, %v3702
    %v4215 = vpack.c.b16 %v3707, %v3703
    %v4216 = vpack.c.b16 %v3708, %v3704
    %v4217 = vpack.c.b16 %v3713, %v3709
    %v4218 = vpack.c.b16 %v3714, %v3710
    %v4219 = vpack.c.b16 %v3715, %v3711
    %v4220 = vpack.c.b16 %v3716, %v3712
    %v4221 = vpack.c.b16 %v3721, %v3717
    %v4222 = vpack.c.b16 %v3722, %v3718
    %v4223 = vpack.c.b16 %v3723, %v3719
    %v4224 = vpack.c.b16 %v3724, %v3720
    %v4225 = vpack.c.b16 %v3729, %v3725
    %v4226 = vpack.c.b16 %v3730, %v3726
    %v4227 = vpack.c.b16 %v3731, %v3727
    %v4228 = vpack.c.b16 %v3732, %v3728
    %v4229 = vpack.c.b16 %v3737, %v3733
    %v4230 = vpack.c.b16 %v3738, %v3734
    %v4231 = vpack.c.b16 %v3739, %v3735
    %v4232 = vpack.c.b16 %v3740, %v3736
    %v4233 = vpack.c.b16 %v3745, %v3741
    %v4234 = vpack.c.b16 %v3746, %v3742
    %v4235 = vpack.c.b16 %v3747, %v3743
    %v4236 = vpack.c.b16 %v3748, %v3744
    %v4237 = vpack.c.b16 %v3753, %v3749
    %v4238 = vpack.c.b16 %v3754, %v3750
    %v4239 = vpack.c.b16 %v3755, %v3751
    %v4240 = vpack.c.b16 %v3756, %v3752
    %v4241 = vpack.c.b16 %v3761, %v3757
    %v4242 = vpack.c.b16 %v3762, %v3758
    %v4243 = vpack.c.b16 %v3763, %v3759
    %v4244 = vpack.c.b16 %v3764, %v3760
    %v4245 = vpack.c.b16 %v3769, %v3765
    %v4246 = vpack.c.b16 %v3770, %v3766
    %v4247 = vpack.c.b16 %v3771, %v3767
    %v4248 = vpack.c.b16 %v3772, %v3768
    %v4249 = vpack.c.b16 %v3777, %v3773
    %v4250 = vpack.c.b16 %v3778, %v3774
    %v4251 = vpack.c.b16 %v3779, %v3775
    %v4252 = vpack.c.b16 %v3780, %v3776
    %v4253 = vpack.c.b16 %v3785, %v3781
    %v4254 = vpack.c.b16 %v3786, %v3782
    %v4255 = vpack.c.b16 %v3787, %v3783
    %v4256 = vpack.c.b16 %v3788, %v3784
    %v4257 = vpack.c.b16 %v3793, %v3789
    %v4258 = vpack.c.b16 %v3794, %v3790
    %v4259 = vpack.c.b16 %v3795, %v3791
    %v4260 = vpack.c.b16 %v3796, %v3792
    %v4261 = vpack.c.b16 %v3801, %v3797
    %v4262 = vpack.c.b16 %v3802, %v3798
    %v4263 = vpack.c.b16 %v3803, %v3799
    %v4264 = vpack.c.b16 %v3804, %v3800
    %v4265 = vpack.c.b16 %v3809, %v3805
    %v4266 = vpack.c.b16 %v3810, %v3806
    %v4267 = vpack.c.b16 %v3811, %v3807
    %v4268 = vpack.c.b16 %v3812, %v3808
    %v4269 = vpack.c.b16 %v3817, %v3813
    %v4270 = vpack.c.b16 %v3818, %v3814
    %v4271 = vpack.c.b16 %v3819, %v3815
    %v4272 = vpack.c.b16 %v3820, %v3816
    %v4273 = vpack.c.b16 %v3825, %v3821
    %v4274 = vpack.c.b16 %v3826, %v3822
    %v4275 = vpack.c.b16 %v3827, %v3823
    %v4276 = vpack.c.b16 %v3828, %v3824
    %v4277 = vpack.c.b16 %v3833, %v3829
    %v4278 = vpack.c.b16 %v3834, %v3830
    %v4279 = vpack.c.b16 %v3835, %v3831
    %v4280 = vpack.c.b16 %v3836, %v3832
    %v4281 = vpack.c.b16 %v3841, %v3837
    %v4282 = vpack.c.b16 %v3842, %v3838
    %v4283 = vpack.c.b16 %v3843, %v3839
    %v4284 = vpack.c.b16 %v3844, %v3840
    %v4285 = vpack.c.b16 %v3849, %v3845
    %v4286 = vpack.c.b16 %v3850, %v3846
    %v4287 = vpack.c.b16 %v3851, %v3847
    %v4288 = vpack.c.b16 %v3852, %v3848
    %v4289 = vpack.c.b16 %v3857, %v3853
    %v4290 = vpack.c.b16 %v3858, %v3854
    %v4291 = vpack.c.b16 %v3859, %v3855
    %v4292 = vpack.c.b16 %v3860, %v3856
    %v4293 = vpack.c.b16 %v3865, %v3861
    %v4294 = vpack.c.b16 %v3866, %v3862
    %v4295 = vpack.c.b16 %v3867, %v3863
    %v4296 = vpack.c.b16 %v3868, %v3864
    %v4297 = vpack.c.b16 %v3873, %v3869
    %v4298 = vpack.c.b16 %v3874, %v3870
    %v4299 = vpack.c.b16 %v3875, %v3871
    %v4300 = vpack.c.b16 %v3876, %v3872
    %v4301 = vpack.c.b16 %v3881, %v3877
    %v4302 = vpack.c.b16 %v3882, %v3878
    %v4303 = vpack.c.b16 %v3883, %v3879
    %v4304 = vpack.c.b16 %v3884, %v3880
    %v4305 = vpack.c.b16 %v3889, %v3885
    %v4306 = vpack.c.b16 %v3890, %v3886
    %v4307 = vpack.c.b16 %v3891, %v3887
    %v4308 = vpack.c.b16 %v3892, %v3888
    %v4309 = vpack.c.b16 %v3897, %v3893
    %v4310 = vpack.c.b16 %v3898, %v3894
    %v4311 = vpack.c.b16 %v3899, %v3895
    %v4312 = vpack.c.b16 %v3900, %v3896
    %v4313 = vpack.c.b16 %v3905, %v3901
    %v4314 = vpack.c.b16 %v3906, %v3902
    %v4315 = vpack.c.b16 %v3907, %v3903
    %v4316 = vpack.c.b16 %v3908, %v3904
    %v4317 = vpack.c.b16 %v3913, %v3909
    %v4318 = vpack.c.b16 %v3914, %v3910
    %v4319 = vpack.c.b16 %v3915, %v3911
    %v4320 = vpack.c.b16 %v3916, %v3912
    %v4321 = vpack.c.b16 %v3921, %v3917
    %v4322 = vpack.c.b16 %v3922, %v3918
    %v4323 = vpack.c.b16 %v3923, %v3919
    %v4324 = vpack.c.b16 %v3924, %v3920
    %v4325 = vpack.c.b16 %v3929, %v3925
    %v4326 = vpack.c.b16 %v3930, %v3926
    %v4327 = vpack.c.b16 %v3931, %v3927
    %v4328 = vpack.c.b16 %v3932, %v3928
    %v4329 = vpack.c.b16 %v3937, %v3933
    %v4330 = vpack.c.b16 %v3938, %v3934
    %v4331 = vpack.c.b16 %v3939, %v3935
    %v4332 = vpack.c.b16 %v3940, %v3936
    %v4333 = vpack.c.b16 %v3945, %v3941
    %v4334 = vpack.c.b16 %v3946, %v3942
    %v4335 = vpack.c.b16 %v3947, %v3943
    %v4336 = vpack.c.b16 %v3948, %v3944
    %v4337 = vpack.c.b16 %v3953, %v3949
    %v4338 = vpack.c.b16 %v3954, %v3950
    %v4339 = vpack.c.b16 %v3955, %v3951
    %v4340 = vpack.c.b16 %v3956, %v3952
    %v4341 = vpack.c.b16 %v3961, %v3957
    %v4342 = vpack.c.b16 %v3962, %v3958
    %v4343 = vpack.c.b16 %v3963, %v3959
    %v4344 = vpack.c.b16 %v3964, %v3960
    %v4345 = vpack.c.b16 %v3969, %v3965
    %v4346 = vpack.c.b16 %v3970, %v3966
    %v4347 = vpack.c.b16 %v3971, %v3967
    %v4348 = vpack.c.b16 %v3972, %v3968
    %v4349 = vpack.c.b16 %v3977, %v3973
    %v4350 = vpack.c.b16 %v3978, %v3974
    %v4351 = vpack.c.b16 %v3979, %v3975
    %v4352 = vpack.c.b16 %v3980, %v3976
    %v4353 = vpack.c.b16 %v3985, %v3981
    %v4354 = vpack.c.b16 %v3986, %v3982
    %v4355 = vpack.c.b16 %v3987, %v3983
    %v4356 = vpack.c.b16 %v3988, %v3984
    %v4357 = vpack.c.b16 %v3993, %v3989
    %v4358 = vpack.c.b16 %v3994, %v3990
    %v4359 = vpack.c.b16 %v3995, %v3991
    %v4360 = vpack.c.b16 %v3996, %v3992
    %v4361 = vpack.c.b16 %v4001, %v3997
    %v4362 = vpack.c.b16 %v4002, %v3998
    %v4363 = vpack.c.b16 %v4003, %v3999
    %v4364 = vpack.c.b16 %v4004, %v4000
    %v4365 = vpack.c.b16 %v4009, %v4005
    %v4366 = vpack.c.b16 %v4010, %v4006
    %v4367 = vpack.c.b16 %v4011, %v4007
    %v4368 = vpack.c.b16 %v4012, %v4008
    %v4369 = vpack.c.b16 %v4017, %v4013
    %v4370 = vpack.c.b16 %v4018, %v4014
    %v4371 = vpack.c.b16 %v4019, %v4015
    %v4372 = vpack.c.b16 %v4020, %v4016
    %v4373 = vpack.c.b16 %v4025, %v4021
    %v4374 = vpack.c.b16 %v4026, %v4022
    %v4375 = vpack.c.b16 %v4027, %v4023
    %v4376 = vpack.c.b16 %v4028, %v4024
    %v4377 = vpack.c.b16 %v4033, %v4029
    %v4378 = vpack.c.b16 %v4034, %v4030
    %v4379 = vpack.c.b16 %v4035, %v4031
    %v4380 = vpack.c.b16 %v4036, %v4032
    %v4381 = vpack.c.b16 %v4041, %v4037
    %v4382 = vpack.c.b16 %v4042, %v4038
    %v4383 = vpack.c.b16 %v4043, %v4039
    %v4384 = vpack.c.b16 %v4044, %v4040
    %v4385 = vpack.c.b16 %v4049, %v4045
    %v4386 = vpack.c.b16 %v4050, %v4046
    %v4387 = vpack.c.b16 %v4051, %v4047
    %v4388 = vpack.c.b16 %v4052, %v4048
    %v4389 = vpack.c.b16 %v4057, %v4053
    %v4390 = vpack.c.b16 %v4058, %v4054
    %v4391 = vpack.c.b16 %v4059, %v4055
    %v4392 = vpack.c.b16 %v4060, %v4056
    %v4393 = vpack.c.b16 %v4065, %v4061
    %v4394 = vpack.c.b16 %v4066, %v4062
    %v4395 = vpack.c.b16 %v4067, %v4063
    %v4396 = vpack.c.b16 %v4068, %v4064
    %v4397 = vpack.c.b16 %v4073, %v4069
    %v4398 = vpack.c.b16 %v4074, %v4070
    %v4399 = vpack.c.b16 %v4075, %v4071
    %v4400 = vpack.c.b16 %v4076, %v4072
    %v4401 = vpack.c.b16 %v4081, %v4077
    %v4402 = vpack.c.b16 %v4082, %v4078
    %v4403 = vpack.c.b16 %v4083, %v4079
    %v4404 = vpack.c.b16 %v4084, %v4080
    %v4405 = vpack.c.b16 %v4089, %v4085
    %v4406 = vpack.c.b16 %v4090, %v4086
    %v4407 = vpack.c.b16 %v4091, %v4087
    %v4408 = vpack.c.b16 %v4092, %v4088
    %v4409 = vpack.c.b16 %v4097, %v4093
    %v4410 = vpack.c.b16 %v4098, %v4094
    %v4411 = vpack.c.b16 %v4099, %v4095
    %v4412 = vpack.c.b16 %v4100, %v4096
    %v4413 = vpack.c.b16 %v4105, %v4101
    %v4414 = vpack.c.b16 %v4106, %v4102
    %v4415 = vpack.c.b16 %v4107, %v4103
    %v4416 = vpack.c.b16 %v4108, %v4104
    %v4417 = vpack.c.b16 %v4113, %v4109
    %v4418 = vpack.c.b16 %v4114, %v4110
    %v4419 = vpack.c.b16 %v4115, %v4111
    %v4420 = vpack.c.b16 %v4116, %v4112
    %v4421 = vpack.c.b16 %v4121, %v4117
    %v4422 = vpack.c.b16 %v4122, %v4118
    %v4423 = vpack.c.b16 %v4123, %v4119
    %v4424 = vpack.c.b16 %v4124, %v4120
    %v4425 = vpack.c.b16 %v4129, %v4125
    %v4426 = vpack.c.b16 %v4130, %v4126
    %v4427 = vpack.c.b16 %v4131, %v4127
    %v4428 = vpack.c.b16 %v4132, %v4128
    %v4429 = vpack.c.b16 %v4137, %v4133
    %v4430 = vpack.c.b16 %v4138, %v4134
    %v4431 = vpack.c.b16 %v4139, %v4135
    %v4432 = vpack.c.b16 %v4140, %v4136
    %v4433 = vpack.c.b16 %v4145, %v4141
    %v4434 = vpack.c.b16 %v4146, %v4142
    %v4435 = vpack.c.b16 %v4147, %v4143
    %v4436 = vpack.c.b16 %v4148, %v4144
    %v4437 = vpack.c.b16 %v4153, %v4149
    %v4438 = vpack.c.b16 %v4154, %v4150
    %v4439 = vpack.c.b16 %v4155, %v4151
    %v4440 = vpack.c.b16 %v4156, %v4152
    %v4441 = vpack.c.b16 %v4161, %v4157
    %v4442 = vpack.c.b16 %v4162, %v4158
    %v4443 = vpack.c.b16 %v4163, %v4159
    %v4444 = vpack.c.b16 %v4164, %v4160
    %v4445 = vpack.c.b16 %v4169, %v4165
    %v4446 = vpack.c.b16 %v4170, %v4166
    %v4447 = vpack.c.b16 %v4171, %v4167
    %v4448 = vpack.c.b16 %v4172, %v4168
    %v4449 = vpack.c.b16 %v4177, %v4173
    %v4450 = vpack.c.b16 %v4178, %v4174
    %v4451 = vpack.c.b16 %v4179, %v4175
    %v4452 = vpack.c.b16 %v4180, %v4176
    %v4453 = vpack.c.b16 %v4185, %v4181
    %v4454 = vpack.c.b16 %v4186, %v4182
    %v4455 = vpack.c.b16 %v4187, %v4183
    %v4456 = vpack.c.b16 %v4188, %v4184
    %v4457 = vpack.c.b16 %v4193, %v4189
    %v4458 = vpack.c.b16 %v4194, %v4190
    %v4459 = vpack.c.b16 %v4195, %v4191
    %v4460 = vpack.c.b16 %v4196, %v4192
    %v4461 = vpack.c.b16 %v4201, %v4197
    %v4462 = vpack.c.b16 %v4202, %v4198
    %v4463 = vpack.c.b16 %v4203, %v4199
    %v4464 = vpack.c.b16 %v4204, %v4200
    %v4465 = vpack.c.b16 %v4209, %v4205
    %v4466 = vpack.c.b16 %v4210, %v4206
    %v4467 = vpack.c.b16 %v4211, %v4207
    %v4468 = vpack.c.b16 %v4212, %v4208
    %4725 = vmatprep.subr.bf16.mxu0 %v4214
    %4726 = vmatpush1.bf16.msra.mxu0 %v4213
    %4727 = vmatprep.subr.bf16.mxu0 %v4218
    %4728 = vmatpush1.bf16.msra.mxu0 %v4217
    %4729 = vmatprep.subr.bf16.mxu0 %v4222
    %4730 = vmatpush1.bf16.msra.mxu0 %v4221
    %4731 = vmatprep.subr.bf16.mxu0 %v4226
    %4732 = vmatpush1.bf16.msra.mxu0 %v4225
    %4733 = vmatprep.subr.bf16.mxu0 %v4230
    %4734 = vmatpush1.bf16.msra.mxu0 %v4229
    %4735 = vmatprep.subr.bf16.mxu0 %v4234
    %4736 = vmatpush1.bf16.msra.mxu0 %v4233
    %4737 = vmatprep.subr.bf16.mxu0 %v4238
    %4738 = vmatpush1.bf16.msra.mxu0 %v4237
    %4739 = vmatprep.subr.bf16.mxu0 %v4242
    %4740 = vmatpush1.bf16.msra.mxu0 %v4241
    %4741 = vmatprep.subr.bf16.mxu0 %v4246
    %4742 = vmatpush1.bf16.msra.mxu0 %v4245
    %4743 = vmatprep.subr.bf16.mxu0 %v4250
    %4744 = vmatpush1.bf16.msra.mxu0 %v4249
    %4745 = vmatprep.subr.bf16.mxu0 %v4254
    %4746 = vmatpush1.bf16.msra.mxu0 %v4253
    %4747 = vmatprep.subr.bf16.mxu0 %v4258
    %4748 = vmatpush1.bf16.msra.mxu0 %v4257
    %4749 = vmatprep.subr.bf16.mxu0 %v4262
    %4750 = vmatpush1.bf16.msra.mxu0 %v4261
    %4751 = vmatprep.subr.bf16.mxu0 %v4266
    %4752 = vmatpush1.bf16.msra.mxu0 %v4265
    %4753 = vmatprep.subr.bf16.mxu0 %v4270
    %4754 = vmatpush1.bf16.msra.mxu0 %v4269
    %4755 = vmatprep.subr.bf16.mxu0 %v4274
    %4756 = vmatpush1.bf16.msra.mxu0 %v4273
    %4757 = vmatprep.mubr.bf16.mxu0 %v3182
    %4758 = vmatmul.mubr.bf16.gmra.mrb[0].mxu0 %v3181
    %v4759 = vpop.f32.mrb[0].mxu0
    %v4760 = vadd.f32 0.0, %v4759
    %v4761 = vpop.f32.mrb[0].mxu0
    %v4762 = vadd.f32 0.0, %v4761
    %v4763 = vpop.f32.mrb[0].mxu0
    %v4764 = vpop.f32.mrb[0].mxu0
    %4765 = vdwg.mxu0
    %4766 = vmatprep.subr.bf16.mxu0 %v4278
    %4767 = vmatpush1.bf16.msra.mxu0 %v4277
    %4768 = vmatprep.subr.bf16.mxu0 %v4282
    %4769 = vmatpush1.bf16.msra.mxu0 %v4281
    %4770 = vmatprep.subr.bf16.mxu0 %v4286
    %4771 = vmatpush1.bf16.msra.mxu0 %v4285
    %4772 = vmatprep.subr.bf16.mxu0 %v4290
    %4773 = vmatpush1.bf16.msra.mxu0 %v4289
    %4774 = vmatprep.subr.bf16.mxu0 %v4294
    %4775 = vmatpush1.bf16.msra.mxu0 %v4293
    %4776 = vmatprep.subr.bf16.mxu0 %v4298
    %4777 = vmatpush1.bf16.msra.mxu0 %v4297
    %4778 = vmatprep.subr.bf16.mxu0 %v4302
    %4779 = vmatpush1.bf16.msra.mxu0 %v4301
    %4780 = vmatprep.subr.bf16.mxu0 %v4306
    %4781 = vmatpush1.bf16.msra.mxu0 %v4305
    %4782 = vmatprep.subr.bf16.mxu0 %v4310
    %4783 = vmatpush1.bf16.msra.mxu0 %v4309
    %4784 = vmatprep.subr.bf16.mxu0 %v4314
    %4785 = vmatpush1.bf16.msra.mxu0 %v4313
    %4786 = vmatprep.subr.bf16.mxu0 %v4318
    %4787 = vmatpush1.bf16.msra.mxu0 %v4317
    %4788 = vmatprep.subr.bf16.mxu0 %v4322
    %4789 = vmatpush1.bf16.msra.mxu0 %v4321
    %4790 = vmatprep.subr.bf16.mxu0 %v4326
    %4791 = vmatpush1.bf16.msra.mxu0 %v4325
    %4792 = vmatprep.subr.bf16.mxu0 %v4330
    %4793 = vmatpush1.bf16.msra.mxu0 %v4329
    %4794 = vmatprep.subr.bf16.mxu0 %v4334
    %4795 = vmatpush1.bf16.msra.mxu0 %v4333
    %4796 = vmatprep.subr.bf16.mxu0 %v4338
    %4797 = vmatpush1.bf16.msra.mxu0 %v4337
    %4798 = vmatprep.mubr.bf16.mxu0 %v3184
    %4799 = vmatmul.mubr.bf16.gmra.mrb[0].mxu0 %v3183
    %v4800 = vpop.f32.mrb[0].mxu0
    %v4801 = vadd.f32 %v4760, %v4800
    %v4802 = vpop.f32.mrb[0].mxu0
    %v4803 = vadd.f32 %v4762, %v4802
    %v4804 = vpop.f32.mrb[0].mxu0
    %v4805 = vpop.f32.mrb[0].mxu0
    %4806 = vdwg.mxu0
    %4807 = vmatprep.subr.bf16.mxu0 %v4342
    %4808 = vmatpush1.bf16.msra.mxu0 %v4341
    %4809 = vmatprep.subr.bf16.mxu0 %v4346
    %4810 = vmatpush1.bf16.msra.mxu0 %v4345
    %4811 = vmatprep.subr.bf16.mxu0 %v4350
    %4812 = vmatpush1.bf16.msra.mxu0 %v4349
    %4813 = vmatprep.subr.bf16.mxu0 %v4354
    %4814 = vmatpush1.bf16.msra.mxu0 %v4353
    %4815 = vmatprep.subr.bf16.mxu0 %v4358
    %4816 = vmatpush1.bf16.msra.mxu0 %v4357
    %4817 = vmatprep.subr.bf16.mxu0 %v4362
    %4818 = vmatpush1.bf16.msra.mxu0 %v4361
    %4819 = vmatprep.subr.bf16.mxu0 %v4366
    %4820 = vmatpush1.bf16.msra.mxu0 %v4365
    %4821 = vmatprep.subr.bf16.mxu0 %v4370
    %4822 = vmatpush1.bf16.msra.mxu0 %v4369
    %4823 = vmatprep.subr.bf16.mxu0 %v4374
    %4824 = vmatpush1.bf16.msra.mxu0 %v4373
    %4825 = vmatprep.subr.bf16.mxu0 %v4378
    %4826 = vmatpush1.bf16.msra.mxu0 %v4377
    %4827 = vmatprep.subr.bf16.mxu0 %v4382
    %4828 = vmatpush1.bf16.msra.mxu0 %v4381
    %4829 = vmatprep.subr.bf16.mxu0 %v4386
    %4830 = vmatpush1.bf16.msra.mxu0 %v4385
    %4831 = vmatprep.subr.bf16.mxu0 %v4390
    %4832 = vmatpush1.bf16.msra.mxu0 %v4389
    %4833 = vmatprep.subr.bf16.mxu0 %v4394
    %4834 = vmatpush1.bf16.msra.mxu0 %v4393
    %4835 = vmatprep.subr.bf16.mxu0 %v4398
    %4836 = vmatpush1.bf16.msra.mxu0 %v4397
    %4837 = vmatprep.subr.bf16.mxu0 %v4402
    %4838 = vmatpush1.bf16.msra.mxu0 %v4401
    %4839 = vmatprep.mubr.bf16.mxu0 %v3186
    %4840 = vmatmul.mubr.bf16.gmra.mrb[0].mxu0 %v3185
    %v4841 = vpop.f32.mrb[0].mxu0
    %v4842 = vadd.f32 %v4801, %v4841
    %v4843 = vpop.f32.mrb[0].mxu0
    %v4844 = vadd.f32 %v4803, %v4843
    %v4845 = vpop.f32.mrb[0].mxu0
    %v4846 = vpop.f32.mrb[0].mxu0
    %4847 = vdwg.mxu0
    %4848 = vmatprep.subr.bf16.mxu0 %v4406
    %4849 = vmatpush1.bf16.msra.mxu0 %v4405
    %4850 = vmatprep.subr.bf16.mxu0 %v4410
    %4851 = vmatpush1.bf16.msra.mxu0 %v4409
    %4852 = vmatprep.subr.bf16.mxu0 %v4414
    %4853 = vmatpush1.bf16.msra.mxu0 %v4413
    %4854 = vmatprep.subr.bf16.mxu0 %v4418
    %4855 = vmatpush1.bf16.msra.mxu0 %v4417
    %4856 = vmatprep.subr.bf16.mxu0 %v4422
    %4857 = vmatpush1.bf16.msra.mxu0 %v4421
    %4858 = vmatprep.subr.bf16.mxu0 %v4426
    %4859 = vmatpush1.bf16.msra.mxu0 %v4425
    %4860 = vmatprep.subr.bf16.mxu0 %v4430
    %4861 = vmatpush1.bf16.msra.mxu0 %v4429
    %4862 = vmatprep.subr.bf16.mxu0 %v4434
    %4863 = vmatpush1.bf16.msra.mxu0 %v4433
    %4864 = vmatprep.subr.bf16.mxu0 %v4438
    %4865 = vmatpush1.bf16.msra.mxu0 %v4437
    %4866 = vmatprep.subr.bf16.mxu0 %v4442
    %4867 = vmatpush1.bf16.msra.mxu0 %v4441
    %4868 = vmatprep.subr.bf16.mxu0 %v4446
    %4869 = vmatpush1.bf16.msra.mxu0 %v4445
    %4870 = vmatprep.subr.bf16.mxu0 %v4450
    %4871 = vmatpush1.bf16.msra.mxu0 %v4449
    %4872 = vmatprep.subr.bf16.mxu0 %v4454
    %4873 = vmatpush1.bf16.msra.mxu0 %v4453
    %4874 = vmatprep.subr.bf16.mxu0 %v4458
    %4875 = vmatpush1.bf16.msra.mxu0 %v4457
    %4876 = vmatprep.subr.bf16.mxu0 %v4462
    %4877 = vmatpush1.bf16.msra.mxu0 %v4461
    %4878 = vmatprep.subr.bf16.mxu0 %v4466
    %4879 = vmatpush1.bf16.msra.mxu0 %v4465
    %4880 = vmatprep.mubr.bf16.mxu0 %v3188
    %4881 = vmatmul.mubr.bf16.gmra.mrb[0].mxu0 %v3187
    %v4882 = vpop.f32.mrb[0].mxu0
    %v4883 = vadd.f32 %v4842, %v4882
    %v4884 = vpop.f32.mrb[0].mxu0
    %v4885 = vadd.f32 %v4844, %v4884
    %v4886 = vpop.f32.mrb[0].mxu0
    %v4887 = vpop.f32.mrb[0].mxu0
    %4888 = vdwg.mxu0
    %4889 = vmatprep.subr.bf16.mxu0 %v4216
    %4890 = vmatpush1.bf16.msra.mxu0 %v4215
    %4891 = vmatprep.subr.bf16.mxu0 %v4220
    %4892 = vmatpush1.bf16.msra.mxu0 %v4219
    %4893 = vmatprep.subr.bf16.mxu0 %v4224
    %4894 = vmatpush1.bf16.msra.mxu0 %v4223
    %4895 = vmatprep.subr.bf16.mxu0 %v4228
    %4896 = vmatpush1.bf16.msra.mxu0 %v4227
    %4897 = vmatprep.subr.bf16.mxu0 %v4232
    %4898 = vmatpush1.bf16.msra.mxu0 %v4231
    %4899 = vmatprep.subr.bf16.mxu0 %v4236
    %4900 = vmatpush1.bf16.msra.mxu0 %v4235
    %4901 = vmatprep.subr.bf16.mxu0 %v4240
    %4902 = vmatpush1.bf16.msra.mxu0 %v4239
    %4903 = vmatprep.subr.bf16.mxu0 %v4244
    %4904 = vmatpush1.bf16.msra.mxu0 %v4243
    %4905 = vmatprep.subr.bf16.mxu0 %v4248
    %4906 = vmatpush1.bf16.msra.mxu0 %v4247
    %4907 = vmatprep.subr.bf16.mxu0 %v4252
    %4908 = vmatpush1.bf16.msra.mxu0 %v4251
    %4909 = vmatprep.subr.bf16.mxu0 %v4256
    %4910 = vmatpush1.bf16.msra.mxu0 %v4255
    %4911 = vmatprep.subr.bf16.mxu0 %v4260
    %4912 = vmatpush1.bf16.msra.mxu0 %v4259
    %4913 = vmatprep.subr.bf16.mxu0 %v4264
    %4914 = vmatpush1.bf16.msra.mxu0 %v4263
    %4915 = vmatprep.subr.bf16.mxu0 %v4268
    %4916 = vmatpush1.bf16.msra.mxu0 %v4267
    %4917 = vmatprep.subr.bf16.mxu0 %v4272
    %4918 = vmatpush1.bf16.msra.mxu0 %v4271
    %4919 = vmatprep.subr.bf16.mxu0 %v4276
    %4920 = vmatpush1.bf16.msra.mxu0 %v4275
    %4921 = vmatprep.mubr.bf16.mxu0 %v3182
    %4922 = vmatmul.mubr.bf16.gmra.mrb[0].mxu0 %v3181
    %v4923 = vpop.f32.mrb[0].mxu0
    %v4924 = vadd.f32 0.0, %v4923
    %v4925 = vpop.f32.mrb[0].mxu0
    %v4926 = vadd.f32 0.0, %v4925
    %v4927 = vpop.f32.mrb[0].mxu0
    %v4928 = vpop.f32.mrb[0].mxu0
    %4929 = vdwg.mxu0
    %4930 = vmatprep.subr.bf16.mxu0 %v4280
    %4931 = vmatpush1.bf16.msra.mxu0 %v4279
    %4932 = vmatprep.subr.bf16.mxu0 %v4284
    %4933 = vmatpush1.bf16.msra.mxu0 %v4283
    %4934 = vmatprep.subr.bf16.mxu0 %v4288
    %4935 = vmatpush1.bf16.msra.mxu0 %v4287
    %4936 = vmatprep.subr.bf16.mxu0 %v4292
    %4937 = vmatpush1.bf16.msra.mxu0 %v4291
    %4938 = vmatprep.subr.bf16.mxu0 %v4296
    %4939 = vmatpush1.bf16.msra.mxu0 %v4295
    %4940 = vmatprep.subr.bf16.mxu0 %v4300
    %4941 = vmatpush1.bf16.msra.mxu0 %v4299
    %4942 = vmatprep.subr.bf16.mxu0 %v4304
    %4943 = vmatpush1.bf16.msra.mxu0 %v4303
    %4944 = vmatprep.subr.bf16.mxu0 %v4308
    %4945 = vmatpush1.bf16.msra.mxu0 %v4307
    %4946 = vmatprep.subr.bf16.mxu0 %v4312
    %4947 = vmatpush1.bf16.msra.mxu0 %v4311
    %4948 = vmatprep.subr.bf16.mxu0 %v4316
    %4949 = vmatpush1.bf16.msra.mxu0 %v4315
    %4950 = vmatprep.subr.bf16.mxu0 %v4320
    %4951 = vmatpush1.bf16.msra.mxu0 %v4319
    %4952 = vmatprep.subr.bf16.mxu0 %v4324
    %4953 = vmatpush1.bf16.msra.mxu0 %v4323
    %4954 = vmatprep.subr.bf16.mxu0 %v4328
    %4955 = vmatpush1.bf16.msra.mxu0 %v4327
    %4956 = vmatprep.subr.bf16.mxu0 %v4332
    %4957 = vmatpush1.bf16.msra.mxu0 %v4331
    %4958 = vmatprep.subr.bf16.mxu0 %v4336
    %4959 = vmatpush1.bf16.msra.mxu0 %v4335
    %4960 = vmatprep.subr.bf16.mxu0 %v4340
    %4961 = vmatpush1.bf16.msra.mxu0 %v4339
    %4962 = vmatprep.mubr.bf16.mxu0 %v3184
    %4963 = vmatmul.mubr.bf16.gmra.mrb[0].mxu0 %v3183
    %v4964 = vpop.f32.mrb[0].mxu0
    %v4965 = vadd.f32 %v4924, %v4964
    %v4966 = vpop.f32.mrb[0].mxu0
    %v4967 = vadd.f32 %v4926, %v4966
    %v4968 = vpop.f32.mrb[0].mxu0
    %v4969 = vpop.f32.mrb[0].mxu0
    %4970 = vdwg.mxu0
    %4971 = vmatprep.subr.bf16.mxu0 %v4344
    %4972 = vmatpush1.bf16.msra.mxu0 %v4343
    %4973 = vmatprep.subr.bf16.mxu0 %v4348
    %4974 = vmatpush1.bf16.msra.mxu0 %v4347
    %4975 = vmatprep.subr.bf16.mxu0 %v4352
    %4976 = vmatpush1.bf16.msra.mxu0 %v4351
    %4977 = vmatprep.subr.bf16.mxu0 %v4356
    %4978 = vmatpush1.bf16.msra.mxu0 %v4355
    %4979 = vmatprep.subr.bf16.mxu0 %v4360
    %4980 = vmatpush1.bf16.msra.mxu0 %v4359
    %4981 = vmatprep.subr.bf16.mxu0 %v4364
    %4982 = vmatpush1.bf16.msra.mxu0 %v4363
    %4983 = vmatprep.subr.bf16.mxu0 %v4368
    %4984 = vmatpush1.bf16.msra.mxu0 %v4367
    %4985 = vmatprep.subr.bf16.mxu0 %v4372
    %4986 = vmatpush1.bf16.msra.mxu0 %v4371
    %4987 = vmatprep.subr.bf16.mxu0 %v4376
    %4988 = vmatpush1.bf16.msra.mxu0 %v4375
    %4989 = vmatprep.subr.bf16.mxu0 %v4380
    %4990 = vmatpush1.bf16.msra.mxu0 %v4379
    %4991 = vmatprep.subr.bf16.mxu0 %v4384
    %4992 = vmatpush1.bf16.msra.mxu0 %v4383
    %4993 = vmatprep.subr.bf16.mxu0 %v4388
    %4994 = vmatpush1.bf16.msra.mxu0 %v4387
    %4995 = vmatprep.subr.bf16.mxu0 %v4392
    %4996 = vmatpush1.bf16.msra.mxu0 %v4391
    %4997 = vmatprep.subr.bf16.mxu0 %v4396
    %4998 = vmatpush1.bf16.msra.mxu0 %v4395
    %4999 = vmatprep.subr.bf16.mxu0 %v4400
    %5000 = vmatpush1.bf16.msra.mxu0 %v4399
    %5001 = vmatprep.subr.bf16.mxu0 %v4404
    %5002 = vmatpush1.bf16.msra.mxu0 %v4403
    %5003 = vmatprep.mubr.bf16.mxu0 %v3186
    %5004 = vmatmul.mubr.bf16.gmra.mrb[0].mxu0 %v3185
    %v5005 = vpop.f32.mrb[0].mxu0
    %v5006 = vadd.f32 %v4965, %v5005
    %v5007 = vpop.f32.mrb[0].mxu0
    %v5008 = vadd.f32 %v4967, %v5007
    %v5009 = vpop.f32.mrb[0].mxu0
    %v5010 = vpop.f32.mrb[0].mxu0
    %5011 = vdwg.mxu0
    %5012 = vmatprep.subr.bf16.mxu0 %v4408
    %5013 = vmatpush1.bf16.msra.mxu0 %v4407
    %5014 = vmatprep.subr.bf16.mxu0 %v4412
    %5015 = vmatpush1.bf16.msra.mxu0 %v4411
    %5016 = vmatprep.subr.bf16.mxu0 %v4416
    %5017 = vmatpush1.bf16.msra.mxu0 %v4415
    %5018 = vmatprep.subr.bf16.mxu0 %v4420
    %5019 = vmatpush1.bf16.msra.mxu0 %v4419
    %5020 = vmatprep.subr.bf16.mxu0 %v4424
    %5021 = vmatpush1.bf16.msra.mxu0 %v4423
    %5022 = vmatprep.subr.bf16.mxu0 %v4428
    %5023 = vmatpush1.bf16.msra.mxu0 %v4427
    %5024 = vmatprep.subr.bf16.mxu0 %v4432
    %5025 = vmatpush1.bf16.msra.mxu0 %v4431
    %5026 = vmatprep.subr.bf16.mxu0 %v4436
    %5027 = vmatpush1.bf16.msra.mxu0 %v4435
    %5028 = vmatprep.subr.bf16.mxu0 %v4440
    %5029 = vmatpush1.bf16.msra.mxu0 %v4439
    %5030 = vmatprep.subr.bf16.mxu0 %v4444
    %5031 = vmatpush1.bf16.msra.mxu0 %v4443
    %5032 = vmatprep.subr.bf16.mxu0 %v4448
    %5033 = vmatpush1.bf16.msra.mxu0 %v4447
    %5034 = vmatprep.subr.bf16.mxu0 %v4452
    %5035 = vmatpush1.bf16.msra.mxu0 %v4451
    %5036 = vmatprep.subr.bf16.mxu0 %v4456
    %5037 = vmatpush1.bf16.msra.mxu0 %v4455
    %5038 = vmatprep.subr.bf16.mxu0 %v4460
    %5039 = vmatpush1.bf16.msra.mxu0 %v4459
    %5040 = vmatprep.subr.bf16.mxu0 %v4464
    %5041 = vmatpush1.bf16.msra.mxu0 %v4463
    %5042 = vmatprep.subr.bf16.mxu0 %v4468
    %5043 = vmatpush1.bf16.msra.mxu0 %v4467
    %5044 = vmatprep.mubr.bf16.mxu0 %v3188
    %5045 = vmatmul.mubr.bf16.gmra.mrb[0].mxu0 %v3187
    %v5046 = vpop.f32.mrb[0].mxu0
    %v5047 = vadd.f32 %v5006, %v5046
    %v5048 = vpop.f32.mrb[0].mxu0
    %v5049 = vadd.f32 %v5008, %v5048
    %v5050 = vpop.f32.mrb[0].mxu0
    %v5051 = vpop.f32.mrb[0].mxu0
    %5052 = vdwg.mxu0
    %v5053 = vsel %vm2871, %v4883, 0.0
    %v5054 = vrot.slane %v5053, 4
    %v5055 = vadd.f32 %v5053, %v5054
    %v5056 = vrot.slane %v5055, 2
    %v5057 = vadd.f32 %v5055, %v5056
    %v5058 = vrot.slane %v5057, 1
    %v5059 = vadd.f32 %v5057, %v5058
    %v5060 = vsel %vm2871, %v4885, 0.0
    %v5061 = vrot.slane %v5060, 4
    %v5062 = vadd.f32 %v5060, %v5061
    %v5063 = vrot.slane %v5062, 2
    %v5064 = vadd.f32 %v5062, %v5063
    %v5065 = vrot.slane %v5064, 1
    %v5066 = vadd.f32 %v5064, %v5065
    %v5067 = vsel %vm2871, %v5047, 0.0
    %v5068 = vrot.slane %v5067, 4
    %v5069 = vadd.f32 %v5067, %v5068
    %v5070 = vrot.slane %v5069, 2
    %v5071 = vadd.f32 %v5069, %v5070
    %v5072 = vrot.slane %v5071, 1
    %v5073 = vadd.f32 %v5071, %v5072
    %v5074 = vsel %vm2871, %v5049, 0.0
    %v5075 = vrot.slane %v5074, 4
    %v5076 = vadd.f32 %v5074, %v5075
    %v5077 = vrot.slane %v5076, 2
    %v5078 = vadd.f32 %v5076, %v5077
    %v5079 = vrot.slane %v5078, 1
    %v5080 = vadd.f32 %v5078, %v5079
    %v5081 = vmul.f32 %v5059, %v2928
    %v5082 = vmul.f32 %v5066, %v2928
    %v5083 = vmul.f32 %v5073, %v2928
    %v5084 = vmul.f32 %v5080, %v2928
    %v5085 = vsub.f32 %v4883, %v5081
    %v5086 = vsub.f32 %v4885, %v5082
    %v5087 = vsub.f32 %v5047, %v5083
    %v5088 = vsub.f32 %v5049, %v5084
    %v5089 = vmul.f32 %v5085, %v5085
    %v5090 = vmul.f32 %v5086, %v5086
    %v5091 = vmul.f32 %v5087, %v5087
    %v5092 = vmul.f32 %v5088, %v5088
    %v5093 = vsel %vm2871, %v5089, 0.0
    %v5094 = vrot.slane %v5093, 4
    %v5095 = vadd.f32 %v5093, %v5094
    %v5096 = vrot.slane %v5095, 2
    %v5097 = vadd.f32 %v5095, %v5096
    %v5098 = vrot.slane %v5097, 1
    %v5099 = vadd.f32 %v5097, %v5098
    %v5100 = vsel %vm2871, %v5090, 0.0
    %v5101 = vrot.slane %v5100, 4
    %v5102 = vadd.f32 %v5100, %v5101
    %v5103 = vrot.slane %v5102, 2
    %v5104 = vadd.f32 %v5102, %v5103
    %v5105 = vrot.slane %v5104, 1
    %v5106 = vadd.f32 %v5104, %v5105
    %v5107 = vsel %vm2871, %v5091, 0.0
    %v5108 = vrot.slane %v5107, 4
    %v5109 = vadd.f32 %v5107, %v5108
    %v5110 = vrot.slane %v5109, 2
    %v5111 = vadd.f32 %v5109, %v5110
    %v5112 = vrot.slane %v5111, 1
    %v5113 = vadd.f32 %v5111, %v5112
    %v5114 = vsel %vm2871, %v5092, 0.0
    %v5115 = vrot.slane %v5114, 4
    %v5116 = vadd.f32 %v5114, %v5115
    %v5117 = vrot.slane %v5116, 2
    %v5118 = vadd.f32 %v5116, %v5117
    %v5119 = vrot.slane %v5118, 1
    %v5120 = vadd.f32 %v5118, %v5119
    %v5121 = vmul.f32 %v5099, %v2928
    %v5122 = vmul.f32 %v5106, %v2928
    %v5123 = vmul.f32 %v5113, %v2928
    %v5124 = vmul.f32 %v5120, %v2928
    %v5125 = vadd.f32 %v5121, 1e-05
    %v5126 = vadd.f32 %v5122, 1e-05
    %v5127 = vadd.f32 %v5123, 1e-05
    %v5128 = vadd.f32 %v5124, 1e-05
    %v5129 = vrsqrt.pop %v5125
    %v5130 = vrsqrt.pop %v5126
    %v5131 = vrsqrt.pop %v5127
    %v5132 = vrsqrt.pop %v5128
    %v5133 = vld [vmem:[%s5] sm:$0xf]
    %v5135 = vlaneseq
    %v5136 = vshrl.u32 %v5135, 7
    %v5137 = vsub.s32 0, %v5136
    %v5138 = vrot.slane %v5133, %v5137
    %v5139 = vlaneseq
    %v5140 = vshrl.u32 %v5139, 7
    %v5141 = vsub.s32 1, %v5140
    %v5142 = vrot.slane %v5133, %v5141
    %v5143 = vlaneseq
    %v5144 = vshrl.u32 %v5143, 7
    %v5145 = vsub.s32 2, %v5144
    %v5146 = vrot.slane %v5133, %v5145
    %v5147 = vlaneseq
    %v5148 = vshrl.u32 %v5147, 7
    %v5149 = vsub.s32 3, %v5148
    %v5150 = vrot.slane %v5133, %v5149
    %v5155 = vmul.f32 %v5129, %v5138
    %v5156 = vmul.f32 %v5130, %v5142
    %v5157 = vmul.f32 %v5131, %v5146
    %v5158 = vmul.f32 %v5132, %v5150
    %v5159 = vlaneseq
    %v5160 = vshrl.u32 %v5159, 7
    %v5161 = vsub.s32 0, %v5160
    %v5162 = vrot.slane %v5155, %v5161
    %v5163 = vlaneseq
    %v5164 = vshrl.u32 %v5163, 7
    %v5165 = vsub.s32 0, %v5164
    %v5166 = vrot.slane %v5156, %v5165
    %v5167 = vlaneseq
    %v5168 = vshrl.u32 %v5167, 7
    %v5169 = vsub.s32 0, %v5168
    %v5170 = vrot.slane %v5157, %v5169
    %v5171 = vlaneseq
    %v5172 = vshrl.u32 %v5171, 7
    %v5173 = vsub.s32 0, %v5172
    %v5174 = vrot.slane %v5158, %v5173
    %v5175 = vmul.f32 %v5085, %v5162
    %v5176 = vmul.f32 %v5086, %v5166
    %v5177 = vmul.f32 %v5087, %v5170
    %v5178 = vmul.f32 %v5088, %v5174
    %v5179 = vld [vmem:[%s6] sm:$0xf]
    %v5181 = vlaneseq
    %v5182 = vshrl.u32 %v5181, 7
    %v5183 = vsub.s32 0, %v5182
    %v5184 = vrot.slane %v5179, %v5183
    %v5185 = vlaneseq
    %v5186 = vshrl.u32 %v5185, 7
    %v5187 = vsub.s32 1, %v5186
    %v5188 = vrot.slane %v5179, %v5187
    %v5189 = vlaneseq
    %v5190 = vshrl.u32 %v5189, 7
    %v5191 = vsub.s32 2, %v5190
    %v5192 = vrot.slane %v5179, %v5191
    %v5193 = vlaneseq
    %v5194 = vshrl.u32 %v5193, 7
    %v5195 = vsub.s32 3, %v5194
    %v5196 = vrot.slane %v5179, %v5195
    %v5201 = vadd.f32 %v5175, %v5184
    %v5202 = vadd.f32 %v5176, %v5188
    %v5203 = vadd.f32 %v5177, %v5192
    %v5204 = vadd.f32 %v5178, %v5196
    %v5205 = vmax.f32 %v5201, 0.0
    %v5206 = vmax.f32 %v5202, 0.0
    %v5207 = vmax.f32 %v5203, 0.0
    %v5208 = vmax.f32 %v5204, 0.0
    %v5209 = vpack.c.bf16 %v5205, %v5205
    %v5210 = vpack.c.bf16 %v5206, %v5206
    %v5211 = vpack.c.bf16 %v5207, %v5207
    %v5212 = vpack.c.bf16 %v5208, %v5208
    %v5213 = vld [vmem:[%s7] sm:$0xf]
    %v5214 = vld [vmem:[%s7 + $0x4] sm:$0xf]
    %v5215 = vld [vmem:[%s7 + $0x8] sm:$0xf]
    %v5216 = vld [vmem:[%s7 + $0xc] sm:$0xf]
    %v5217 = vld [vmem:[%s7 + $0x10] sm:$0xf]
    %v5218 = vld [vmem:[%s7 + $0x14] sm:$0xf]
    %v5219 = vld [vmem:[%s7 + $0x18] sm:$0xf]
    %v5220 = vld [vmem:[%s7 + $0x1c] sm:$0xf]
    %v5221 = vld [vmem:[%s7 + $0x20] sm:$0xf]
    %v5222 = vld [vmem:[%s7 + $0x24] sm:$0xf]
    %v5223 = vld [vmem:[%s7 + $0x28] sm:$0xf]
    %v5224 = vld [vmem:[%s7 + $0x2c] sm:$0xf]
    %v5225 = vld [vmem:[%s7 + $0x30] sm:$0xf]
    %v5226 = vld [vmem:[%s7 + $0x34] sm:$0xf]
    %v5227 = vld [vmem:[%s7 + $0x38] sm:$0xf]
    %v5228 = vld [vmem:[%s7 + $0x3c] sm:$0xf]
    %v5229 = vld [vmem:[%s7 + $0x40] sm:$0xf]
    %v5230 = vld [vmem:[%s7 + $0x44] sm:$0xf]
    %v5231 = vld [vmem:[%s7 + $0x48] sm:$0xf]
    %v5232 = vld [vmem:[%s7 + $0x4c] sm:$0xf]
    %v5233 = vld [vmem:[%s7 + $0x50] sm:$0xf]
    %v5234 = vld [vmem:[%s7 + $0x54] sm:$0xf]
    %v5235 = vld [vmem:[%s7 + $0x58] sm:$0xf]
    %v5236 = vld [vmem:[%s7 + $0x5c] sm:$0xf]
    %v5237 = vld [vmem:[%s7 + $0x60] sm:$0xf]
    %v5238 = vld [vmem:[%s7 + $0x64] sm:$0xf]
    %v5239 = vld [vmem:[%s7 + $0x68] sm:$0xf]
    %v5240 = vld [vmem:[%s7 + $0x6c] sm:$0xf]
    %v5241 = vld [vmem:[%s7 + $0x70] sm:$0xf]
    %v5242 = vld [vmem:[%s7 + $0x74] sm:$0xf]
    %v5243 = vld [vmem:[%s7 + $0x78] sm:$0xf]
    %v5244 = vld [vmem:[%s7 + $0x7c] sm:$0xf]
    %v5245 = vld [vmem:[%s7 + $0x80] sm:$0xf]
    %v5246 = vld [vmem:[%s7 + $0x84] sm:$0xf]
    %v5247 = vld [vmem:[%s7 + $0x88] sm:$0xf]
    %v5248 = vld [vmem:[%s7 + $0x8c] sm:$0xf]
    %v5249 = vld [vmem:[%s7 + $0x90] sm:$0xf]
    %v5250 = vld [vmem:[%s7 + $0x94] sm:$0xf]
    %v5251 = vld [vmem:[%s7 + $0x98] sm:$0xf]
    %v5252 = vld [vmem:[%s7 + $0x9c] sm:$0xf]
    %v5253 = vld [vmem:[%s7 + $0xa0] sm:$0xf]
    %v5254 = vld [vmem:[%s7 + $0xa4] sm:$0xf]
    %v5255 = vld [vmem:[%s7 + $0xa8] sm:$0xf]
    %v5256 = vld [vmem:[%s7 + $0xac] sm:$0xf]
    %v5257 = vld [vmem:[%s7 + $0xb0] sm:$0xf]
    %v5258 = vld [vmem:[%s7 + $0xb4] sm:$0xf]
    %v5259 = vld [vmem:[%s7 + $0xb8] sm:$0xf]
    %v5260 = vld [vmem:[%s7 + $0xbc] sm:$0xf]
    %v5261 = vld [vmem:[%s7 + $0xc0] sm:$0xf]
    %v5262 = vld [vmem:[%s7 + $0xc4] sm:$0xf]
    %v5263 = vld [vmem:[%s7 + $0xc8] sm:$0xf]
    %v5264 = vld [vmem:[%s7 + $0xcc] sm:$0xf]
    %v5265 = vld [vmem:[%s7 + $0xd0] sm:$0xf]
    %v5266 = vld [vmem:[%s7 + $0xd4] sm:$0xf]
    %v5267 = vld [vmem:[%s7 + $0xd8] sm:$0xf]
    %v5268 = vld [vmem:[%s7 + $0xdc] sm:$0xf]
    %v5269 = vld [vmem:[%s7 + $0xe0] sm:$0xf]
    %v5270 = vld [vmem:[%s7 + $0xe4] sm:$0xf]
    %v5271 = vld [vmem:[%s7 + $0xe8] sm:$0xf]
    %v5272 = vld [vmem:[%s7 + $0xec] sm:$0xf]
    %v5273 = vld [vmem:[%s7 + $0xf0] sm:$0xf]
    %v5274 = vld [vmem:[%s7 + $0xf4] sm:$0xf]
    %v5275 = vld [vmem:[%s7 + $0xf8] sm:$0xf]
    %v5276 = vld [vmem:[%s7 + $0xfc] sm:$0xf]
    %v5277 = vld [vmem:[%s8] sm:$0x1]
    %v5279 = vlaneseq
    %v5280 = vshrl.u32 %v5279, 7
    %v5281 = vsub.s32 0, %v5280
    %v5282 = vrot.slane %v5277, %v5281
    %v5348 = vunpack.c.l.b16 %v5213
    %v5349 = vunpack.c.l.b16 %v5214
    %v5350 = vunpack.c.l.b16 %v5215
    %v5351 = vunpack.c.l.b16 %v5216
    %v5352 = vunpack.c.l.b16 %v5217
    %v5353 = vunpack.c.l.b16 %v5218
    %v5354 = vunpack.c.l.b16 %v5219
    %v5355 = vunpack.c.l.b16 %v5220
    %v5356 = vunpack.c.l.b16 %v5221
    %v5357 = vunpack.c.l.b16 %v5222
    %v5358 = vunpack.c.l.b16 %v5223
    %v5359 = vunpack.c.l.b16 %v5224
    %v5360 = vunpack.c.l.b16 %v5225
    %v5361 = vunpack.c.l.b16 %v5226
    %v5362 = vunpack.c.l.b16 %v5227
    %v5363 = vunpack.c.l.b16 %v5228
    %v5364 = vunpack.c.l.b16 %v5229
    %v5365 = vunpack.c.l.b16 %v5230
    %v5366 = vunpack.c.l.b16 %v5231
    %v5367 = vunpack.c.l.b16 %v5232
    %v5368 = vunpack.c.l.b16 %v5233
    %v5369 = vunpack.c.l.b16 %v5234
    %v5370 = vunpack.c.l.b16 %v5235
    %v5371 = vunpack.c.l.b16 %v5236
    %v5372 = vunpack.c.l.b16 %v5237
    %v5373 = vunpack.c.l.b16 %v5238
    %v5374 = vunpack.c.l.b16 %v5239
    %v5375 = vunpack.c.l.b16 %v5240
    %v5376 = vunpack.c.l.b16 %v5241
    %v5377 = vunpack.c.l.b16 %v5242
    %v5378 = vunpack.c.l.b16 %v5243
    %v5379 = vunpack.c.l.b16 %v5244
    %v5380 = vunpack.c.l.b16 %v5245
    %v5381 = vunpack.c.l.b16 %v5246
    %v5382 = vunpack.c.l.b16 %v5247
    %v5383 = vunpack.c.l.b16 %v5248
    %v5384 = vunpack.c.l.b16 %v5249
    %v5385 = vunpack.c.l.b16 %v5250
    %v5386 = vunpack.c.l.b16 %v5251
    %v5387 = vunpack.c.l.b16 %v5252
    %v5388 = vunpack.c.l.b16 %v5253
    %v5389 = vunpack.c.l.b16 %v5254
    %v5390 = vunpack.c.l.b16 %v5255
    %v5391 = vunpack.c.l.b16 %v5256
    %v5392 = vunpack.c.l.b16 %v5257
    %v5393 = vunpack.c.l.b16 %v5258
    %v5394 = vunpack.c.l.b16 %v5259
    %v5395 = vunpack.c.l.b16 %v5260
    %v5396 = vunpack.c.l.b16 %v5261
    %v5397 = vunpack.c.l.b16 %v5262
    %v5398 = vunpack.c.l.b16 %v5263
    %v5399 = vunpack.c.l.b16 %v5264
    %v5400 = vunpack.c.l.b16 %v5265
    %v5401 = vunpack.c.l.b16 %v5266
    %v5402 = vunpack.c.l.b16 %v5267
    %v5403 = vunpack.c.l.b16 %v5268
    %v5404 = vunpack.c.l.b16 %v5269
    %v5405 = vunpack.c.l.b16 %v5270
    %v5406 = vunpack.c.l.b16 %v5271
    %v5407 = vunpack.c.l.b16 %v5272
    %v5408 = vunpack.c.l.b16 %v5273
    %v5409 = vunpack.c.l.b16 %v5274
    %v5410 = vunpack.c.l.b16 %v5275
    %v5411 = vunpack.c.l.b16 %v5276
    %v5412 = vpack.c.b16 %v5349, %v5348
    %v5413 = vpack.c.b16 %v5351, %v5350
    %v5414 = vpack.c.b16 %v5353, %v5352
    %v5415 = vpack.c.b16 %v5355, %v5354
    %v5416 = vpack.c.b16 %v5357, %v5356
    %v5417 = vpack.c.b16 %v5359, %v5358
    %v5418 = vpack.c.b16 %v5361, %v5360
    %v5419 = vpack.c.b16 %v5363, %v5362
    %v5420 = vpack.c.b16 %v5365, %v5364
    %v5421 = vpack.c.b16 %v5367, %v5366
    %v5422 = vpack.c.b16 %v5369, %v5368
    %v5423 = vpack.c.b16 %v5371, %v5370
    %v5424 = vpack.c.b16 %v5373, %v5372
    %v5425 = vpack.c.b16 %v5375, %v5374
    %v5426 = vpack.c.b16 %v5377, %v5376
    %v5427 = vpack.c.b16 %v5379, %v5378
    %v5428 = vpack.c.b16 %v5381, %v5380
    %v5429 = vpack.c.b16 %v5383, %v5382
    %v5430 = vpack.c.b16 %v5385, %v5384
    %v5431 = vpack.c.b16 %v5387, %v5386
    %v5432 = vpack.c.b16 %v5389, %v5388
    %v5433 = vpack.c.b16 %v5391, %v5390
    %v5434 = vpack.c.b16 %v5393, %v5392
    %v5435 = vpack.c.b16 %v5395, %v5394
    %v5436 = vpack.c.b16 %v5397, %v5396
    %v5437 = vpack.c.b16 %v5399, %v5398
    %v5438 = vpack.c.b16 %v5401, %v5400
    %v5439 = vpack.c.b16 %v5403, %v5402
    %v5440 = vpack.c.b16 %v5405, %v5404
    %v5441 = vpack.c.b16 %v5407, %v5406
    %v5442 = vpack.c.b16 %v5409, %v5408
    %v5443 = vpack.c.b16 %v5411, %v5410
    %5476 = vmatprep.subr.bf16.mxu0 0
    %5477 = vmatpush1.bf16.msra.mxu0 %v5412
    %5478 = vmatprep.subr.bf16.mxu0 0
    %5479 = vmatpush1.bf16.msra.mxu0 %v5413
    %5480 = vmatprep.subr.bf16.mxu0 0
    %5481 = vmatpush1.bf16.msra.mxu0 %v5414
    %5482 = vmatprep.subr.bf16.mxu0 0
    %5483 = vmatpush1.bf16.msra.mxu0 %v5415
    %5484 = vmatprep.subr.bf16.mxu0 0
    %5485 = vmatpush1.bf16.msra.mxu0 %v5416
    %5486 = vmatprep.subr.bf16.mxu0 0
    %5487 = vmatpush1.bf16.msra.mxu0 %v5417
    %5488 = vmatprep.subr.bf16.mxu0 0
    %5489 = vmatpush1.bf16.msra.mxu0 %v5418
    %5490 = vmatprep.subr.bf16.mxu0 0
    %5491 = vmatpush1.bf16.msra.mxu0 %v5419
    %5492 = vmatprep.subr.bf16.mxu0 0
    %5493 = vmatpush1.bf16.msra.mxu0 %v5420
    %5494 = vmatprep.subr.bf16.mxu0 0
    %5495 = vmatpush1.bf16.msra.mxu0 %v5421
    %5496 = vmatprep.subr.bf16.mxu0 0
    %5497 = vmatpush1.bf16.msra.mxu0 %v5422
    %5498 = vmatprep.subr.bf16.mxu0 0
    %5499 = vmatpush1.bf16.msra.mxu0 %v5423
    %5500 = vmatprep.subr.bf16.mxu0 0
    %5501 = vmatpush1.bf16.msra.mxu0 %v5424
    %5502 = vmatprep.subr.bf16.mxu0 0
    %5503 = vmatpush1.bf16.msra.mxu0 %v5425
    %5504 = vmatprep.subr.bf16.mxu0 0
    %5505 = vmatpush1.bf16.msra.mxu0 %v5426
    %5506 = vmatprep.subr.bf16.mxu0 0
    %5507 = vmatpush1.bf16.msra.mxu0 %v5427
    %5508 = vmatprep.mubr.bf16.mxu0 %v5210
    %5509 = vmatmul.mubr.bf16.gmra.mrb[0].mxu0 %v5209
    %v5510 = vpop.f32.mrb[0].mxu0
    %v5511 = vadd.f32 %v5282, %v5510
    %v5512 = vpop.f32.mrb[0].mxu0
    %v5513 = vpop.f32.mrb[0].mxu0
    %v5514 = vpop.f32.mrb[0].mxu0
    %5515 = vdwg.mxu0
    %5516 = vmatprep.subr.bf16.mxu0 0
    %5517 = vmatpush1.bf16.msra.mxu0 %v5428
    %5518 = vmatprep.subr.bf16.mxu0 0
    %5519 = vmatpush1.bf16.msra.mxu0 %v5429
    %5520 = vmatprep.subr.bf16.mxu0 0
    %5521 = vmatpush1.bf16.msra.mxu0 %v5430
    %5522 = vmatprep.subr.bf16.mxu0 0
    %5523 = vmatpush1.bf16.msra.mxu0 %v5431
    %5524 = vmatprep.subr.bf16.mxu0 0
    %5525 = vmatpush1.bf16.msra.mxu0 %v5432
    %5526 = vmatprep.subr.bf16.mxu0 0
    %5527 = vmatpush1.bf16.msra.mxu0 %v5433
    %5528 = vmatprep.subr.bf16.mxu0 0
    %5529 = vmatpush1.bf16.msra.mxu0 %v5434
    %5530 = vmatprep.subr.bf16.mxu0 0
    %5531 = vmatpush1.bf16.msra.mxu0 %v5435
    %5532 = vmatprep.subr.bf16.mxu0 0
    %5533 = vmatpush1.bf16.msra.mxu0 %v5436
    %5534 = vmatprep.subr.bf16.mxu0 0
    %5535 = vmatpush1.bf16.msra.mxu0 %v5437
    %5536 = vmatprep.subr.bf16.mxu0 0
    %5537 = vmatpush1.bf16.msra.mxu0 %v5438
    %5538 = vmatprep.subr.bf16.mxu0 0
    %5539 = vmatpush1.bf16.msra.mxu0 %v5439
    %5540 = vmatprep.subr.bf16.mxu0 0
    %5541 = vmatpush1.bf16.msra.mxu0 %v5440
    %5542 = vmatprep.subr.bf16.mxu0 0
    %5543 = vmatpush1.bf16.msra.mxu0 %v5441
    %5544 = vmatprep.subr.bf16.mxu0 0
    %5545 = vmatpush1.bf16.msra.mxu0 %v5442
    %5546 = vmatprep.subr.bf16.mxu0 0
    %5547 = vmatpush1.bf16.msra.mxu0 %v5443
    %5548 = vmatprep.mubr.bf16.mxu0 %v5212
    %5549 = vmatmul.mubr.bf16.gmra.mrb[0].mxu0 %v5211
    %v5550 = vpop.f32.mrb[0].mxu0
    %v5551 = vadd.f32 %v5511, %v5550
    %v5552 = vpop.f32.mrb[0].mxu0
    %v5553 = vpop.f32.mrb[0].mxu0
    %v5554 = vpop.f32.mrb[0].mxu0
    %5555 = vdwg.mxu0
    %vm5556 = vcmask 74752
    %5557 = vst.msk [vmem:[#allocation2] sm:$0x3] %vm5556, %v5551
    // Predicated region
    $region38: #{linear_model_forward.1} parent=1 // pred_check
      _
    $region39: #{linear_model_forward.1} parent=1 // pred_check_branch
      %5559 = sbr.rel (0) target = $region41
    $region40: #{linear_model_forward.1} parent=1 // pred_region
      %s5561 = ssub.s32 32, 32
      %5562 = vsyncadd [#allocation3], %s5561
      %s5564 = sshll.u32 [#allocation2], 4
      %s5565 = int_to_ptr.vmem [resolvable:$true] %s5564
      %5567 = dma.vmem_to_hbm [thread:$0]  %s5565, 32, %s9, [#allocation3]
    $region41: #{linear_model_forward.1} parent=1 // pred_fallthru
      _
    // Predicated region
    $region42: #{linear_model_forward.1} parent=1 // pred_check
      _
    $region43: #{linear_model_forward.1} parent=1 // pred_check_branch
      %5569 = sbr.rel (0) target = $region45
    $region44: #{linear_model_forward.1} parent=1 // pred_region
      %5570 = dma.done [#allocation3], 32
    $region45: #{linear_model_forward.1} parent=1 // pred_fallthru
      _
    %5571 = vsyncpa [#allocation3], 1

</llo_original>
